<compile_context>
chip_gen: v7x
topology: tpu7x:2x2x1
jax: 0.10.0
libtpu: 0.0.40
codegen_flags: <defaults>
</compile_context>

<pallas_src>
import functools

import jax
import jax.numpy as jnp
from jax.experimental import pallas as pl
from jax.experimental.pallas import tpu as pltpu

EPS = 1e-5
NEG_INF = -1e9
OUT_LANES = 128  # lane-dense packed head output width: [logits(2) | boxes(4) | 0-pad]


def _layer_norm(x, gamma, beta):
    mu = jnp.mean(x, axis=-1, keepdims=True)
    var = jnp.mean(jnp.square(x - mu), axis=-1, keepdims=True)
    return (x - mu) * jax.lax.rsqrt(var + EPS) * gamma + beta


# --------------------------------------------------------------------------------------
# Fused per-batch kernel: input projections -> memory/bias assembly (registers)
#   -> decoder stand-in -> hoisted class/bbox heads -> one lane-dense store.
# --------------------------------------------------------------------------------------
def _svanet_kernel(
    # per-batch blocked inputs ---------------------------------------------------------
    vid_ref, skch_ref, vmask_ref, smask_ref,
    # broadcast weights ----------------------------------------------------------------
    pos_v_ref, pos_s_ref,
    vg1_ref, vb1_ref, vw1_ref, vc1_ref, vg2_ref, vb2_ref, vw2_ref, vc2_ref,
    sg1_ref, sb1_ref, sw1_ref, sc1_ref, sg2_ref, sb2_ref, sw2_ref, sc2_ref,
    q_ref, wq_ref, wkT_ref, wv_ref, wo_ref,
    w1_ref, b1_ref, w2_ref, b2_ref, wfin_ref, bfin_ref,
    # output ----------------------------------------------------------------------------
    o_ref,
):
    f32 = jnp.float32
    bf16 = jnp.bfloat16
    Lv, H = pos_v_ref.shape
    Ls = pos_s_ref.shape[0]
    Lmem = Lv + Ls
    Nq = q_ref.shape[0]
    Ldec = wq_ref.shape[0]

    # ---- input projections: (LayerNorm -> Linear -> ReLU) then (LayerNorm -> Linear) --
    # (Dropout layers are identities in eval mode.)
    def proj(x, g1, b1, w1, c1, g2, b2, w2, c2):
        x = _layer_norm(x, g1, b1)
        x = jnp.maximum(jnp.dot(x.astype(bf16), w1, preferred_element_type=f32) + c1, 0.0)
        x = _layer_norm(x, g2, b2)
        return jnp.dot(x.astype(bf16), w2, preferred_element_type=f32) + c2

    v = proj(vid_ref[...], vg1_ref[...], vb1_ref[...], vw1_ref[...], vc1_ref[...],
             vg2_ref[...], vb2_ref[...], vw2_ref[...], vc2_ref[...])        # (Lv, H)
    s = proj(skch_ref[...], sg1_ref[...], sb1_ref[...], sw1_ref[...], sc1_ref[...],
             sg2_ref[...], sb2_ref[...], sw2_ref[...], sc2_ref[...])        # (Ls, H)

    # ---- transformer memory + padding bias, kept entirely in registers ---------------
    mem = jnp.concatenate([v + pos_v_ref[...], s + pos_s_ref[...]], axis=0)  # (Lmem, H)
    mem_bf = mem.astype(bf16)
    memT_bf = jnp.transpose(mem).astype(bf16)   # hoisted K^T transpose (once per batch)

    bias = jnp.concatenate([(1.0 - vmask_ref[...]) * NEG_INF,
                            (1.0 - smask_ref[...]) * NEG_INF], axis=1)       # (1, Lmem)
    bias_q = jnp.broadcast_to(bias, (Nq, Lmem))                              # hoisted

    # all layers' K projections, already transposed: (Ldec*H, Lmem)
    kT_all = jnp.dot(wkT_ref[...], memT_bf, preferred_element_type=f32).astype(bf16)

    q = q_ref[...]                                                           # (Nq, H)
    q_bf = q.astype(bf16)

    # ---- decoder stand-in: masked cross-attention of learned queries over memory -----
    hs = []
    for l in range(Ldec):
        qp = jnp.dot(q_bf, wq_ref[l], preferred_element_type=f32)   # 1/sqrt(H) folded in
        scores = jnp.dot(qp.astype(bf16), kT_all[l * H:(l + 1) * H, :],
                         preferred_element_type=f32) + bias_q               # (Nq, Lmem)
        m = jnp.max(scores, axis=-1, keepdims=True)
        e = jnp.exp(scores - m)
        attn = e * pl.reciprocal(jnp.sum(e, axis=-1, keepdims=True), approx=True)
        vproj = jnp.dot(mem_bf, wv_ref[l], preferred_element_type=f32)      # (Lmem, H)
        ctx = jnp.dot(attn.astype(bf16), vproj.astype(bf16),
                      preferred_element_type=f32)                           # (Nq, H)
        hs.append(q + jnp.dot(ctx.astype(bf16), wo_ref[l], preferred_element_type=f32))

    hs_all = jnp.concatenate(hs, axis=0)                                    # (Ldec*Nq, H)

    # ---- prediction heads, hoisted: one pass over all (layer, query) rows ------------
    t = jnp.maximum(jnp.dot(hs_all.astype(bf16), w1_ref[...],
                            preferred_element_type=f32) + b1_ref[...], 0.0)
    t = jnp.maximum(jnp.dot(t.astype(bf16), w2_ref[...],
                            preferred_element_type=f32) + b2_ref[...], 0.0)
    # block-diagonal final head: [hs | t] @ wfin -> lanes [logits(2) | box_logits(4) | 0]
    z = jnp.concatenate([hs_all, t], axis=-1).astype(bf16)                  # (rows, 2H)
    y = jnp.dot(z, wfin_ref[...], preferred_element_type=f32) + bfin_ref[...]
    lane = jax.lax.broadcasted_iota(jnp.int32, y.shape, 1)
    o_ref[...] = jnp.where((lane >= 2) & (lane < 6), jax.nn.sigmoid(y), y)


# --------------------------------------------------------------------------------------
# Sinusoidal position-encoding stand-in (external module in PyTorch); plain JAX.
# --------------------------------------------------------------------------------------
def sine_pos_embed(length, dim):
    pos = jnp.arange(length, dtype=jnp.float32)[:, None]
    dim_idx = jnp.arange(dim, dtype=jnp.float32)
    div = jnp.power(10000.0, 2.0 * jnp.floor(dim_idx / 2.0) / dim)
    angles = pos / div
    even = (jnp.arange(dim) % 2) == 0
    return jnp.where(even, jnp.sin(angles), jnp.cos(angles))  # (L, dim)


# --------------------------------------------------------------------------------------
# Parameters (deterministic init, stored directly in the kernel's fused layouts)
# --------------------------------------------------------------------------------------
def init_params(key, input_vid_dim, input_skch_dim, hidden, num_queries, num_dec_layers):
    keys = iter(jax.random.split(key, 24))
    H, Ldec = hidden, num_dec_layers

    def lin(din, dout, scale=0.02):
        return (jax.random.normal(next(keys), (din, dout), jnp.float32) * scale,
                jnp.zeros((1, dout), jnp.float32))

    def linear_layer(din, dout):
        gamma = jnp.ones((1, din), jnp.float32)
        beta = jnp.zeros((1, din), jnp.float32)
        w, b = lin(din, dout)
        return (gamma, beta, w, b)

    # decoder stand-in weights
    wq = jax.random.normal(next(keys), (Ldec, H, H), jnp.float32) * 0.05
    wq = wq * (float(H) ** -0.5)                     # fold attention scale into wq
    wk = jax.random.normal(next(keys), (Ldec, H, H), jnp.float32) * 0.05
    wkT = jnp.transpose(wk, (0, 2, 1)).reshape(Ldec * H, H)   # pre-transposed K proj
    wv = jax.random.normal(next(keys), (Ldec, H, H), jnp.float32) * 0.05
    wo = jax.random.normal(next(keys), (Ldec, H, H), jnp.float32) * 0.05

    # heads: class Linear(H,2) and bbox MLP(H,H,4,3 layers)
    wc, bc = lin(H, 2)
    w1, b1 = lin(H, H)
    w2, b2 = lin(H, H)
    w3, b3 = lin(H, 4)
    # block-diagonal lane-placed final weight: rows [0:H] -> logits lanes [0:2],
    # rows [H:2H] -> box-logit lanes [2:6]; padding lanes are exactly zero.
    wfin = jnp.zeros((2 * H, OUT_LANES), jnp.float32)
    wfin = wfin.at[:H, 0:2].set(wc)
    wfin = wfin.at[H:, 2:6].set(w3)
    bfin = jnp.zeros((1, OUT_LANES), jnp.float32)
    bfin = bfin.at[:, 0:2].set(bc)
    bfin = bfin.at[:, 2:6].set(b3)

    return {
        # n_input_proj = 2 -> relu_args = [True, False, True][:2]
        "vid_proj": [linear_layer(input_vid_dim, H), linear_layer(H, H)],
        "skch_proj": [linear_layer(input_skch_dim, H), linear_layer(H, H)],
        "query_embed": jax.random.normal(next(keys), (num_queries, H), jnp.float32),
        "dec": {"wq": wq, "wkT": wkT, "wv": wv, "wo": wo},
        "heads": {"w1": w1, "b1": b1, "w2": w2, "b2": b2, "wfin": wfin, "bfin": bfin},
    }


# --------------------------------------------------------------------------------------
# SVANet forward (one pallas_call, grid over batch, "parallel" -> both TCs on v7x)
# --------------------------------------------------------------------------------------
@functools.partial(jax.jit, static_argnames=("aux_loss",))
def svanet_forward(params, src_sketch, src_sketch_mask, src_video, src_video_mask,
                   aux_loss=True):
    B, Lv, _ = src_video.shape
    _, Ls, _ = src_sketch.shape
    Nq, H = params["query_embed"].shape
    Ldec = params["dec"]["wq"].shape[0]
    ROWS = Ldec * Nq
    bf16 = jnp.bfloat16

    pos_v = sine_pos_embed(Lv, H)
    pos_s = sine_pos_embed(Ls, H)

    (vg1, vb1, vw1, vc1), (vg2, vb2, vw2, vc2) = params["vid_proj"]
    (sg1, sb1, sw1, sc1), (sg2, sb2, sw2, sc2) = params["skch_proj"]
    dec, hp = params["dec"], params["heads"]

    # masks: 1 = valid, 0 = padded (converted to additive -1e9 bias in-kernel)
    vmask = src_video_mask.astype(jnp.float32).reshape(B, 1, Lv)
    smask = src_sketch_mask.astype(jnp.float32).reshape(B, 1, Ls)

    # matmul operands in bf16; LayerNorm params and biases stay f32 (VPU/EUP path)
    weights = [
        pos_v, pos_s,
        vg1, vb1, vw1.astype(bf16), vc1, vg2, vb2, vw2.astype(bf16), vc2,
        sg1, sb1, sw1.astype(bf16), sc1, sg2, sb2, sw2.astype(bf16), sc2,
        params["query_embed"],
        dec["wq"].astype(bf16), dec["wkT"].astype(bf16),
        dec["wv"].astype(bf16), dec["wo"].astype(bf16),
        hp["w1"].astype(bf16), hp["b1"], hp["w2"].astype(bf16), hp["b2"],
        hp["wfin"].astype(bf16), hp["bfin"],
    ]

    def batch_spec(x):
        zeros = (0,) * (x.ndim - 1)
        return pl.BlockSpec((None,) + x.shape[1:], lambda b: (b,) + zeros)

    def full_spec(x):
        zeros = (0,) * x.ndim
        return pl.BlockSpec(x.shape, lambda b: zeros)

    in_specs = ([batch_spec(src_video), batch_spec(src_sketch),
                 batch_spec(vmask), batch_spec(smask)]
                + [full_spec(w) for w in weights])

    packed = pl.pallas_call(
        _svanet_kernel,
        out_shape=jax.ShapeDtypeStruct((B * ROWS, OUT_LANES), jnp.float32),
        grid_spec=pltpu.PrefetchScalarGridSpec(
            num_scalar_prefetch=0,
            grid=(B,),
            in_specs=in_specs,
            out_specs=pl.BlockSpec((ROWS, OUT_LANES), lambda b: (b, 0)),
        ),
        compiler_params=pltpu.CompilerParams(dimension_semantics=("parallel",)),
    )(src_video, src_sketch, vmask, smask, *weights)

    packed = packed.reshape(B, Ldec, Nq, OUT_LANES)
    outputs_class = jnp.transpose(packed[..., 0:2], (1, 0, 2, 3))   # (Ldec, B, Nq, 2)
    outputs_coord = jnp.transpose(packed[..., 2:6], (1, 0, 2, 3))   # (Ldec, B, Nq, 4)

    out = {"pred_logits": outputs_class[-1], "pred_boxes": outputs_coord[-1]}
    if aux_loss:
        out["aux_outputs"] = [{"pred_logits": a, "pred_boxes": b}
                              for a, b in zip(outputs_class[:-1], outputs_coord[:-1])]
    return out


# --------------------------------------------------------------------------------------
if __name__ == "__main__":
    B, Lv, Ls = 2, 16, 8
    input_vid_dim, input_skch_dim = 48, 40
    hidden, num_queries, num_dec_layers = 32, 4, 2

    key = jax.random.PRNGKey(0)
    k1, k2, kp = jax.random.split(key, 3)
    src_video = jax.random.normal(k1, (B, Lv, input_vid_dim), jnp.float32)
    src_sketch = jax.random.normal(k2, (B, Ls, input_skch_dim), jnp.float32)
    # masks: 1 = valid, 0 = padded (as in PyTorch forward, converted to padding later)
    src_video_mask = jnp.ones((B, Lv), jnp.float32).at[1, -3:].set(0.0)
    src_sketch_mask = jnp.ones((B, Ls), jnp.float32).at[1, -2:].set(0.0)

    params = init_params(kp, input_vid_dim, input_skch_dim, hidden,
                         num_queries, num_dec_layers)

    out = svanet_forward(params, src_sketch, src_sketch_mask,
                         src_video, src_video_mask)
    jax.block_until_ready(out["pred_logits"])
    jax.block_until_ready(out["pred_boxes"])
    for aux in out["aux_outputs"]:
        jax.block_until_ready(aux["pred_boxes"])

    assert out["pred_logits"].shape == (B, num_queries, 2)
    assert out["pred_boxes"].shape == (B, num_queries, 4)
    assert len(out["aux_outputs"]) == num_dec_layers - 1
    assert bool(jnp.isfinite(out["pred_logits"]).all())
    assert bool(jnp.all((out["pred_boxes"] >= 0.0) & (out["pred_boxes"] <= 1.0)))
    print("KERNEL_OK")
</pallas_src>

<mosaic_0001>
module attributes {stable_mosaic.version = 11 : i64} {
  func.func @_svanet_kernel(%arg0: i32, %arg1: memref<1x16x48xf32, #tpu.memory_space<vmem>>, %arg2: memref<1x8x40xf32, #tpu.memory_space<vmem>>, %arg3: memref<1x1x16xf32, #tpu.memory_space<vmem>>, %arg4: memref<1x1x8xf32, #tpu.memory_space<vmem>>, %arg5: memref<16x32xf32, #tpu.memory_space<vmem>>, %arg6: memref<8x32xf32, #tpu.memory_space<vmem>>, %arg7: memref<1x48xf32, #tpu.memory_space<vmem>>, %arg8: memref<1x48xf32, #tpu.memory_space<vmem>>, %arg9: memref<48x32xbf16, #tpu.memory_space<vmem>>, %arg10: memref<1x32xf32, #tpu.memory_space<vmem>>, %arg11: memref<1x32xf32, #tpu.memory_space<vmem>>, %arg12: memref<1x32xf32, #tpu.memory_space<vmem>>, %arg13: memref<32x32xbf16, #tpu.memory_space<vmem>>, %arg14: memref<1x32xf32, #tpu.memory_space<vmem>>, %arg15: memref<1x40xf32, #tpu.memory_space<vmem>>, %arg16: memref<1x40xf32, #tpu.memory_space<vmem>>, %arg17: memref<40x32xbf16, #tpu.memory_space<vmem>>, %arg18: memref<1x32xf32, #tpu.memory_space<vmem>>, %arg19: memref<1x32xf32, #tpu.memory_space<vmem>>, %arg20: memref<1x32xf32, #tpu.memory_space<vmem>>, %arg21: memref<32x32xbf16, #tpu.memory_space<vmem>>, %arg22: memref<1x32xf32, #tpu.memory_space<vmem>>, %arg23: memref<4x32xf32, #tpu.memory_space<vmem>>, %arg24: memref<2x32x32xbf16, #tpu.memory_space<vmem>>, %arg25: memref<64x32xbf16, #tpu.memory_space<vmem>>, %arg26: memref<2x32x32xbf16, #tpu.memory_space<vmem>>, %arg27: memref<2x32x32xbf16, #tpu.memory_space<vmem>>, %arg28: memref<32x32xbf16, #tpu.memory_space<vmem>>, %arg29: memref<1x32xf32, #tpu.memory_space<vmem>>, %arg30: memref<32x32xbf16, #tpu.memory_space<vmem>>, %arg31: memref<1x32xf32, #tpu.memory_space<vmem>>, %arg32: memref<64x128xbf16, #tpu.memory_space<vmem>>, %arg33: memref<1x128xf32, #tpu.memory_space<vmem>>, %arg34: memref<8x128xf32, #tpu.memory_space<vmem>>) attributes {dimension_semantics = [#tpu.dimension_semantics<parallel>], iteration_bounds = array<i64: 2>, scalar_prefetch = 0 : i64, scratch_operands = 0 : i64, tpu.core_type = #tpu.core_type<tc>, window_params = [{transform_indices = @transform_0, window_bounds = array<i64: 1, 16, 48>}, {transform_indices = @transform_1, window_bounds = array<i64: 1, 8, 40>}, {transform_indices = @transform_2, window_bounds = array<i64: 1, 1, 16>}, {transform_indices = @transform_3, window_bounds = array<i64: 1, 1, 8>}, {pipeline_mode = #tpu.pipeline_mode<synchronous>, transform_indices = @transform_4, window_bounds = array<i64: 16, 32>}, {pipeline_mode = #tpu.pipeline_mode<synchronous>, transform_indices = @transform_5, window_bounds = array<i64: 8, 32>}, {pipeline_mode = #tpu.pipeline_mode<synchronous>, transform_indices = @transform_6, window_bounds = array<i64: 1, 48>}, {pipeline_mode = #tpu.pipeline_mode<synchronous>, transform_indices = @transform_7, window_bounds = array<i64: 1, 48>}, {pipeline_mode = #tpu.pipeline_mode<synchronous>, transform_indices = @transform_8, window_bounds = array<i64: 48, 32>}, {pipeline_mode = #tpu.pipeline_mode<synchronous>, transform_indices = @transform_9, window_bounds = array<i64: 1, 32>}, {pipeline_mode = #tpu.pipeline_mode<synchronous>, transform_indices = @transform_10, window_bounds = array<i64: 1, 32>}, {pipeline_mode = #tpu.pipeline_mode<synchronous>, transform_indices = @transform_11, window_bounds = array<i64: 1, 32>}, {pipeline_mode = #tpu.pipeline_mode<synchronous>, transform_indices = @transform_12, window_bounds = array<i64: 32, 32>}, {pipeline_mode = #tpu.pipeline_mode<synchronous>, transform_indices = @transform_13, window_bounds = array<i64: 1, 32>}, {pipeline_mode = #tpu.pipeline_mode<synchronous>, transform_indices = @transform_14, window_bounds = array<i64: 1, 40>}, {pipeline_mode = #tpu.pipeline_mode<synchronous>, transform_indices = @transform_15, window_bounds = array<i64: 1, 40>}, {pipeline_mode = #tpu.pipeline_mode<synchronous>, transform_indices = @transform_16, window_bounds = array<i64: 40, 32>}, {pipeline_mode = #tpu.pipeline_mode<synchronous>, transform_indices = @transform_17, window_bounds = array<i64: 1, 32>}, {pipeline_mode = #tpu.pipeline_mode<synchronous>, transform_indices = @transform_18, window_bounds = array<i64: 1, 32>}, {pipeline_mode = #tpu.pipeline_mode<synchronous>, transform_indices = @transform_19, window_bounds = array<i64: 1, 32>}, {pipeline_mode = #tpu.pipeline_mode<synchronous>, transform_indices = @transform_20, window_bounds = array<i64: 32, 32>}, {pipeline_mode = #tpu.pipeline_mode<synchronous>, transform_indices = @transform_21, window_bounds = array<i64: 1, 32>}, {pipeline_mode = #tpu.pipeline_mode<synchronous>, transform_indices = @transform_22, window_bounds = array<i64: 4, 32>}, {pipeline_mode = #tpu.pipeline_mode<synchronous>, transform_indices = @transform_23, window_bounds = array<i64: 2, 32, 32>}, {pipeline_mode = #tpu.pipeline_mode<synchronous>, transform_indices = @transform_24, window_bounds = array<i64: 64, 32>}, {pipeline_mode = #tpu.pipeline_mode<synchronous>, transform_indices = @transform_25, window_bounds = array<i64: 2, 32, 32>}, {pipeline_mode = #tpu.pipeline_mode<synchronous>, transform_indices = @transform_26, window_bounds = array<i64: 2, 32, 32>}, {pipeline_mode = #tpu.pipeline_mode<synchronous>, transform_indices = @transform_27, window_bounds = array<i64: 32, 32>}, {pipeline_mode = #tpu.pipeline_mode<synchronous>, transform_indices = @transform_28, window_bounds = array<i64: 1, 32>}, {pipeline_mode = #tpu.pipeline_mode<synchronous>, transform_indices = @transform_29, window_bounds = array<i64: 32, 32>}, {pipeline_mode = #tpu.pipeline_mode<synchronous>, transform_indices = @transform_30, window_bounds = array<i64: 1, 32>}, {pipeline_mode = #tpu.pipeline_mode<synchronous>, transform_indices = @transform_31, window_bounds = array<i64: 64, 128>}, {pipeline_mode = #tpu.pipeline_mode<synchronous>, transform_indices = @transform_32, window_bounds = array<i64: 1, 128>}, {transform_indices = @transform_33, window_bounds = array<i64: 8, 128>}]} {
    %c0 = arith.constant 0 : index
    %c0_0 = arith.constant 0 : index
    %c0_1 = arith.constant 0 : index
    %0 = vector.load %arg1[%c0, %c0_0, %c0_1] : memref<1x16x48xf32, #tpu.memory_space<vmem>>, vector<1x16x48xf32>
    %1 = vector.shape_cast %0 : vector<1x16x48xf32> to vector<16x48xf32>
    %c0_2 = arith.constant 0 : index
    %c0_3 = arith.constant 0 : index
    %2 = vector.load %arg7[%c0_2, %c0_3] : memref<1x48xf32, #tpu.memory_space<vmem>>, vector<1x48xf32>
    %c0_4 = arith.constant 0 : index
    %c0_5 = arith.constant 0 : index
    %3 = vector.load %arg8[%c0_4, %c0_5] : memref<1x48xf32, #tpu.memory_space<vmem>>, vector<1x48xf32>
    %c0_6 = arith.constant 0 : index
    %c0_7 = arith.constant 0 : index
    %4 = vector.load %arg9[%c0_6, %c0_7] : memref<48x32xbf16, #tpu.memory_space<vmem>>, vector<48x32xbf16>
    %c0_8 = arith.constant 0 : index
    %c0_9 = arith.constant 0 : index
    %5 = vector.load %arg10[%c0_8, %c0_9] : memref<1x32xf32, #tpu.memory_space<vmem>>, vector<1x32xf32>
    %c0_10 = arith.constant 0 : index
    %c0_11 = arith.constant 0 : index
    %6 = vector.load %arg11[%c0_10, %c0_11] : memref<1x32xf32, #tpu.memory_space<vmem>>, vector<1x32xf32>
    %c0_12 = arith.constant 0 : index
    %c0_13 = arith.constant 0 : index
    %7 = vector.load %arg12[%c0_12, %c0_13] : memref<1x32xf32, #tpu.memory_space<vmem>>, vector<1x32xf32>
    %c0_14 = arith.constant 0 : index
    %c0_15 = arith.constant 0 : index
    %8 = vector.load %arg13[%c0_14, %c0_15] : memref<32x32xbf16, #tpu.memory_space<vmem>>, vector<32x32xbf16>
    %c0_16 = arith.constant 0 : index
    %c0_17 = arith.constant 0 : index
    %9 = vector.load %arg14[%c0_16, %c0_17] : memref<1x32xf32, #tpu.memory_space<vmem>>, vector<1x32xf32>
    %cst = arith.constant dense<0.000000e+00> : vector<16xf32>
    %10 = vector.multi_reduction <add>, %1, %cst [1] : vector<16x48xf32> to vector<16xf32>
    %11 = vector.shape_cast %10 : vector<16xf32> to vector<16x1xf32>
    %cst_18 = arith.constant 4.800000e+01 : f32
    %12 = vector.broadcast %cst_18 : f32 to vector<16x1xf32>
    %13 = arith.divf %11, %12 : vector<16x1xf32>
    %14 = vector.broadcast %13 : vector<16x1xf32> to vector<16x48xf32>
    %15 = arith.subf %1, %14 : vector<16x48xf32>
    %16 = arith.mulf %15, %15 : vector<16x48xf32>
    %cst_19 = arith.constant dense<0.000000e+00> : vector<16xf32>
    %17 = vector.multi_reduction <add>, %16, %cst_19 [1] : vector<16x48xf32> to vector<16xf32>
    %18 = vector.shape_cast %17 : vector<16xf32> to vector<16x1xf32>
    %cst_20 = arith.constant 4.800000e+01 : f32
    %19 = vector.broadcast %cst_20 : f32 to vector<16x1xf32>
    %20 = arith.divf %18, %19 : vector<16x1xf32>
    %21 = vector.broadcast %13 : vector<16x1xf32> to vector<16x48xf32>
    %22 = arith.subf %1, %21 : vector<16x48xf32>
    %cst_21 = arith.constant 9.99999974E-6 : f32
    %23 = vector.broadcast %cst_21 : f32 to vector<16x1xf32>
    %24 = arith.addf %20, %23 : vector<16x1xf32>
    %25 = math.rsqrt %24 : vector<16x1xf32>
    %26 = vector.broadcast %25 : vector<16x1xf32> to vector<16x48xf32>
    %27 = arith.mulf %22, %26 : vector<16x48xf32>
    %28 = vector.broadcast %2 : vector<1x48xf32> to vector<16x48xf32>
    %29 = arith.mulf %27, %28 : vector<16x48xf32>
    %30 = vector.broadcast %3 : vector<1x48xf32> to vector<16x48xf32>
    %31 = arith.addf %29, %30 : vector<16x48xf32>
    %32 = arith.truncf %31 : vector<16x48xf32> to vector<16x48xbf16>
    %cst_22 = arith.constant dense<0.000000e+00> : vector<16x32xf32>
    %33 = tpu.matmul %32, %4, %cst_22 {dimension_numbers = #tpu.dot_dimension_numbers<[1], [0], [0], [1], [0, 0, 1, 1], [], []>} : vector<16x48xbf16>, vector<48x32xbf16>, vector<16x32xf32> -> vector<16x32xf32>
    %34 = vector.broadcast %5 : vector<1x32xf32> to vector<16x32xf32>
    %35 = arith.addf %33, %34 : vector<16x32xf32>
    %cst_23 = arith.constant 0.000000e+00 : f32
    %36 = vector.broadcast %cst_23 : f32 to vector<16x32xf32>
    %37 = arith.maximumf %35, %36 : vector<16x32xf32>
    %cst_24 = arith.constant dense<0.000000e+00> : vector<16xf32>
    %38 = vector.multi_reduction <add>, %37, %cst_24 [1] : vector<16x32xf32> to vector<16xf32>
    %39 = vector.shape_cast %38 : vector<16xf32> to vector<16x1xf32>
    %cst_25 = arith.constant 3.200000e+01 : f32
    %40 = vector.broadcast %cst_25 : f32 to vector<16x1xf32>
    %41 = arith.divf %39, %40 : vector<16x1xf32>
    %42 = vector.broadcast %41 : vector<16x1xf32> to vector<16x32xf32>
    %43 = arith.subf %37, %42 : vector<16x32xf32>
    %44 = arith.mulf %43, %43 : vector<16x32xf32>
    %cst_26 = arith.constant dense<0.000000e+00> : vector<16xf32>
    %45 = vector.multi_reduction <add>, %44, %cst_26 [1] : vector<16x32xf32> to vector<16xf32>
    %46 = vector.shape_cast %45 : vector<16xf32> to vector<16x1xf32>
    %cst_27 = arith.constant 3.200000e+01 : f32
    %47 = vector.broadcast %cst_27 : f32 to vector<16x1xf32>
    %48 = arith.divf %46, %47 : vector<16x1xf32>
    %49 = vector.broadcast %41 : vector<16x1xf32> to vector<16x32xf32>
    %50 = arith.subf %37, %49 : vector<16x32xf32>
    %cst_28 = arith.constant 9.99999974E-6 : f32
    %51 = vector.broadcast %cst_28 : f32 to vector<16x1xf32>
    %52 = arith.addf %48, %51 : vector<16x1xf32>
    %53 = math.rsqrt %52 : vector<16x1xf32>
    %54 = vector.broadcast %53 : vector<16x1xf32> to vector<16x32xf32>
    %55 = arith.mulf %50, %54 : vector<16x32xf32>
    %56 = vector.broadcast %6 : vector<1x32xf32> to vector<16x32xf32>
    %57 = arith.mulf %55, %56 : vector<16x32xf32>
    %58 = vector.broadcast %7 : vector<1x32xf32> to vector<16x32xf32>
    %59 = arith.addf %57, %58 : vector<16x32xf32>
    %60 = arith.truncf %59 : vector<16x32xf32> to vector<16x32xbf16>
    %cst_29 = arith.constant dense<0.000000e+00> : vector<16x32xf32>
    %61 = tpu.matmul %60, %8, %cst_29 {dimension_numbers = #tpu.dot_dimension_numbers<[1], [0], [0], [1], [0, 0, 1, 1], [], []>} : vector<16x32xbf16>, vector<32x32xbf16>, vector<16x32xf32> -> vector<16x32xf32>
    %62 = vector.broadcast %9 : vector<1x32xf32> to vector<16x32xf32>
    %63 = arith.addf %61, %62 : vector<16x32xf32>
    %c0_30 = arith.constant 0 : index
    %c0_31 = arith.constant 0 : index
    %c0_32 = arith.constant 0 : index
    %64 = vector.load %arg2[%c0_30, %c0_31, %c0_32] : memref<1x8x40xf32, #tpu.memory_space<vmem>>, vector<1x8x40xf32>
    %65 = vector.shape_cast %64 : vector<1x8x40xf32> to vector<8x40xf32>
    %c0_33 = arith.constant 0 : index
    %c0_34 = arith.constant 0 : index
    %66 = vector.load %arg15[%c0_33, %c0_34] : memref<1x40xf32, #tpu.memory_space<vmem>>, vector<1x40xf32>
    %c0_35 = arith.constant 0 : index
    %c0_36 = arith.constant 0 : index
    %67 = vector.load %arg16[%c0_35, %c0_36] : memref<1x40xf32, #tpu.memory_space<vmem>>, vector<1x40xf32>
    %c0_37 = arith.constant 0 : index
    %c0_38 = arith.constant 0 : index
    %68 = vector.load %arg17[%c0_37, %c0_38] : memref<40x32xbf16, #tpu.memory_space<vmem>>, vector<40x32xbf16>
    %c0_39 = arith.constant 0 : index
    %c0_40 = arith.constant 0 : index
    %69 = vector.load %arg18[%c0_39, %c0_40] : memref<1x32xf32, #tpu.memory_space<vmem>>, vector<1x32xf32>
    %c0_41 = arith.constant 0 : index
    %c0_42 = arith.constant 0 : index
    %70 = vector.load %arg19[%c0_41, %c0_42] : memref<1x32xf32, #tpu.memory_space<vmem>>, vector<1x32xf32>
    %c0_43 = arith.constant 0 : index
    %c0_44 = arith.constant 0 : index
    %71 = vector.load %arg20[%c0_43, %c0_44] : memref<1x32xf32, #tpu.memory_space<vmem>>, vector<1x32xf32>
    %c0_45 = arith.constant 0 : index
    %c0_46 = arith.constant 0 : index
    %72 = vector.load %arg21[%c0_45, %c0_46] : memref<32x32xbf16, #tpu.memory_space<vmem>>, vector<32x32xbf16>
    %c0_47 = arith.constant 0 : index
    %c0_48 = arith.constant 0 : index
    %73 = vector.load %arg22[%c0_47, %c0_48] : memref<1x32xf32, #tpu.memory_space<vmem>>, vector<1x32xf32>
    %cst_49 = arith.constant dense<0.000000e+00> : vector<8xf32>
    %74 = vector.multi_reduction <add>, %65, %cst_49 [1] : vector<8x40xf32> to vector<8xf32>
    %75 = vector.shape_cast %74 : vector<8xf32> to vector<8x1xf32>
    %cst_50 = arith.constant 4.000000e+01 : f32
    %76 = vector.broadcast %cst_50 : f32 to vector<8x1xf32>
    %77 = arith.divf %75, %76 : vector<8x1xf32>
    %78 = vector.broadcast %77 : vector<8x1xf32> to vector<8x40xf32>
    %79 = arith.subf %65, %78 : vector<8x40xf32>
    %80 = arith.mulf %79, %79 : vector<8x40xf32>
    %cst_51 = arith.constant dense<0.000000e+00> : vector<8xf32>
    %81 = vector.multi_reduction <add>, %80, %cst_51 [1] : vector<8x40xf32> to vector<8xf32>
    %82 = vector.shape_cast %81 : vector<8xf32> to vector<8x1xf32>
    %cst_52 = arith.constant 4.000000e+01 : f32
    %83 = vector.broadcast %cst_52 : f32 to vector<8x1xf32>
    %84 = arith.divf %82, %83 : vector<8x1xf32>
    %85 = vector.broadcast %77 : vector<8x1xf32> to vector<8x40xf32>
    %86 = arith.subf %65, %85 : vector<8x40xf32>
    %cst_53 = arith.constant 9.99999974E-6 : f32
    %87 = vector.broadcast %cst_53 : f32 to vector<8x1xf32>
    %88 = arith.addf %84, %87 : vector<8x1xf32>
    %89 = math.rsqrt %88 : vector<8x1xf32>
    %90 = vector.broadcast %89 : vector<8x1xf32> to vector<8x40xf32>
    %91 = arith.mulf %86, %90 : vector<8x40xf32>
    %92 = vector.broadcast %66 : vector<1x40xf32> to vector<8x40xf32>
    %93 = arith.mulf %91, %92 : vector<8x40xf32>
    %94 = vector.broadcast %67 : vector<1x40xf32> to vector<8x40xf32>
    %95 = arith.addf %93, %94 : vector<8x40xf32>
    %96 = arith.truncf %95 : vector<8x40xf32> to vector<8x40xbf16>
    %cst_54 = arith.constant dense<0.000000e+00> : vector<8x32xf32>
    %97 = tpu.matmul %96, %68, %cst_54 {dimension_numbers = #tpu.dot_dimension_numbers<[1], [0], [0], [1], [0, 0, 1, 1], [], []>} : vector<8x40xbf16>, vector<40x32xbf16>, vector<8x32xf32> -> vector<8x32xf32>
    %98 = vector.broadcast %69 : vector<1x32xf32> to vector<8x32xf32>
    %99 = arith.addf %97, %98 : vector<8x32xf32>
    %cst_55 = arith.constant 0.000000e+00 : f32
    %100 = vector.broadcast %cst_55 : f32 to vector<8x32xf32>
    %101 = arith.maximumf %99, %100 : vector<8x32xf32>
    %cst_56 = arith.constant dense<0.000000e+00> : vector<8xf32>
    %102 = vector.multi_reduction <add>, %101, %cst_56 [1] : vector<8x32xf32> to vector<8xf32>
    %103 = vector.shape_cast %102 : vector<8xf32> to vector<8x1xf32>
    %cst_57 = arith.constant 3.200000e+01 : f32
    %104 = vector.broadcast %cst_57 : f32 to vector<8x1xf32>
    %105 = arith.divf %103, %104 : vector<8x1xf32>
    %106 = vector.broadcast %105 : vector<8x1xf32> to vector<8x32xf32>
    %107 = arith.subf %101, %106 : vector<8x32xf32>
    %108 = arith.mulf %107, %107 : vector<8x32xf32>
    %cst_58 = arith.constant dense<0.000000e+00> : vector<8xf32>
    %109 = vector.multi_reduction <add>, %108, %cst_58 [1] : vector<8x32xf32> to vector<8xf32>
    %110 = vector.shape_cast %109 : vector<8xf32> to vector<8x1xf32>
    %cst_59 = arith.constant 3.200000e+01 : f32
    %111 = vector.broadcast %cst_59 : f32 to vector<8x1xf32>
    %112 = arith.divf %110, %111 : vector<8x1xf32>
    %113 = vector.broadcast %105 : vector<8x1xf32> to vector<8x32xf32>
    %114 = arith.subf %101, %113 : vector<8x32xf32>
    %cst_60 = arith.constant 9.99999974E-6 : f32
    %115 = vector.broadcast %cst_60 : f32 to vector<8x1xf32>
    %116 = arith.addf %112, %115 : vector<8x1xf32>
    %117 = math.rsqrt %116 : vector<8x1xf32>
    %118 = vector.broadcast %117 : vector<8x1xf32> to vector<8x32xf32>
    %119 = arith.mulf %114, %118 : vector<8x32xf32>
    %120 = vector.broadcast %70 : vector<1x32xf32> to vector<8x32xf32>
    %121 = arith.mulf %119, %120 : vector<8x32xf32>
    %122 = vector.broadcast %71 : vector<1x32xf32> to vector<8x32xf32>
    %123 = arith.addf %121, %122 : vector<8x32xf32>
    %124 = arith.truncf %123 : vector<8x32xf32> to vector<8x32xbf16>
    %cst_61 = arith.constant dense<0.000000e+00> : vector<8x32xf32>
    %125 = tpu.matmul %124, %72, %cst_61 {dimension_numbers = #tpu.dot_dimension_numbers<[1], [0], [0], [1], [0, 0, 1, 1], [], []>} : vector<8x32xbf16>, vector<32x32xbf16>, vector<8x32xf32> -> vector<8x32xf32>
    %126 = vector.broadcast %73 : vector<1x32xf32> to vector<8x32xf32>
    %127 = arith.addf %125, %126 : vector<8x32xf32>
    %c0_62 = arith.constant 0 : index
    %c0_63 = arith.constant 0 : index
    %128 = vector.load %arg5[%c0_62, %c0_63] : memref<16x32xf32, #tpu.memory_space<vmem>>, vector<16x32xf32>
    %129 = arith.addf %63, %128 : vector<16x32xf32>
    %c0_64 = arith.constant 0 : index
    %c0_65 = arith.constant 0 : index
    %130 = vector.load %arg6[%c0_64, %c0_65] : memref<8x32xf32, #tpu.memory_space<vmem>>, vector<8x32xf32>
    %131 = arith.addf %127, %130 : vector<8x32xf32>
    %132 = tpu.concatenate %129, %131 in 0 : vector<16x32xf32>, vector<8x32xf32> -> vector<24x32xf32>
    %133 = arith.truncf %132 : vector<24x32xf32> to vector<24x32xbf16>
    %134 = tpu.transpose %132, [1, 0] : vector<24x32xf32> -> vector<32x24xf32>
    %135 = arith.truncf %134 : vector<32x24xf32> to vector<32x24xbf16>
    %c0_66 = arith.constant 0 : index
    %c0_67 = arith.constant 0 : index
    %c0_68 = arith.constant 0 : index
    %136 = vector.load %arg3[%c0_66, %c0_67, %c0_68] : memref<1x1x16xf32, #tpu.memory_space<vmem>>, vector<1x1x16xf32>
    %137 = vector.shape_cast %136 : vector<1x1x16xf32> to vector<1x16xf32>
    %cst_69 = arith.constant 1.000000e+00 : f32
    %138 = vector.broadcast %cst_69 : f32 to vector<1x16xf32>
    %139 = arith.subf %138, %137 : vector<1x16xf32>
    %cst_70 = arith.constant -1.000000e+09 : f32
    %140 = vector.broadcast %cst_70 : f32 to vector<1x16xf32>
    %141 = arith.mulf %139, %140 : vector<1x16xf32>
    %c0_71 = arith.constant 0 : index
    %c0_72 = arith.constant 0 : index
    %c0_73 = arith.constant 0 : index
    %142 = vector.load %arg4[%c0_71, %c0_72, %c0_73] : memref<1x1x8xf32, #tpu.memory_space<vmem>>, vector<1x1x8xf32>
    %143 = vector.shape_cast %142 : vector<1x1x8xf32> to vector<1x8xf32>
    %cst_74 = arith.constant 1.000000e+00 : f32
    %144 = vector.broadcast %cst_74 : f32 to vector<1x8xf32>
    %145 = arith.subf %144, %143 : vector<1x8xf32>
    %cst_75 = arith.constant -1.000000e+09 : f32
    %146 = vector.broadcast %cst_75 : f32 to vector<1x8xf32>
    %147 = arith.mulf %145, %146 : vector<1x8xf32>
    %148 = tpu.concatenate %141, %147 in 1 : vector<1x16xf32>, vector<1x8xf32> -> vector<1x24xf32>
    %149 = vector.shape_cast %148 : vector<1x24xf32> to vector<1x24xf32>
    %150 = vector.broadcast %149 : vector<1x24xf32> to vector<4x24xf32>
    %c0_76 = arith.constant 0 : index
    %c0_77 = arith.constant 0 : index
    %151 = vector.load %arg25[%c0_76, %c0_77] : memref<64x32xbf16, #tpu.memory_space<vmem>>, vector<64x32xbf16>
    %cst_78 = arith.constant dense<0.000000e+00> : vector<64x24xf32>
    %152 = tpu.matmul %151, %135, %cst_78 {dimension_numbers = #tpu.dot_dimension_numbers<[1], [0], [0], [1], [0, 0, 1, 1], [], []>} : vector<64x32xbf16>, vector<32x24xbf16>, vector<64x24xf32> -> vector<64x24xf32>
    %153 = arith.truncf %152 : vector<64x24xf32> to vector<64x24xbf16>
    %c0_79 = arith.constant 0 : index
    %c0_80 = arith.constant 0 : index
    %154 = vector.load %arg23[%c0_79, %c0_80] : memref<4x32xf32, #tpu.memory_space<vmem>>, vector<4x32xf32>
    %155 = arith.truncf %154 : vector<4x32xf32> to vector<4x32xbf16>
    %c0_81 = arith.constant 0 : index
    %c0_82 = arith.constant 0 : index
    %c0_83 = arith.constant 0 : index
    %156 = vector.load %arg24[%c0_81, %c0_82, %c0_83] : memref<2x32x32xbf16, #tpu.memory_space<vmem>>, vector<1x32x32xbf16>
    %157 = vector.shape_cast %156 : vector<1x32x32xbf16> to vector<32x32xbf16>
    %cst_84 = arith.constant dense<0.000000e+00> : vector<4x32xf32>
    %158 = tpu.matmul %155, %157, %cst_84 {dimension_numbers = #tpu.dot_dimension_numbers<[1], [0], [0], [1], [0, 0, 1, 1], [], []>} : vector<4x32xbf16>, vector<32x32xbf16>, vector<4x32xf32> -> vector<4x32xf32>
    %159 = arith.truncf %158 : vector<4x32xf32> to vector<4x32xbf16>
    %160 = vector.extract_strided_slice %153 {offsets = [0, 0], sizes = [32, 24], strides = [1, 1]} : vector<64x24xbf16> to vector<32x24xbf16>
    %cst_85 = arith.constant dense<0.000000e+00> : vector<4x24xf32>
    %161 = tpu.matmul %159, %160, %cst_85 {dimension_numbers = #tpu.dot_dimension_numbers<[1], [0], [0], [1], [0, 0, 1, 1], [], []>} : vector<4x32xbf16>, vector<32x24xbf16>, vector<4x24xf32> -> vector<4x24xf32>
    %162 = arith.addf %161, %150 : vector<4x24xf32>
    %cst_86 = arith.constant dense<0xFF800000> : vector<4xf32>
    %163 = vector.multi_reduction <maximumf>, %162, %cst_86 [1] : vector<4x24xf32> to vector<4xf32>
    %164 = vector.shape_cast %163 : vector<4xf32> to vector<4x1xf32>
    %165 = vector.broadcast %164 : vector<4x1xf32> to vector<4x24xf32>
    %166 = arith.subf %162, %165 : vector<4x24xf32>
    %167 = math.exp %166 : vector<4x24xf32>
    %cst_87 = arith.constant dense<0.000000e+00> : vector<4xf32>
    %168 = vector.multi_reduction <add>, %167, %cst_87 [1] : vector<4x24xf32> to vector<4xf32>
    %169 = vector.shape_cast %168 : vector<4xf32> to vector<4x1xf32>
    %170 = tpu.reciprocal %169 {approx = true} : vector<4x1xf32> -> vector<4x1xf32>
    %171 = vector.broadcast %170 : vector<4x1xf32> to vector<4x24xf32>
    %172 = arith.mulf %167, %171 : vector<4x24xf32>
    %c0_88 = arith.constant 0 : index
    %c0_89 = arith.constant 0 : index
    %c0_90 = arith.constant 0 : index
    %173 = vector.load %arg26[%c0_88, %c0_89, %c0_90] : memref<2x32x32xbf16, #tpu.memory_space<vmem>>, vector<1x32x32xbf16>
    %174 = vector.shape_cast %173 : vector<1x32x32xbf16> to vector<32x32xbf16>
    %cst_91 = arith.constant dense<0.000000e+00> : vector<24x32xf32>
    %175 = tpu.matmul %133, %174, %cst_91 {dimension_numbers = #tpu.dot_dimension_numbers<[1], [0], [0], [1], [0, 0, 1, 1], [], []>} : vector<24x32xbf16>, vector<32x32xbf16>, vector<24x32xf32> -> vector<24x32xf32>
    %176 = arith.truncf %172 : vector<4x24xf32> to vector<4x24xbf16>
    %177 = arith.truncf %175 : vector<24x32xf32> to vector<24x32xbf16>
    %cst_92 = arith.constant dense<0.000000e+00> : vector<4x32xf32>
    %178 = tpu.matmul %176, %177, %cst_92 {dimension_numbers = #tpu.dot_dimension_numbers<[1], [0], [0], [1], [0, 0, 1, 1], [], []>} : vector<4x24xbf16>, vector<24x32xbf16>, vector<4x32xf32> -> vector<4x32xf32>
    %179 = arith.truncf %178 : vector<4x32xf32> to vector<4x32xbf16>
    %c0_93 = arith.constant 0 : index
    %c0_94 = arith.constant 0 : index
    %c0_95 = arith.constant 0 : index
    %180 = vector.load %arg27[%c0_93, %c0_94, %c0_95] : memref<2x32x32xbf16, #tpu.memory_space<vmem>>, vector<1x32x32xbf16>
    %181 = vector.shape_cast %180 : vector<1x32x32xbf16> to vector<32x32xbf16>
    %cst_96 = arith.constant dense<0.000000e+00> : vector<4x32xf32>
    %182 = tpu.matmul %179, %181, %cst_96 {dimension_numbers = #tpu.dot_dimension_numbers<[1], [0], [0], [1], [0, 0, 1, 1], [], []>} : vector<4x32xbf16>, vector<32x32xbf16>, vector<4x32xf32> -> vector<4x32xf32>
    %183 = arith.addf %154, %182 : vector<4x32xf32>
    %c1 = arith.constant 1 : index
    %c0_97 = arith.constant 0 : index
    %c0_98 = arith.constant 0 : index
    %184 = vector.load %arg24[%c1, %c0_97, %c0_98] : memref<2x32x32xbf16, #tpu.memory_space<vmem>>, vector<1x32x32xbf16>
    %185 = vector.shape_cast %184 : vector<1x32x32xbf16> to vector<32x32xbf16>
    %cst_99 = arith.constant dense<0.000000e+00> : vector<4x32xf32>
    %186 = tpu.matmul %155, %185, %cst_99 {dimension_numbers = #tpu.dot_dimension_numbers<[1], [0], [0], [1], [0, 0, 1, 1], [], []>} : vector<4x32xbf16>, vector<32x32xbf16>, vector<4x32xf32> -> vector<4x32xf32>
    %187 = arith.truncf %186 : vector<4x32xf32> to vector<4x32xbf16>
    %188 = vector.extract_strided_slice %153 {offsets = [32, 0], sizes = [32, 24], strides = [1, 1]} : vector<64x24xbf16> to vector<32x24xbf16>
    %cst_100 = arith.constant dense<0.000000e+00> : vector<4x24xf32>
    %189 = tpu.matmul %187, %188, %cst_100 {dimension_numbers = #tpu.dot_dimension_numbers<[1], [0], [0], [1], [0, 0, 1, 1], [], []>} : vector<4x32xbf16>, vector<32x24xbf16>, vector<4x24xf32> -> vector<4x24xf32>
    %190 = arith.addf %189, %150 : vector<4x24xf32>
    %cst_101 = arith.constant dense<0xFF800000> : vector<4xf32>
    %191 = vector.multi_reduction <maximumf>, %190, %cst_101 [1] : vector<4x24xf32> to vector<4xf32>
    %192 = vector.shape_cast %191 : vector<4xf32> to vector<4x1xf32>
    %193 = vector.broadcast %192 : vector<4x1xf32> to vector<4x24xf32>
    %194 = arith.subf %190, %193 : vector<4x24xf32>
    %195 = math.exp %194 : vector<4x24xf32>
    %cst_102 = arith.constant dense<0.000000e+00> : vector<4xf32>
    %196 = vector.multi_reduction <add>, %195, %cst_102 [1] : vector<4x24xf32> to vector<4xf32>
    %197 = vector.shape_cast %196 : vector<4xf32> to vector<4x1xf32>
    %198 = tpu.reciprocal %197 {approx = true} : vector<4x1xf32> -> vector<4x1xf32>
    %199 = vector.broadcast %198 : vector<4x1xf32> to vector<4x24xf32>
    %200 = arith.mulf %195, %199 : vector<4x24xf32>
    %c1_103 = arith.constant 1 : index
    %c0_104 = arith.constant 0 : index
    %c0_105 = arith.constant 0 : index
    %201 = vector.load %arg26[%c1_103, %c0_104, %c0_105] : memref<2x32x32xbf16, #tpu.memory_space<vmem>>, vector<1x32x32xbf16>
    %202 = vector.shape_cast %201 : vector<1x32x32xbf16> to vector<32x32xbf16>
    %cst_106 = arith.constant dense<0.000000e+00> : vector<24x32xf32>
    %203 = tpu.matmul %133, %202, %cst_106 {dimension_numbers = #tpu.dot_dimension_numbers<[1], [0], [0], [1], [0, 0, 1, 1], [], []>} : vector<24x32xbf16>, vector<32x32xbf16>, vector<24x32xf32> -> vector<24x32xf32>
    %204 = arith.truncf %200 : vector<4x24xf32> to vector<4x24xbf16>
    %205 = arith.truncf %203 : vector<24x32xf32> to vector<24x32xbf16>
    %cst_107 = arith.constant dense<0.000000e+00> : vector<4x32xf32>
    %206 = tpu.matmul %204, %205, %cst_107 {dimension_numbers = #tpu.dot_dimension_numbers<[1], [0], [0], [1], [0, 0, 1, 1], [], []>} : vector<4x24xbf16>, vector<24x32xbf16>, vector<4x32xf32> -> vector<4x32xf32>
    %207 = arith.truncf %206 : vector<4x32xf32> to vector<4x32xbf16>
    %c1_108 = arith.constant 1 : index
    %c0_109 = arith.constant 0 : index
    %c0_110 = arith.constant 0 : index
    %208 = vector.load %arg27[%c1_108, %c0_109, %c0_110] : memref<2x32x32xbf16, #tpu.memory_space<vmem>>, vector<1x32x32xbf16>
    %209 = vector.shape_cast %208 : vector<1x32x32xbf16> to vector<32x32xbf16>
    %cst_111 = arith.constant dense<0.000000e+00> : vector<4x32xf32>
    %210 = tpu.matmul %207, %209, %cst_111 {dimension_numbers = #tpu.dot_dimension_numbers<[1], [0], [0], [1], [0, 0, 1, 1], [], []>} : vector<4x32xbf16>, vector<32x32xbf16>, vector<4x32xf32> -> vector<4x32xf32>
    %211 = arith.addf %154, %210 : vector<4x32xf32>
    %212 = tpu.concatenate %183, %211 in 0 : vector<4x32xf32>, vector<4x32xf32> -> vector<8x32xf32>
    %213 = arith.truncf %212 : vector<8x32xf32> to vector<8x32xbf16>
    %c0_112 = arith.constant 0 : index
    %c0_113 = arith.constant 0 : index
    %214 = vector.load %arg28[%c0_112, %c0_113] : memref<32x32xbf16, #tpu.memory_space<vmem>>, vector<32x32xbf16>
    %cst_114 = arith.constant dense<0.000000e+00> : vector<8x32xf32>
    %215 = tpu.matmul %213, %214, %cst_114 {dimension_numbers = #tpu.dot_dimension_numbers<[1], [0], [0], [1], [0, 0, 1, 1], [], []>} : vector<8x32xbf16>, vector<32x32xbf16>, vector<8x32xf32> -> vector<8x32xf32>
    %c0_115 = arith.constant 0 : index
    %c0_116 = arith.constant 0 : index
    %216 = vector.load %arg29[%c0_115, %c0_116] : memref<1x32xf32, #tpu.memory_space<vmem>>, vector<1x32xf32>
    %217 = vector.broadcast %216 : vector<1x32xf32> to vector<8x32xf32>
    %218 = arith.addf %215, %217 : vector<8x32xf32>
    %cst_117 = arith.constant 0.000000e+00 : f32
    %219 = vector.broadcast %cst_117 : f32 to vector<8x32xf32>
    %220 = arith.maximumf %218, %219 : vector<8x32xf32>
    %221 = arith.truncf %220 : vector<8x32xf32> to vector<8x32xbf16>
    %c0_118 = arith.constant 0 : index
    %c0_119 = arith.constant 0 : index
    %222 = vector.load %arg30[%c0_118, %c0_119] : memref<32x32xbf16, #tpu.memory_space<vmem>>, vector<32x32xbf16>
    %cst_120 = arith.constant dense<0.000000e+00> : vector<8x32xf32>
    %223 = tpu.matmul %221, %222, %cst_120 {dimension_numbers = #tpu.dot_dimension_numbers<[1], [0], [0], [1], [0, 0, 1, 1], [], []>} : vector<8x32xbf16>, vector<32x32xbf16>, vector<8x32xf32> -> vector<8x32xf32>
    %c0_121 = arith.constant 0 : index
    %c0_122 = arith.constant 0 : index
    %224 = vector.load %arg31[%c0_121, %c0_122] : memref<1x32xf32, #tpu.memory_space<vmem>>, vector<1x32xf32>
    %225 = vector.broadcast %224 : vector<1x32xf32> to vector<8x32xf32>
    %226 = arith.addf %223, %225 : vector<8x32xf32>
    %cst_123 = arith.constant 0.000000e+00 : f32
    %227 = vector.broadcast %cst_123 : f32 to vector<8x32xf32>
    %228 = arith.maximumf %226, %227 : vector<8x32xf32>
    %229 = tpu.concatenate %212, %228 in 1 : vector<8x32xf32>, vector<8x32xf32> -> vector<8x64xf32>
    %230 = arith.truncf %229 : vector<8x64xf32> to vector<8x64xbf16>
    %c0_124 = arith.constant 0 : index
    %c0_125 = arith.constant 0 : index
    %231 = vector.load %arg32[%c0_124, %c0_125] : memref<64x128xbf16, #tpu.memory_space<vmem>>, vector<64x128xbf16>
    %cst_126 = arith.constant dense<0.000000e+00> : vector<8x128xf32>
    %232 = tpu.matmul %230, %231, %cst_126 {dimension_numbers = #tpu.dot_dimension_numbers<[1], [0], [0], [1], [0, 0, 1, 1], [], []>} : vector<8x64xbf16>, vector<64x128xbf16>, vector<8x128xf32> -> vector<8x128xf32>
    %c0_127 = arith.constant 0 : index
    %c0_128 = arith.constant 0 : index
    %233 = vector.load %arg33[%c0_127, %c0_128] : memref<1x128xf32, #tpu.memory_space<vmem>>, vector<1x128xf32>
    %234 = vector.broadcast %233 : vector<1x128xf32> to vector<8x128xf32>
    %235 = arith.addf %232, %234 : vector<8x128xf32>
    %236 = tpu.iota {dimensions = array<i32: 1>} : vector<8x128xi32>
    %c2_i32 = arith.constant 2 : i32
    %237 = vector.broadcast %c2_i32 : i32 to vector<8x128xi32>
    %238 = arith.cmpi sge, %236, %237 : vector<8x128xi32>
    %c6_i32 = arith.constant 6 : i32
    %239 = vector.broadcast %c6_i32 : i32 to vector<8x128xi32>
    %240 = arith.cmpi slt, %236, %239 : vector<8x128xi32>
    %241 = arith.andi %238, %240 : vector<8x128xi1>
    %242 = arith.negf %235 : vector<8x128xf32>
    %243 = math.exp %242 : vector<8x128xf32>
    %cst_129 = arith.constant 1.000000e+00 : f32
    %244 = vector.broadcast %cst_129 : f32 to vector<8x128xf32>
    %245 = arith.addf %244, %243 : vector<8x128xf32>
    %246 = arith.divf %244, %245 : vector<8x128xf32>
    %247 = arith.select %241, %246, %235 : vector<8x128xi1>, vector<8x128xf32>
    %c0_130 = arith.constant 0 : index
    %c0_131 = arith.constant 0 : index
    %248 = vector.load %arg34[%c0_130, %c0_131] : memref<8x128xf32, #tpu.memory_space<vmem>>, vector<8x128xf32>
    tpu.vector_store %arg34[%c0_130, %c0_131], %247 {strides = array<i32>} : memref<8x128xf32, #tpu.memory_space<vmem>>, vector<8x128xf32>,
    return
  }
  func.func @transform_0(%arg0: i32) -> (i32, i32, i32) {
    %c0_i32 = arith.constant 0 : i32
    %c0_i32_0 = arith.constant 0 : i32
    %c0_i32_1 = arith.constant 0 : i32
    return %arg0, %c0_i32, %c0_i32_0 : i32, i32, i32
  }
  func.func @transform_1(%arg0: i32) -> (i32, i32, i32) {
    %c0_i32 = arith.constant 0 : i32
    %c0_i32_0 = arith.constant 0 : i32
    %c0_i32_1 = arith.constant 0 : i32
    return %arg0, %c0_i32, %c0_i32_0 : i32, i32, i32
  }
  func.func @transform_2(%arg0: i32) -> (i32, i32, i32) {
    %c0_i32 = arith.constant 0 : i32
    %c0_i32_0 = arith.constant 0 : i32
    %c0_i32_1 = arith.constant 0 : i32
    return %arg0, %c0_i32, %c0_i32_0 : i32, i32, i32
  }
  func.func @transform_3(%arg0: i32) -> (i32, i32, i32) {
    %c0_i32 = arith.constant 0 : i32
    %c0_i32_0 = arith.constant 0 : i32
    %c0_i32_1 = arith.constant 0 : i32
    return %arg0, %c0_i32, %c0_i32_0 : i32, i32, i32
  }
  func.func @transform_4(%arg0: i32) -> (i32, i32) {
    %c0_i32 = arith.constant 0 : i32
    %c0_i32_0 = arith.constant 0 : i32
    %c0_i32_1 = arith.constant 0 : i32
    return %c0_i32, %c0_i32_0 : i32, i32
  }
  func.func @transform_5(%arg0: i32) -> (i32, i32) {
    %c0_i32 = arith.constant 0 : i32
    %c0_i32_0 = arith.constant 0 : i32
    %c0_i32_1 = arith.constant 0 : i32
    return %c0_i32, %c0_i32_0 : i32, i32
  }
  func.func @transform_6(%arg0: i32) -> (i32, i32) {
    %c0_i32 = arith.constant 0 : i32
    %c0_i32_0 = arith.constant 0 : i32
    %c0_i32_1 = arith.constant 0 : i32
    return %c0_i32, %c0_i32_0 : i32, i32
  }
  func.func @transform_7(%arg0: i32) -> (i32, i32) {
    %c0_i32 = arith.constant 0 : i32
    %c0_i32_0 = arith.constant 0 : i32
    %c0_i32_1 = arith.constant 0 : i32
    return %c0_i32, %c0_i32_0 : i32, i32
  }
  func.func @transform_8(%arg0: i32) -> (i32, i32) {
    %c0_i32 = arith.constant 0 : i32
    %c0_i32_0 = arith.constant 0 : i32
    %c0_i32_1 = arith.constant 0 : i32
    return %c0_i32, %c0_i32_0 : i32, i32
  }
  func.func @transform_9(%arg0: i32) -> (i32, i32) {
    %c0_i32 = arith.constant 0 : i32
    %c0_i32_0 = arith.constant 0 : i32
    %c0_i32_1 = arith.constant 0 : i32
    return %c0_i32, %c0_i32_0 : i32, i32
  }
  func.func @transform_10(%arg0: i32) -> (i32, i32) {
    %c0_i32 = arith.constant 0 : i32
    %c0_i32_0 = arith.constant 0 : i32
    %c0_i32_1 = arith.constant 0 : i32
    return %c0_i32, %c0_i32_0 : i32, i32
  }
  func.func @transform_11(%arg0: i32) -> (i32, i32) {
    %c0_i32 = arith.constant 0 : i32
    %c0_i32_0 = arith.constant 0 : i32
    %c0_i32_1 = arith.constant 0 : i32
    return %c0_i32, %c0_i32_0 : i32, i32
  }
  func.func @transform_12(%arg0: i32) -> (i32, i32) {
    %c0_i32 = arith.constant 0 : i32
    %c0_i32_0 = arith.constant 0 : i32
    %c0_i32_1 = arith.constant 0 : i32
    return %c0_i32, %c0_i32_0 : i32, i32
  }
  func.func @transform_13(%arg0: i32) -> (i32, i32) {
    %c0_i32 = arith.constant 0 : i32
    %c0_i32_0 = arith.constant 0 : i32
    %c0_i32_1 = arith.constant 0 : i32
    return %c0_i32, %c0_i32_0 : i32, i32
  }
  func.func @transform_14(%arg0: i32) -> (i32, i32) {
    %c0_i32 = arith.constant 0 : i32
    %c0_i32_0 = arith.constant 0 : i32
    %c0_i32_1 = arith.constant 0 : i32
    return %c0_i32, %c0_i32_0 : i32, i32
  }
  func.func @transform_15(%arg0: i32) -> (i32, i32) {
    %c0_i32 = arith.constant 0 : i32
    %c0_i32_0 = arith.constant 0 : i32
    %c0_i32_1 = arith.constant 0 : i32
    return %c0_i32, %c0_i32_0 : i32, i32
  }
  func.func @transform_16(%arg0: i32) -> (i32, i32) {
    %c0_i32 = arith.constant 0 : i32
    %c0_i32_0 = arith.constant 0 : i32
    %c0_i32_1 = arith.constant 0 : i32
    return %c0_i32, %c0_i32_0 : i32, i32
  }
  func.func @transform_17(%arg0: i32) -> (i32, i32) {
    %c0_i32 = arith.constant 0 : i32
    %c0_i32_0 = arith.constant 0 : i32
    %c0_i32_1 = arith.constant 0 : i32
    return %c0_i32, %c0_i32_0 : i32, i32
  }
  func.func @transform_18(%arg0: i32) -> (i32, i32) {
    %c0_i32 = arith.constant 0 : i32
    %c0_i32_0 = arith.constant 0 : i32
    %c0_i32_1 = arith.constant 0 : i32
    return %c0_i32, %c0_i32_0 : i32, i32
  }
  func.func @transform_19(%arg0: i32) -> (i32, i32) {
    %c0_i32 = arith.constant 0 : i32
    %c0_i32_0 = arith.constant 0 : i32
    %c0_i32_1 = arith.constant 0 : i32
    return %c0_i32, %c0_i32_0 : i32, i32
  }
  func.func @transform_20(%arg0: i32) -> (i32, i32) {
    %c0_i32 = arith.constant 0 : i32
    %c0_i32_0 = arith.constant 0 : i32
    %c0_i32_1 = arith.constant 0 : i32
    return %c0_i32, %c0_i32_0 : i32, i32
  }
  func.func @transform_21(%arg0: i32) -> (i32, i32) {
    %c0_i32 = arith.constant 0 : i32
    %c0_i32_0 = arith.constant 0 : i32
    %c0_i32_1 = arith.constant 0 : i32
    return %c0_i32, %c0_i32_0 : i32, i32
  }
  func.func @transform_22(%arg0: i32) -> (i32, i32) {
    %c0_i32 = arith.constant 0 : i32
    %c0_i32_0 = arith.constant 0 : i32
    %c0_i32_1 = arith.constant 0 : i32
    return %c0_i32, %c0_i32_0 : i32, i32
  }
  func.func @transform_23(%arg0: i32) -> (i32, i32, i32) {
    %c0_i32 = arith.constant 0 : i32
    %c0_i32_0 = arith.constant 0 : i32
    %c0_i32_1 = arith.constant 0 : i32
    %c0_i32_2 = arith.constant 0 : i32
    return %c0_i32, %c0_i32_0, %c0_i32_1 : i32, i32, i32
  }
  func.func @transform_24(%arg0: i32) -> (i32, i32) {
    %c0_i32 = arith.constant 0 : i32
    %c0_i32_0 = arith.constant 0 : i32
    %c0_i32_1 = arith.constant 0 : i32
    return %c0_i32, %c0_i32_0 : i32, i32
  }
  func.func @transform_25(%arg0: i32) -> (i32, i32, i32) {
    %c0_i32 = arith.constant 0 : i32
    %c0_i32_0 = arith.constant 0 : i32
    %c0_i32_1 = arith.constant 0 : i32
    %c0_i32_2 = arith.constant 0 : i32
    return %c0_i32, %c0_i32_0, %c0_i32_1 : i32, i32, i32
  }
  func.func @transform_26(%arg0: i32) -> (i32, i32, i32) {
    %c0_i32 = arith.constant 0 : i32
    %c0_i32_0 = arith.constant 0 : i32
    %c0_i32_1 = arith.constant 0 : i32
    %c0_i32_2 = arith.constant 0 : i32
    return %c0_i32, %c0_i32_0, %c0_i32_1 : i32, i32, i32
  }
  func.func @transform_27(%arg0: i32) -> (i32, i32) {
    %c0_i32 = arith.constant 0 : i32
    %c0_i32_0 = arith.constant 0 : i32
    %c0_i32_1 = arith.constant 0 : i32
    return %c0_i32, %c0_i32_0 : i32, i32
  }
  func.func @transform_28(%arg0: i32) -> (i32, i32) {
    %c0_i32 = arith.constant 0 : i32
    %c0_i32_0 = arith.constant 0 : i32
    %c0_i32_1 = arith.constant 0 : i32
    return %c0_i32, %c0_i32_0 : i32, i32
  }
  func.func @transform_29(%arg0: i32) -> (i32, i32) {
    %c0_i32 = arith.constant 0 : i32
    %c0_i32_0 = arith.constant 0 : i32
    %c0_i32_1 = arith.constant 0 : i32
    return %c0_i32, %c0_i32_0 : i32, i32
  }
  func.func @transform_30(%arg0: i32) -> (i32, i32) {
    %c0_i32 = arith.constant 0 : i32
    %c0_i32_0 = arith.constant 0 : i32
    %c0_i32_1 = arith.constant 0 : i32
    return %c0_i32, %c0_i32_0 : i32, i32
  }
  func.func @transform_31(%arg0: i32) -> (i32, i32) {
    %c0_i32 = arith.constant 0 : i32
    %c0_i32_0 = arith.constant 0 : i32
    %c0_i32_1 = arith.constant 0 : i32
    return %c0_i32, %c0_i32_0 : i32, i32
  }
  func.func @transform_32(%arg0: i32) -> (i32, i32) {
    %c0_i32 = arith.constant 0 : i32
    %c0_i32_0 = arith.constant 0 : i32
    %c0_i32_1 = arith.constant 0 : i32
    return %c0_i32, %c0_i32_0 : i32, i32
  }
  func.func @transform_33(%arg0: i32) -> (i32, i32) {
    %c0_i32 = arith.constant 0 : i32
    %c0_i32_0 = arith.constant 0 : i32
    return %arg0, %c0_i32 : i32, i32
  }
}

</mosaic_0001>

<llo_original>
// kernel: svanet_forward.1
$region0: #{svanet_forward.1}
  #allocation0 [shape = 'u32[]', space=smem, size = 0x4, offset = 0x4, fixed_abs, tag = 'smem constant byte address 0x4 - core index']
  #allocation1 [shape = 'u32[144,128]{1,0:T(1,128)}', space=vmem, size = 0x12000, scoped, tag = 'internal scratch']
  %s0 = inlined_call_operand.smem [shape: u32[34], index: -1, kind: input, shape index: {}]
  %s1 = sld [smem:[%s0]]
  %s2 = scalar_lea.smem %s0, 1
  %s3 = sld [smem:[%s2]]
  %s4 = scalar_lea.smem %s0, 2
  %s5 = sld [smem:[%s4]]
  %s6 = scalar_lea.smem %s0, 3
  %s7 = sld [smem:[%s6]]
  %s8 = scalar_lea.smem %s0, 4
  %s9 = sld [smem:[%s8]]
  %s10 = scalar_lea.smem %s0, 5
  %s11 = sld [smem:[%s10]]
  %s12 = scalar_lea.smem %s0, 6
  %s13 = sld [smem:[%s12]]
  %s14 = scalar_lea.smem %s0, 7
  %s15 = sld [smem:[%s14]]
  %s16 = scalar_lea.smem %s0, 8
  %s17 = sld [smem:[%s16]]
  %s18 = scalar_lea.smem %s0, 9
  %s19 = sld [smem:[%s18]]
  %s20 = scalar_lea.smem %s0, 10
  %s21 = sld [smem:[%s20]]
  %s22 = scalar_lea.smem %s0, 11
  %s23 = sld [smem:[%s22]]
  %s24 = scalar_lea.smem %s0, 12
  %s25 = sld [smem:[%s24]]
  %s26 = scalar_lea.smem %s0, 13
  %s27 = sld [smem:[%s26]]
  %s28 = scalar_lea.smem %s0, 14
  %s29 = sld [smem:[%s28]]
  %s30 = scalar_lea.smem %s0, 15
  %s31 = sld [smem:[%s30]]
  %s32 = scalar_lea.smem %s0, 16
  %s33 = sld [smem:[%s32]]
  %s34 = scalar_lea.smem %s0, 17
  %s35 = sld [smem:[%s34]]
  %s36 = scalar_lea.smem %s0, 18
  %s37 = sld [smem:[%s36]]
  %s38 = scalar_lea.smem %s0, 19
  %s39 = sld [smem:[%s38]]
  %s40 = scalar_lea.smem %s0, 20
  %s41 = sld [smem:[%s40]]
  %s42 = scalar_lea.smem %s0, 21
  %s43 = sld [smem:[%s42]]
  %s44 = scalar_lea.smem %s0, 22
  %s45 = sld [smem:[%s44]]
  %s46 = scalar_lea.smem %s0, 23
  %s47 = sld [smem:[%s46]]
  %s48 = scalar_lea.smem %s0, 24
  %s49 = sld [smem:[%s48]]
  %s50 = scalar_lea.smem %s0, 25
  %s51 = sld [smem:[%s50]]
  %s52 = scalar_lea.smem %s0, 26
  %s53 = sld [smem:[%s52]]
  %s54 = scalar_lea.smem %s0, 27
  %s55 = sld [smem:[%s54]]
  %s56 = scalar_lea.smem %s0, 28
  %s57 = sld [smem:[%s56]]
  %s58 = scalar_lea.smem %s0, 29
  %s59 = sld [smem:[%s58]]
  %s60 = scalar_lea.smem %s0, 30
  %s61 = sld [smem:[%s60]]
  %s62 = scalar_lea.smem %s0, 31
  %s63 = sld [smem:[%s62]]
  %s64 = scalar_lea.smem %s0, 32
  %s65 = sld [smem:[%s64]]
  %s66 = scalar_lea.smem %s0, 33
  %s67 = sld [smem:[%s66]]
  %s68 = sld [smem:[#allocation0]]
  $region165: #{svanet_forward.1} parent=0
    _
  %s70 = ssub.s32 1, %s68
  %s71 = scalar_select 0, %s70, %s68
  loop: start=0, step=1, limit=4
  $region2: #{svanet_forward.1} parent=0 // loop_pre_header
    _
  $region3: #{svanet_forward.1} parent=0 // loop_header
    %s73 = sphi 0, %s77
    %p74 = scmp.ge.s32.totalorder %s73, 4
    %s83 = sphi 0, %s85
    %s86 = sphi 0, %s83
    %s87 = sphi 0, %s86
    %s103 = sphi 0, %s87
    %s109 = sphi 0, %s111
    %s112 = sphi 0, %s109
    %s113 = sphi 0, %s112
    %s129 = sphi 0, %s113
    %s135 = sphi 0, %s137
    %s138 = sphi 0, %s135
    %s139 = sphi 0, %s138
    %s155 = sphi 0, %s139
    %s161 = sphi 0, %s163
    %s164 = sphi 0, %s161
    %s165 = sphi 0, %s164
    %s181 = sphi 0, %s165
    %s185 = sphi 0, %s185
    %s187 = sphi 0, %s185
    %s188 = sphi 0, %s187
    %s202 = sphi 0, %s188
    %s206 = sphi 0, %s206
    %s208 = sphi 0, %s206
    %s209 = sphi 0, %s208
    %s223 = sphi 0, %s209
    %s227 = sphi 0, %s227
    %s229 = sphi 0, %s227
    %s230 = sphi 0, %s229
    %s244 = sphi 0, %s230
    %s248 = sphi 0, %s248
    %s250 = sphi 0, %s248
    %s251 = sphi 0, %s250
    %s265 = sphi 0, %s251
    %s269 = sphi 0, %s269
    %s271 = sphi 0, %s269
    %s272 = sphi 0, %s271
    %s286 = sphi 0, %s272
    %s290 = sphi 0, %s290
    %s292 = sphi 0, %s290
    %s293 = sphi 0, %s292
    %s307 = sphi 0, %s293
    %s311 = sphi 0, %s311
    %s313 = sphi 0, %s311
    %s314 = sphi 0, %s313
    %s328 = sphi 0, %s314
    %s332 = sphi 0, %s332
    %s334 = sphi 0, %s332
    %s335 = sphi 0, %s334
    %s349 = sphi 0, %s335
    %s353 = sphi 0, %s353
    %s355 = sphi 0, %s353
    %s356 = sphi 0, %s355
    %s370 = sphi 0, %s356
    %s374 = sphi 0, %s374
    %s376 = sphi 0, %s374
    %s377 = sphi 0, %s376
    %s391 = sphi 0, %s377
    %s395 = sphi 0, %s395
    %s397 = sphi 0, %s395
    %s398 = sphi 0, %s397
    %s412 = sphi 0, %s398
    %s416 = sphi 0, %s416
    %s418 = sphi 0, %s416
    %s419 = sphi 0, %s418
    %s433 = sphi 0, %s419
    %s437 = sphi 0, %s437
    %s439 = sphi 0, %s437
    %s440 = sphi 0, %s439
    %s454 = sphi 0, %s440
    %s458 = sphi 0, %s458
    %s460 = sphi 0, %s458
    %s461 = sphi 0, %s460
    %s475 = sphi 0, %s461
    %s479 = sphi 0, %s479
    %s481 = sphi 0, %s479
    %s482 = sphi 0, %s481
    %s496 = sphi 0, %s482
    %s500 = sphi 0, %s500
    %s502 = sphi 0, %s500
    %s503 = sphi 0, %s502
    %s517 = sphi 0, %s503
    %s521 = sphi 0, %s521
    %s523 = sphi 0, %s521
    %s524 = sphi 0, %s523
    %s538 = sphi 0, %s524
    %s542 = sphi 0, %s542
    %s544 = sphi 0, %s542
    %s545 = sphi 0, %s544
    %s559 = sphi 0, %s545
    %s563 = sphi 0, %s563
    %s565 = sphi 0, %s563
    %s566 = sphi 0, %s565
    %s580 = sphi 0, %s566
    %s584 = sphi 0, %s584
    %s586 = sphi 0, %s584
    %s587 = sphi 0, %s586
    %s601 = sphi 0, %s587
    %s605 = sphi 0, %s605
    %s607 = sphi 0, %s605
    %s608 = sphi 0, %s607
    %s622 = sphi 0, %s608
    %s626 = sphi 0, %s626
    %s628 = sphi 0, %s626
    %s629 = sphi 0, %s628
    %s643 = sphi 0, %s629
    %s647 = sphi 0, %s647
    %s649 = sphi 0, %s647
    %s650 = sphi 0, %s649
    %s664 = sphi 0, %s650
    %s668 = sphi 0, %s668
    %s670 = sphi 0, %s668
    %s671 = sphi 0, %s670
    %s685 = sphi 0, %s671
    %s689 = sphi 0, %s689
    %s691 = sphi 0, %s689
    %s692 = sphi 0, %s691
    %s706 = sphi 0, %s692
    %s710 = sphi 0, %s710
    %s712 = sphi 0, %s710
    %s713 = sphi 0, %s712
    %s727 = sphi 0, %s713
    %s731 = sphi 0, %s731
    %s733 = sphi 0, %s731
    %s734 = sphi 0, %s733
    %s748 = sphi 0, %s734
    %s752 = sphi 0, %s752
    %s754 = sphi 0, %s752
    %s755 = sphi 0, %s754
    %s769 = sphi 0, %s755
    %s773 = sphi 0, %s773
    %s775 = sphi 0, %s773
    %s776 = sphi 0, %s775
    %s790 = sphi 0, %s776
    %s796 = sphi 0, %s798
    %s799 = sphi 0, %s796
    %s800 = sphi 0, %s799
    %s816 = sphi 0, %s800
  $region4: #{svanet_forward.1} parent=0 // loop_header_branch
    %76 = sbr.rel (%p74) target = $region8
  $region5: #{svanet_forward.1} parent=0 // loop_body
    %s78 = ssub.s32 %s73, 1
    %s79 = ssub.s32 %s73, 2
    %s80 = sadd.s32 %s73, 1
    %s81 = ssub.s32 %s73, %s80
    %p82 = scmp.eq.s32.totalorder %s81, 0
    %s84 = sadd.s32 %s83, 1
    %s85 = scalar_select %p82, %s83, %s84
    %p88 = pneg %p82
    %p89 = scmp.eq.s32.totalorder %s73, 1
    %p90 = por %p88, %p89
    %p91 = scmp.ne.s32.totalorder %s83, %s86
    %p92 = scmp.eq.s32.totalorder %s73, 0
    %p93 = por %p91, %p92
    %p94 = scmp.ne.s32.totalorder %s83, %s86
    %p95 = scmp.eq.s32.totalorder %s78, 1
    %p96 = por %p94, %p95
    %p97 = scmp.ne.s32.totalorder %s86, %s87
    %p98 = scmp.eq.s32.totalorder %s78, 0
    %p99 = por %p97, %p98
    %p100 = scmp.ne.s32.totalorder %s86, %s87
    %p101 = scmp.eq.s32.totalorder %s79, 1
    %p102 = por %p100, %p101
    %p104 = scmp.ne.s32.totalorder %s87, %s103
    %p105 = scmp.eq.s32.totalorder %s79, 0
    %p106 = por %p104, %p105
    %s107 = ssub.s32 %s73, %s80
    %p108 = scmp.eq.s32.totalorder %s107, 0
    %s110 = sadd.s32 %s109, 1
    %s111 = scalar_select %p108, %s109, %s110
    %p114 = pneg %p108
    %p115 = scmp.eq.s32.totalorder %s73, 1
    %p116 = por %p114, %p115
    %p117 = scmp.ne.s32.totalorder %s109, %s112
    %p118 = scmp.eq.s32.totalorder %s73, 0
    %p119 = por %p117, %p118
    %p120 = scmp.ne.s32.totalorder %s109, %s112
    %p121 = scmp.eq.s32.totalorder %s78, 1
    %p122 = por %p120, %p121
    %p123 = scmp.ne.s32.totalorder %s112, %s113
    %p124 = scmp.eq.s32.totalorder %s78, 0
    %p125 = por %p123, %p124
    %p126 = scmp.ne.s32.totalorder %s112, %s113
    %p127 = scmp.eq.s32.totalorder %s79, 1
    %p128 = por %p126, %p127
    %p130 = scmp.ne.s32.totalorder %s113, %s129
    %p131 = scmp.eq.s32.totalorder %s79, 0
    %p132 = por %p130, %p131
    %s133 = ssub.s32 %s73, %s80
    %p134 = scmp.eq.s32.totalorder %s133, 0
    %s136 = sadd.s32 %s135, 1
    %s137 = scalar_select %p134, %s135, %s136
    %p140 = pneg %p134
    %p141 = scmp.eq.s32.totalorder %s73, 1
    %p142 = por %p140, %p141
    %p143 = scmp.ne.s32.totalorder %s135, %s138
    %p144 = scmp.eq.s32.totalorder %s73, 0
    %p145 = por %p143, %p144
    %p146 = scmp.ne.s32.totalorder %s135, %s138
    %p147 = scmp.eq.s32.totalorder %s78, 1
    %p148 = por %p146, %p147
    %p149 = scmp.ne.s32.totalorder %s138, %s139
    %p150 = scmp.eq.s32.totalorder %s78, 0
    %p151 = por %p149, %p150
    %p152 = scmp.ne.s32.totalorder %s138, %s139
    %p153 = scmp.eq.s32.totalorder %s79, 1
    %p154 = por %p152, %p153
    %p156 = scmp.ne.s32.totalorder %s139, %s155
    %p157 = scmp.eq.s32.totalorder %s79, 0
    %p158 = por %p156, %p157
    %s159 = ssub.s32 %s73, %s80
    %p160 = scmp.eq.s32.totalorder %s159, 0
    %s162 = sadd.s32 %s161, 1
    %s163 = scalar_select %p160, %s161, %s162
    %p166 = pneg %p160
    %p167 = scmp.eq.s32.totalorder %s73, 1
    %p168 = por %p166, %p167
    %p169 = scmp.ne.s32.totalorder %s161, %s164
    %p170 = scmp.eq.s32.totalorder %s73, 0
    %p171 = por %p169, %p170
    %p172 = scmp.ne.s32.totalorder %s161, %s164
    %p173 = scmp.eq.s32.totalorder %s78, 1
    %p174 = por %p172, %p173
    %p175 = scmp.ne.s32.totalorder %s164, %s165
    %p176 = scmp.eq.s32.totalorder %s78, 0
    %p177 = por %p175, %p176
    %p178 = scmp.ne.s32.totalorder %s164, %s165
    %p179 = scmp.eq.s32.totalorder %s79, 1
    %p180 = por %p178, %p179
    %p182 = scmp.ne.s32.totalorder %s165, %s181
    %p183 = scmp.eq.s32.totalorder %s79, 0
    %p184 = por %p182, %p183
    %s186 = sadd.s32 %s185, 1
    %p189 = scmp.eq.s32.totalorder %s73, 1
    %p190 = scmp.ne.s32.totalorder %s185, %s187
    %p191 = scmp.eq.s32.totalorder %s73, 0
    %p192 = por %p190, %p191
    %p193 = scmp.ne.s32.totalorder %s185, %s187
    %p194 = scmp.eq.s32.totalorder %s78, 1
    %p195 = por %p193, %p194
    %p196 = scmp.ne.s32.totalorder %s187, %s188
    %p197 = scmp.eq.s32.totalorder %s78, 0
    %p198 = por %p196, %p197
    %p199 = scmp.ne.s32.totalorder %s187, %s188
    %p200 = scmp.eq.s32.totalorder %s79, 1
    %p201 = por %p199, %p200
    %p203 = scmp.ne.s32.totalorder %s188, %s202
    %p204 = scmp.eq.s32.totalorder %s79, 0
    %p205 = por %p203, %p204
    %s207 = sadd.s32 %s206, 1
    %p210 = scmp.eq.s32.totalorder %s73, 1
    %p211 = scmp.ne.s32.totalorder %s206, %s208
    %p212 = scmp.eq.s32.totalorder %s73, 0
    %p213 = por %p211, %p212
    %p214 = scmp.ne.s32.totalorder %s206, %s208
    %p215 = scmp.eq.s32.totalorder %s78, 1
    %p216 = por %p214, %p215
    %p217 = scmp.ne.s32.totalorder %s208, %s209
    %p218 = scmp.eq.s32.totalorder %s78, 0
    %p219 = por %p217, %p218
    %p220 = scmp.ne.s32.totalorder %s208, %s209
    %p221 = scmp.eq.s32.totalorder %s79, 1
    %p222 = por %p220, %p221
    %p224 = scmp.ne.s32.totalorder %s209, %s223
    %p225 = scmp.eq.s32.totalorder %s79, 0
    %p226 = por %p224, %p225
    %s228 = sadd.s32 %s227, 1
    %p231 = scmp.eq.s32.totalorder %s73, 1
    %p232 = scmp.ne.s32.totalorder %s227, %s229
    %p233 = scmp.eq.s32.totalorder %s73, 0
    %p234 = por %p232, %p233
    %p235 = scmp.ne.s32.totalorder %s227, %s229
    %p236 = scmp.eq.s32.totalorder %s78, 1
    %p237 = por %p235, %p236
    %p238 = scmp.ne.s32.totalorder %s229, %s230
    %p239 = scmp.eq.s32.totalorder %s78, 0
    %p240 = por %p238, %p239
    %p241 = scmp.ne.s32.totalorder %s229, %s230
    %p242 = scmp.eq.s32.totalorder %s79, 1
    %p243 = por %p241, %p242
    %p245 = scmp.ne.s32.totalorder %s230, %s244
    %p246 = scmp.eq.s32.totalorder %s79, 0
    %p247 = por %p245, %p246
    %s249 = sadd.s32 %s248, 1
    %p252 = scmp.eq.s32.totalorder %s73, 1
    %p253 = scmp.ne.s32.totalorder %s248, %s250
    %p254 = scmp.eq.s32.totalorder %s73, 0
    %p255 = por %p253, %p254
    %p256 = scmp.ne.s32.totalorder %s248, %s250
    %p257 = scmp.eq.s32.totalorder %s78, 1
    %p258 = por %p256, %p257
    %p259 = scmp.ne.s32.totalorder %s250, %s251
    %p260 = scmp.eq.s32.totalorder %s78, 0
    %p261 = por %p259, %p260
    %p262 = scmp.ne.s32.totalorder %s250, %s251
    %p263 = scmp.eq.s32.totalorder %s79, 1
    %p264 = por %p262, %p263
    %p266 = scmp.ne.s32.totalorder %s251, %s265
    %p267 = scmp.eq.s32.totalorder %s79, 0
    %p268 = por %p266, %p267
    %s270 = sadd.s32 %s269, 1
    %p273 = scmp.eq.s32.totalorder %s73, 1
    %p274 = scmp.ne.s32.totalorder %s269, %s271
    %p275 = scmp.eq.s32.totalorder %s73, 0
    %p276 = por %p274, %p275
    %p277 = scmp.ne.s32.totalorder %s269, %s271
    %p278 = scmp.eq.s32.totalorder %s78, 1
    %p279 = por %p277, %p278
    %p280 = scmp.ne.s32.totalorder %s271, %s272
    %p281 = scmp.eq.s32.totalorder %s78, 0
    %p282 = por %p280, %p281
    %p283 = scmp.ne.s32.totalorder %s271, %s272
    %p284 = scmp.eq.s32.totalorder %s79, 1
    %p285 = por %p283, %p284
    %p287 = scmp.ne.s32.totalorder %s272, %s286
    %p288 = scmp.eq.s32.totalorder %s79, 0
    %p289 = por %p287, %p288
    %s291 = sadd.s32 %s290, 1
    %p294 = scmp.eq.s32.totalorder %s73, 1
    %p295 = scmp.ne.s32.totalorder %s290, %s292
    %p296 = scmp.eq.s32.totalorder %s73, 0
    %p297 = por %p295, %p296
    %p298 = scmp.ne.s32.totalorder %s290, %s292
    %p299 = scmp.eq.s32.totalorder %s78, 1
    %p300 = por %p298, %p299
    %p301 = scmp.ne.s32.totalorder %s292, %s293
    %p302 = scmp.eq.s32.totalorder %s78, 0
    %p303 = por %p301, %p302
    %p304 = scmp.ne.s32.totalorder %s292, %s293
    %p305 = scmp.eq.s32.totalorder %s79, 1
    %p306 = por %p304, %p305
    %p308 = scmp.ne.s32.totalorder %s293, %s307
    %p309 = scmp.eq.s32.totalorder %s79, 0
    %p310 = por %p308, %p309
    %s312 = sadd.s32 %s311, 1
    %p315 = scmp.eq.s32.totalorder %s73, 1
    %p316 = scmp.ne.s32.totalorder %s311, %s313
    %p317 = scmp.eq.s32.totalorder %s73, 0
    %p318 = por %p316, %p317
    %p319 = scmp.ne.s32.totalorder %s311, %s313
    %p320 = scmp.eq.s32.totalorder %s78, 1
    %p321 = por %p319, %p320
    %p322 = scmp.ne.s32.totalorder %s313, %s314
    %p323 = scmp.eq.s32.totalorder %s78, 0
    %p324 = por %p322, %p323
    %p325 = scmp.ne.s32.totalorder %s313, %s314
    %p326 = scmp.eq.s32.totalorder %s79, 1
    %p327 = por %p325, %p326
    %p329 = scmp.ne.s32.totalorder %s314, %s328
    %p330 = scmp.eq.s32.totalorder %s79, 0
    %p331 = por %p329, %p330
    %s333 = sadd.s32 %s332, 1
    %p336 = scmp.eq.s32.totalorder %s73, 1
    %p337 = scmp.ne.s32.totalorder %s332, %s334
    %p338 = scmp.eq.s32.totalorder %s73, 0
    %p339 = por %p337, %p338
    %p340 = scmp.ne.s32.totalorder %s332, %s334
    %p341 = scmp.eq.s32.totalorder %s78, 1
    %p342 = por %p340, %p341
    %p343 = scmp.ne.s32.totalorder %s334, %s335
    %p344 = scmp.eq.s32.totalorder %s78, 0
    %p345 = por %p343, %p344
    %p346 = scmp.ne.s32.totalorder %s334, %s335
    %p347 = scmp.eq.s32.totalorder %s79, 1
    %p348 = por %p346, %p347
    %p350 = scmp.ne.s32.totalorder %s335, %s349
    %p351 = scmp.eq.s32.totalorder %s79, 0
    %p352 = por %p350, %p351
    %s354 = sadd.s32 %s353, 1
    %p357 = scmp.eq.s32.totalorder %s73, 1
    %p358 = scmp.ne.s32.totalorder %s353, %s355
    %p359 = scmp.eq.s32.totalorder %s73, 0
    %p360 = por %p358, %p359
    %p361 = scmp.ne.s32.totalorder %s353, %s355
    %p362 = scmp.eq.s32.totalorder %s78, 1
    %p363 = por %p361, %p362
    %p364 = scmp.ne.s32.totalorder %s355, %s356
    %p365 = scmp.eq.s32.totalorder %s78, 0
    %p366 = por %p364, %p365
    %p367 = scmp.ne.s32.totalorder %s355, %s356
    %p368 = scmp.eq.s32.totalorder %s79, 1
    %p369 = por %p367, %p368
    %p371 = scmp.ne.s32.totalorder %s356, %s370
    %p372 = scmp.eq.s32.totalorder %s79, 0
    %p373 = por %p371, %p372
    %s375 = sadd.s32 %s374, 1
    %p378 = scmp.eq.s32.totalorder %s73, 1
    %p379 = scmp.ne.s32.totalorder %s374, %s376
    %p380 = scmp.eq.s32.totalorder %s73, 0
    %p381 = por %p379, %p380
    %p382 = scmp.ne.s32.totalorder %s374, %s376
    %p383 = scmp.eq.s32.totalorder %s78, 1
    %p384 = por %p382, %p383
    %p385 = scmp.ne.s32.totalorder %s376, %s377
    %p386 = scmp.eq.s32.totalorder %s78, 0
    %p387 = por %p385, %p386
    %p388 = scmp.ne.s32.totalorder %s376, %s377
    %p389 = scmp.eq.s32.totalorder %s79, 1
    %p390 = por %p388, %p389
    %p392 = scmp.ne.s32.totalorder %s377, %s391
    %p393 = scmp.eq.s32.totalorder %s79, 0
    %p394 = por %p392, %p393
    %s396 = sadd.s32 %s395, 1
    %p399 = scmp.eq.s32.totalorder %s73, 1
    %p400 = scmp.ne.s32.totalorder %s395, %s397
    %p401 = scmp.eq.s32.totalorder %s73, 0
    %p402 = por %p400, %p401
    %p403 = scmp.ne.s32.totalorder %s395, %s397
    %p404 = scmp.eq.s32.totalorder %s78, 1
    %p405 = por %p403, %p404
    %p406 = scmp.ne.s32.totalorder %s397, %s398
    %p407 = scmp.eq.s32.totalorder %s78, 0
    %p408 = por %p406, %p407
    %p409 = scmp.ne.s32.totalorder %s397, %s398
    %p410 = scmp.eq.s32.totalorder %s79, 1
    %p411 = por %p409, %p410
    %p413 = scmp.ne.s32.totalorder %s398, %s412
    %p414 = scmp.eq.s32.totalorder %s79, 0
    %p415 = por %p413, %p414
    %s417 = sadd.s32 %s416, 1
    %p420 = scmp.eq.s32.totalorder %s73, 1
    %p421 = scmp.ne.s32.totalorder %s416, %s418
    %p422 = scmp.eq.s32.totalorder %s73, 0
    %p423 = por %p421, %p422
    %p424 = scmp.ne.s32.totalorder %s416, %s418
    %p425 = scmp.eq.s32.totalorder %s78, 1
    %p426 = por %p424, %p425
    %p427 = scmp.ne.s32.totalorder %s418, %s419
    %p428 = scmp.eq.s32.totalorder %s78, 0
    %p429 = por %p427, %p428
    %p430 = scmp.ne.s32.totalorder %s418, %s419
    %p431 = scmp.eq.s32.totalorder %s79, 1
    %p432 = por %p430, %p431
    %p434 = scmp.ne.s32.totalorder %s419, %s433
    %p435 = scmp.eq.s32.totalorder %s79, 0
    %p436 = por %p434, %p435
    %s438 = sadd.s32 %s437, 1
    %p441 = scmp.eq.s32.totalorder %s73, 1
    %p442 = scmp.ne.s32.totalorder %s437, %s439
    %p443 = scmp.eq.s32.totalorder %s73, 0
    %p444 = por %p442, %p443
    %p445 = scmp.ne.s32.totalorder %s437, %s439
    %p446 = scmp.eq.s32.totalorder %s78, 1
    %p447 = por %p445, %p446
    %p448 = scmp.ne.s32.totalorder %s439, %s440
    %p449 = scmp.eq.s32.totalorder %s78, 0
    %p450 = por %p448, %p449
    %p451 = scmp.ne.s32.totalorder %s439, %s440
    %p452 = scmp.eq.s32.totalorder %s79, 1
    %p453 = por %p451, %p452
    %p455 = scmp.ne.s32.totalorder %s440, %s454
    %p456 = scmp.eq.s32.totalorder %s79, 0
    %p457 = por %p455, %p456
    %s459 = sadd.s32 %s458, 1
    %p462 = scmp.eq.s32.totalorder %s73, 1
    %p463 = scmp.ne.s32.totalorder %s458, %s460
    %p464 = scmp.eq.s32.totalorder %s73, 0
    %p465 = por %p463, %p464
    %p466 = scmp.ne.s32.totalorder %s458, %s460
    %p467 = scmp.eq.s32.totalorder %s78, 1
    %p468 = por %p466, %p467
    %p469 = scmp.ne.s32.totalorder %s460, %s461
    %p470 = scmp.eq.s32.totalorder %s78, 0
    %p471 = por %p469, %p470
    %p472 = scmp.ne.s32.totalorder %s460, %s461
    %p473 = scmp.eq.s32.totalorder %s79, 1
    %p474 = por %p472, %p473
    %p476 = scmp.ne.s32.totalorder %s461, %s475
    %p477 = scmp.eq.s32.totalorder %s79, 0
    %p478 = por %p476, %p477
    %s480 = sadd.s32 %s479, 1
    %p483 = scmp.eq.s32.totalorder %s73, 1
    %p484 = scmp.ne.s32.totalorder %s479, %s481
    %p485 = scmp.eq.s32.totalorder %s73, 0
    %p486 = por %p484, %p485
    %p487 = scmp.ne.s32.totalorder %s479, %s481
    %p488 = scmp.eq.s32.totalorder %s78, 1
    %p489 = por %p487, %p488
    %p490 = scmp.ne.s32.totalorder %s481, %s482
    %p491 = scmp.eq.s32.totalorder %s78, 0
    %p492 = por %p490, %p491
    %p493 = scmp.ne.s32.totalorder %s481, %s482
    %p494 = scmp.eq.s32.totalorder %s79, 1
    %p495 = por %p493, %p494
    %p497 = scmp.ne.s32.totalorder %s482, %s496
    %p498 = scmp.eq.s32.totalorder %s79, 0
    %p499 = por %p497, %p498
    %s501 = sadd.s32 %s500, 1
    %p504 = scmp.eq.s32.totalorder %s73, 1
    %p505 = scmp.ne.s32.totalorder %s500, %s502
    %p506 = scmp.eq.s32.totalorder %s73, 0
    %p507 = por %p505, %p506
    %p508 = scmp.ne.s32.totalorder %s500, %s502
    %p509 = scmp.eq.s32.totalorder %s78, 1
    %p510 = por %p508, %p509
    %p511 = scmp.ne.s32.totalorder %s502, %s503
    %p512 = scmp.eq.s32.totalorder %s78, 0
    %p513 = por %p511, %p512
    %p514 = scmp.ne.s32.totalorder %s502, %s503
    %p515 = scmp.eq.s32.totalorder %s79, 1
    %p516 = por %p514, %p515
    %p518 = scmp.ne.s32.totalorder %s503, %s517
    %p519 = scmp.eq.s32.totalorder %s79, 0
    %p520 = por %p518, %p519
    %s522 = sadd.s32 %s521, 1
    %p525 = scmp.eq.s32.totalorder %s73, 1
    %p526 = scmp.ne.s32.totalorder %s521, %s523
    %p527 = scmp.eq.s32.totalorder %s73, 0
    %p528 = por %p526, %p527
    %p529 = scmp.ne.s32.totalorder %s521, %s523
    %p530 = scmp.eq.s32.totalorder %s78, 1
    %p531 = por %p529, %p530
    %p532 = scmp.ne.s32.totalorder %s523, %s524
    %p533 = scmp.eq.s32.totalorder %s78, 0
    %p534 = por %p532, %p533
    %p535 = scmp.ne.s32.totalorder %s523, %s524
    %p536 = scmp.eq.s32.totalorder %s79, 1
    %p537 = por %p535, %p536
    %p539 = scmp.ne.s32.totalorder %s524, %s538
    %p540 = scmp.eq.s32.totalorder %s79, 0
    %p541 = por %p539, %p540
    %s543 = sadd.s32 %s542, 1
    %p546 = scmp.eq.s32.totalorder %s73, 1
    %p547 = scmp.ne.s32.totalorder %s542, %s544
    %p548 = scmp.eq.s32.totalorder %s73, 0
    %p549 = por %p547, %p548
    %p550 = scmp.ne.s32.totalorder %s542, %s544
    %p551 = scmp.eq.s32.totalorder %s78, 1
    %p552 = por %p550, %p551
    %p553 = scmp.ne.s32.totalorder %s544, %s545
    %p554 = scmp.eq.s32.totalorder %s78, 0
    %p555 = por %p553, %p554
    %p556 = scmp.ne.s32.totalorder %s544, %s545
    %p557 = scmp.eq.s32.totalorder %s79, 1
    %p558 = por %p556, %p557
    %p560 = scmp.ne.s32.totalorder %s545, %s559
    %p561 = scmp.eq.s32.totalorder %s79, 0
    %p562 = por %p560, %p561
    %s564 = sadd.s32 %s563, 1
    %p567 = scmp.eq.s32.totalorder %s73, 1
    %p568 = scmp.ne.s32.totalorder %s563, %s565
    %p569 = scmp.eq.s32.totalorder %s73, 0
    %p570 = por %p568, %p569
    %p571 = scmp.ne.s32.totalorder %s563, %s565
    %p572 = scmp.eq.s32.totalorder %s78, 1
    %p573 = por %p571, %p572
    %p574 = scmp.ne.s32.totalorder %s565, %s566
    %p575 = scmp.eq.s32.totalorder %s78, 0
    %p576 = por %p574, %p575
    %p577 = scmp.ne.s32.totalorder %s565, %s566
    %p578 = scmp.eq.s32.totalorder %s79, 1
    %p579 = por %p577, %p578
    %p581 = scmp.ne.s32.totalorder %s566, %s580
    %p582 = scmp.eq.s32.totalorder %s79, 0
    %p583 = por %p581, %p582
    %s585 = sadd.s32 %s584, 1
    %p588 = scmp.eq.s32.totalorder %s73, 1
    %p589 = scmp.ne.s32.totalorder %s584, %s586
    %p590 = scmp.eq.s32.totalorder %s73, 0
    %p591 = por %p589, %p590
    %p592 = scmp.ne.s32.totalorder %s584, %s586
    %p593 = scmp.eq.s32.totalorder %s78, 1
    %p594 = por %p592, %p593
    %p595 = scmp.ne.s32.totalorder %s586, %s587
    %p596 = scmp.eq.s32.totalorder %s78, 0
    %p597 = por %p595, %p596
    %p598 = scmp.ne.s32.totalorder %s586, %s587
    %p599 = scmp.eq.s32.totalorder %s79, 1
    %p600 = por %p598, %p599
    %p602 = scmp.ne.s32.totalorder %s587, %s601
    %p603 = scmp.eq.s32.totalorder %s79, 0
    %p604 = por %p602, %p603
    %s606 = sadd.s32 %s605, 1
    %p609 = scmp.eq.s32.totalorder %s73, 1
    %p610 = scmp.ne.s32.totalorder %s605, %s607
    %p611 = scmp.eq.s32.totalorder %s73, 0
    %p612 = por %p610, %p611
    %p613 = scmp.ne.s32.totalorder %s605, %s607
    %p614 = scmp.eq.s32.totalorder %s78, 1
    %p615 = por %p613, %p614
    %p616 = scmp.ne.s32.totalorder %s607, %s608
    %p617 = scmp.eq.s32.totalorder %s78, 0
    %p618 = por %p616, %p617
    %p619 = scmp.ne.s32.totalorder %s607, %s608
    %p620 = scmp.eq.s32.totalorder %s79, 1
    %p621 = por %p619, %p620
    %p623 = scmp.ne.s32.totalorder %s608, %s622
    %p624 = scmp.eq.s32.totalorder %s79, 0
    %p625 = por %p623, %p624
    %s627 = sadd.s32 %s626, 1
    %p630 = scmp.eq.s32.totalorder %s73, 1
    %p631 = scmp.ne.s32.totalorder %s626, %s628
    %p632 = scmp.eq.s32.totalorder %s73, 0
    %p633 = por %p631, %p632
    %p634 = scmp.ne.s32.totalorder %s626, %s628
    %p635 = scmp.eq.s32.totalorder %s78, 1
    %p636 = por %p634, %p635
    %p637 = scmp.ne.s32.totalorder %s628, %s629
    %p638 = scmp.eq.s32.totalorder %s78, 0
    %p639 = por %p637, %p638
    %p640 = scmp.ne.s32.totalorder %s628, %s629
    %p641 = scmp.eq.s32.totalorder %s79, 1
    %p642 = por %p640, %p641
    %p644 = scmp.ne.s32.totalorder %s629, %s643
    %p645 = scmp.eq.s32.totalorder %s79, 0
    %p646 = por %p644, %p645
    %s648 = sadd.s32 %s647, 1
    %p651 = scmp.eq.s32.totalorder %s73, 1
    %p652 = scmp.ne.s32.totalorder %s647, %s649
    %p653 = scmp.eq.s32.totalorder %s73, 0
    %p654 = por %p652, %p653
    %p655 = scmp.ne.s32.totalorder %s647, %s649
    %p656 = scmp.eq.s32.totalorder %s78, 1
    %p657 = por %p655, %p656
    %p658 = scmp.ne.s32.totalorder %s649, %s650
    %p659 = scmp.eq.s32.totalorder %s78, 0
    %p660 = por %p658, %p659
    %p661 = scmp.ne.s32.totalorder %s649, %s650
    %p662 = scmp.eq.s32.totalorder %s79, 1
    %p663 = por %p661, %p662
    %p665 = scmp.ne.s32.totalorder %s650, %s664
    %p666 = scmp.eq.s32.totalorder %s79, 0
    %p667 = por %p665, %p666
    %s669 = sadd.s32 %s668, 1
    %p672 = scmp.eq.s32.totalorder %s73, 1
    %p673 = scmp.ne.s32.totalorder %s668, %s670
    %p674 = scmp.eq.s32.totalorder %s73, 0
    %p675 = por %p673, %p674
    %p676 = scmp.ne.s32.totalorder %s668, %s670
    %p677 = scmp.eq.s32.totalorder %s78, 1
    %p678 = por %p676, %p677
    %p679 = scmp.ne.s32.totalorder %s670, %s671
    %p680 = scmp.eq.s32.totalorder %s78, 0
    %p681 = por %p679, %p680
    %p682 = scmp.ne.s32.totalorder %s670, %s671
    %p683 = scmp.eq.s32.totalorder %s79, 1
    %p684 = por %p682, %p683
    %p686 = scmp.ne.s32.totalorder %s671, %s685
    %p687 = scmp.eq.s32.totalorder %s79, 0
    %p688 = por %p686, %p687
    %s690 = sadd.s32 %s689, 1
    %p693 = scmp.eq.s32.totalorder %s73, 1
    %p694 = scmp.ne.s32.totalorder %s689, %s691
    %p695 = scmp.eq.s32.totalorder %s73, 0
    %p696 = por %p694, %p695
    %p697 = scmp.ne.s32.totalorder %s689, %s691
    %p698 = scmp.eq.s32.totalorder %s78, 1
    %p699 = por %p697, %p698
    %p700 = scmp.ne.s32.totalorder %s691, %s692
    %p701 = scmp.eq.s32.totalorder %s78, 0
    %p702 = por %p700, %p701
    %p703 = scmp.ne.s32.totalorder %s691, %s692
    %p704 = scmp.eq.s32.totalorder %s79, 1
    %p705 = por %p703, %p704
    %p707 = scmp.ne.s32.totalorder %s692, %s706
    %p708 = scmp.eq.s32.totalorder %s79, 0
    %p709 = por %p707, %p708
    %s711 = sadd.s32 %s710, 1
    %p714 = scmp.eq.s32.totalorder %s73, 1
    %p715 = scmp.ne.s32.totalorder %s710, %s712
    %p716 = scmp.eq.s32.totalorder %s73, 0
    %p717 = por %p715, %p716
    %p718 = scmp.ne.s32.totalorder %s710, %s712
    %p719 = scmp.eq.s32.totalorder %s78, 1
    %p720 = por %p718, %p719
    %p721 = scmp.ne.s32.totalorder %s712, %s713
    %p722 = scmp.eq.s32.totalorder %s78, 0
    %p723 = por %p721, %p722
    %p724 = scmp.ne.s32.totalorder %s712, %s713
    %p725 = scmp.eq.s32.totalorder %s79, 1
    %p726 = por %p724, %p725
    %p728 = scmp.ne.s32.totalorder %s713, %s727
    %p729 = scmp.eq.s32.totalorder %s79, 0
    %p730 = por %p728, %p729
    %s732 = sadd.s32 %s731, 1
    %p735 = scmp.eq.s32.totalorder %s73, 1
    %p736 = scmp.ne.s32.totalorder %s731, %s733
    %p737 = scmp.eq.s32.totalorder %s73, 0
    %p738 = por %p736, %p737
    %p739 = scmp.ne.s32.totalorder %s731, %s733
    %p740 = scmp.eq.s32.totalorder %s78, 1
    %p741 = por %p739, %p740
    %p742 = scmp.ne.s32.totalorder %s733, %s734
    %p743 = scmp.eq.s32.totalorder %s78, 0
    %p744 = por %p742, %p743
    %p745 = scmp.ne.s32.totalorder %s733, %s734
    %p746 = scmp.eq.s32.totalorder %s79, 1
    %p747 = por %p745, %p746
    %p749 = scmp.ne.s32.totalorder %s734, %s748
    %p750 = scmp.eq.s32.totalorder %s79, 0
    %p751 = por %p749, %p750
    %s753 = sadd.s32 %s752, 1
    %p756 = scmp.eq.s32.totalorder %s73, 1
    %p757 = scmp.ne.s32.totalorder %s752, %s754
    %p758 = scmp.eq.s32.totalorder %s73, 0
    %p759 = por %p757, %p758
    %p760 = scmp.ne.s32.totalorder %s752, %s754
    %p761 = scmp.eq.s32.totalorder %s78, 1
    %p762 = por %p760, %p761
    %p763 = scmp.ne.s32.totalorder %s754, %s755
    %p764 = scmp.eq.s32.totalorder %s78, 0
    %p765 = por %p763, %p764
    %p766 = scmp.ne.s32.totalorder %s754, %s755
    %p767 = scmp.eq.s32.totalorder %s79, 1
    %p768 = por %p766, %p767
    %p770 = scmp.ne.s32.totalorder %s755, %s769
    %p771 = scmp.eq.s32.totalorder %s79, 0
    %p772 = por %p770, %p771
    %s774 = sadd.s32 %s773, 1
    %p777 = scmp.eq.s32.totalorder %s73, 1
    %p778 = scmp.ne.s32.totalorder %s773, %s775
    %p779 = scmp.eq.s32.totalorder %s73, 0
    %p780 = por %p778, %p779
    %p781 = scmp.ne.s32.totalorder %s773, %s775
    %p782 = scmp.eq.s32.totalorder %s78, 1
    %p783 = por %p781, %p782
    %p784 = scmp.ne.s32.totalorder %s775, %s776
    %p785 = scmp.eq.s32.totalorder %s78, 0
    %p786 = por %p784, %p785
    %p787 = scmp.ne.s32.totalorder %s775, %s776
    %p788 = scmp.eq.s32.totalorder %s79, 1
    %p789 = por %p787, %p788
    %p791 = scmp.ne.s32.totalorder %s776, %s790
    %p792 = scmp.eq.s32.totalorder %s79, 0
    %p793 = por %p791, %p792
    %s794 = ssub.s32 %s73, %s80
    %p795 = scmp.eq.s32.totalorder %s794, 0
    %s797 = sadd.s32 %s796, 1
    %s798 = scalar_select %p795, %s796, %s797
    %p801 = pneg %p795
    %p802 = scmp.eq.s32.totalorder %s73, 1
    %p803 = por %p801, %p802
    %p804 = scmp.ne.s32.totalorder %s796, %s799
    %p805 = scmp.eq.s32.totalorder %s73, 0
    %p806 = por %p804, %p805
    %p807 = scmp.ne.s32.totalorder %s796, %s799
    %p808 = scmp.eq.s32.totalorder %s78, 1
    %p809 = por %p807, %p808
    %p810 = scmp.ne.s32.totalorder %s799, %s800
    %p811 = scmp.eq.s32.totalorder %s78, 0
    %p812 = por %p810, %p811
    %p813 = scmp.ne.s32.totalorder %s799, %s800
    %p814 = scmp.eq.s32.totalorder %s79, 1
    %p815 = por %p813, %p814
    %p817 = scmp.ne.s32.totalorder %s800, %s816
    %p818 = scmp.eq.s32.totalorder %s79, 0
    %p819 = por %p817, %p818
    %p820 = scmp.le.s32.totalorder 1, %s73
    %p821 = scmp.lt.s32.totalorder %s73, 3
    %p822 = pnand %p820, %p821
    %p823 = pneg %p822
    // Predicated region
    $region9: #{svanet_forward.1} parent=5 // pred_check
      _
    $region10: #{svanet_forward.1} parent=5 // pred_check_branch
      %825 = sbr.rel (%p822) target = $region12
    $region11: #{svanet_forward.1} parent=5 // pred_region
      %s826 = ssub.s32 %s73, 1
      // Predicated region
      $region13: #{svanet_forward.1} parent=11 // pred_check
        %p827 = pneg %p198
      $region14: #{svanet_forward.1} parent=11 // pred_check_branch
        %829 = sbr.rel (%p827) target = $region16
      $region15: #{svanet_forward.1} parent=11 // pred_region
        _
      $region16: #{svanet_forward.1} parent=11 // pred_fallthru
        _
      // Predicated region
      $region17: #{svanet_forward.1} parent=11 // pred_check
        %p830 = pneg %p219
      $region18: #{svanet_forward.1} parent=11 // pred_check_branch
        %832 = sbr.rel (%p830) target = $region20
      $region19: #{svanet_forward.1} parent=11 // pred_region
        _
      $region20: #{svanet_forward.1} parent=11 // pred_fallthru
        _
      // Predicated region
      $region21: #{svanet_forward.1} parent=11 // pred_check
        %p833 = pneg %p240
      $region22: #{svanet_forward.1} parent=11 // pred_check_branch
        %835 = sbr.rel (%p833) target = $region24
      $region23: #{svanet_forward.1} parent=11 // pred_region
        _
      $region24: #{svanet_forward.1} parent=11 // pred_fallthru
        _
      // Predicated region
      $region25: #{svanet_forward.1} parent=11 // pred_check
        %p836 = pneg %p261
      $region26: #{svanet_forward.1} parent=11 // pred_check_branch
        %838 = sbr.rel (%p836) target = $region28
      $region27: #{svanet_forward.1} parent=11 // pred_region
        _
      $region28: #{svanet_forward.1} parent=11 // pred_fallthru
        _
      // Predicated region
      $region29: #{svanet_forward.1} parent=11 // pred_check
        %p839 = pneg %p282
      $region30: #{svanet_forward.1} parent=11 // pred_check_branch
        %841 = sbr.rel (%p839) target = $region32
      $region31: #{svanet_forward.1} parent=11 // pred_region
        _
      $region32: #{svanet_forward.1} parent=11 // pred_fallthru
        _
      // Predicated region
      $region33: #{svanet_forward.1} parent=11 // pred_check
        %p842 = pneg %p303
      $region34: #{svanet_forward.1} parent=11 // pred_check_branch
        %844 = sbr.rel (%p842) target = $region36
      $region35: #{svanet_forward.1} parent=11 // pred_region
        _
      $region36: #{svanet_forward.1} parent=11 // pred_fallthru
        _
      // Predicated region
      $region37: #{svanet_forward.1} parent=11 // pred_check
        %p845 = pneg %p324
      $region38: #{svanet_forward.1} parent=11 // pred_check_branch
        %847 = sbr.rel (%p845) target = $region40
      $region39: #{svanet_forward.1} parent=11 // pred_region
        _
      $region40: #{svanet_forward.1} parent=11 // pred_fallthru
        _
      // Predicated region
      $region41: #{svanet_forward.1} parent=11 // pred_check
        %p848 = pneg %p345
      $region42: #{svanet_forward.1} parent=11 // pred_check_branch
        %850 = sbr.rel (%p848) target = $region44
      $region43: #{svanet_forward.1} parent=11 // pred_region
        _
      $region44: #{svanet_forward.1} parent=11 // pred_fallthru
        _
      // Predicated region
      $region45: #{svanet_forward.1} parent=11 // pred_check
        %p851 = pneg %p366
      $region46: #{svanet_forward.1} parent=11 // pred_check_branch
        %853 = sbr.rel (%p851) target = $region48
      $region47: #{svanet_forward.1} parent=11 // pred_region
        _
      $region48: #{svanet_forward.1} parent=11 // pred_fallthru
        _
      // Predicated region
      $region49: #{svanet_forward.1} parent=11 // pred_check
        %p854 = pneg %p387
      $region50: #{svanet_forward.1} parent=11 // pred_check_branch
        %856 = sbr.rel (%p854) target = $region52
      $region51: #{svanet_forward.1} parent=11 // pred_region
        _
      $region52: #{svanet_forward.1} parent=11 // pred_fallthru
        _
      // Predicated region
      $region53: #{svanet_forward.1} parent=11 // pred_check
        %p857 = pneg %p408
      $region54: #{svanet_forward.1} parent=11 // pred_check_branch
        %859 = sbr.rel (%p857) target = $region56
      $region55: #{svanet_forward.1} parent=11 // pred_region
        _
      $region56: #{svanet_forward.1} parent=11 // pred_fallthru
        _
      // Predicated region
      $region57: #{svanet_forward.1} parent=11 // pred_check
        %p860 = pneg %p429
      $region58: #{svanet_forward.1} parent=11 // pred_check_branch
        %862 = sbr.rel (%p860) target = $region60
      $region59: #{svanet_forward.1} parent=11 // pred_region
        _
      $region60: #{svanet_forward.1} parent=11 // pred_fallthru
        _
      // Predicated region
      $region61: #{svanet_forward.1} parent=11 // pred_check
        %p863 = pneg %p450
      $region62: #{svanet_forward.1} parent=11 // pred_check_branch
        %865 = sbr.rel (%p863) target = $region64
      $region63: #{svanet_forward.1} parent=11 // pred_region
        _
      $region64: #{svanet_forward.1} parent=11 // pred_fallthru
        _
      // Predicated region
      $region65: #{svanet_forward.1} parent=11 // pred_check
        %p866 = pneg %p471
      $region66: #{svanet_forward.1} parent=11 // pred_check_branch
        %868 = sbr.rel (%p866) target = $region68
      $region67: #{svanet_forward.1} parent=11 // pred_region
        _
      $region68: #{svanet_forward.1} parent=11 // pred_fallthru
        _
      // Predicated region
      $region69: #{svanet_forward.1} parent=11 // pred_check
        %p869 = pneg %p492
      $region70: #{svanet_forward.1} parent=11 // pred_check_branch
        %871 = sbr.rel (%p869) target = $region72
      $region71: #{svanet_forward.1} parent=11 // pred_region
        _
      $region72: #{svanet_forward.1} parent=11 // pred_fallthru
        _
      // Predicated region
      $region73: #{svanet_forward.1} parent=11 // pred_check
        %p872 = pneg %p513
      $region74: #{svanet_forward.1} parent=11 // pred_check_branch
        %874 = sbr.rel (%p872) target = $region76
      $region75: #{svanet_forward.1} parent=11 // pred_region
        _
      $region76: #{svanet_forward.1} parent=11 // pred_fallthru
        _
      // Predicated region
      $region77: #{svanet_forward.1} parent=11 // pred_check
        %p875 = pneg %p534
      $region78: #{svanet_forward.1} parent=11 // pred_check_branch
        %877 = sbr.rel (%p875) target = $region80
      $region79: #{svanet_forward.1} parent=11 // pred_region
        _
      $region80: #{svanet_forward.1} parent=11 // pred_fallthru
        _
      // Predicated region
      $region81: #{svanet_forward.1} parent=11 // pred_check
        %p878 = pneg %p555
      $region82: #{svanet_forward.1} parent=11 // pred_check_branch
        %880 = sbr.rel (%p878) target = $region84
      $region83: #{svanet_forward.1} parent=11 // pred_region
        _
      $region84: #{svanet_forward.1} parent=11 // pred_fallthru
        _
      // Predicated region
      $region85: #{svanet_forward.1} parent=11 // pred_check
        %p881 = pneg %p576
      $region86: #{svanet_forward.1} parent=11 // pred_check_branch
        %883 = sbr.rel (%p881) target = $region88
      $region87: #{svanet_forward.1} parent=11 // pred_region
        _
      $region88: #{svanet_forward.1} parent=11 // pred_fallthru
        _
      // Predicated region
      $region89: #{svanet_forward.1} parent=11 // pred_check
        %p884 = pneg %p597
      $region90: #{svanet_forward.1} parent=11 // pred_check_branch
        %886 = sbr.rel (%p884) target = $region92
      $region91: #{svanet_forward.1} parent=11 // pred_region
        _
      $region92: #{svanet_forward.1} parent=11 // pred_fallthru
        _
      // Predicated region
      $region93: #{svanet_forward.1} parent=11 // pred_check
        %p887 = pneg %p618
      $region94: #{svanet_forward.1} parent=11 // pred_check_branch
        %889 = sbr.rel (%p887) target = $region96
      $region95: #{svanet_forward.1} parent=11 // pred_region
        _
      $region96: #{svanet_forward.1} parent=11 // pred_fallthru
        _
      // Predicated region
      $region97: #{svanet_forward.1} parent=11 // pred_check
        %p890 = pneg %p639
      $region98: #{svanet_forward.1} parent=11 // pred_check_branch
        %892 = sbr.rel (%p890) target = $region100
      $region99: #{svanet_forward.1} parent=11 // pred_region
        _
      $region100: #{svanet_forward.1} parent=11 // pred_fallthru
        _
      // Predicated region
      $region101: #{svanet_forward.1} parent=11 // pred_check
        %p893 = pneg %p660
      $region102: #{svanet_forward.1} parent=11 // pred_check_branch
        %895 = sbr.rel (%p893) target = $region104
      $region103: #{svanet_forward.1} parent=11 // pred_region
        _
      $region104: #{svanet_forward.1} parent=11 // pred_fallthru
        _
      // Predicated region
      $region105: #{svanet_forward.1} parent=11 // pred_check
        %p896 = pneg %p681
      $region106: #{svanet_forward.1} parent=11 // pred_check_branch
        %898 = sbr.rel (%p896) target = $region108
      $region107: #{svanet_forward.1} parent=11 // pred_region
        _
      $region108: #{svanet_forward.1} parent=11 // pred_fallthru
        _
      // Predicated region
      $region109: #{svanet_forward.1} parent=11 // pred_check
        %p899 = pneg %p702
      $region110: #{svanet_forward.1} parent=11 // pred_check_branch
        %901 = sbr.rel (%p899) target = $region112
      $region111: #{svanet_forward.1} parent=11 // pred_region
        _
      $region112: #{svanet_forward.1} parent=11 // pred_fallthru
        _
      // Predicated region
      $region113: #{svanet_forward.1} parent=11 // pred_check
        %p902 = pneg %p723
      $region114: #{svanet_forward.1} parent=11 // pred_check_branch
        %904 = sbr.rel (%p902) target = $region116
      $region115: #{svanet_forward.1} parent=11 // pred_region
        _
      $region116: #{svanet_forward.1} parent=11 // pred_fallthru
        _
      // Predicated region
      $region117: #{svanet_forward.1} parent=11 // pred_check
        %p905 = pneg %p744
      $region118: #{svanet_forward.1} parent=11 // pred_check_branch
        %907 = sbr.rel (%p905) target = $region120
      $region119: #{svanet_forward.1} parent=11 // pred_region
        _
      $region120: #{svanet_forward.1} parent=11 // pred_fallthru
        _
      // Predicated region
      $region121: #{svanet_forward.1} parent=11 // pred_check
        %p908 = pneg %p765
      $region122: #{svanet_forward.1} parent=11 // pred_check_branch
        %910 = sbr.rel (%p908) target = $region124
      $region123: #{svanet_forward.1} parent=11 // pred_region
        _
      $region124: #{svanet_forward.1} parent=11 // pred_fallthru
        _
      // Predicated region
      $region125: #{svanet_forward.1} parent=11 // pred_check
        %p911 = pneg %p786
      $region126: #{svanet_forward.1} parent=11 // pred_check_branch
        %913 = sbr.rel (%p911) target = $region128
      $region127: #{svanet_forward.1} parent=11 // pred_region
        _
      $region128: #{svanet_forward.1} parent=11 // pred_fallthru
        _
    $region12: #{svanet_forward.1} parent=5 // pred_fallthru
      _
    %p914 = scmp.lt.s32.totalorder %s73, 2
    // Predicated region
    $region129: #{svanet_forward.1} parent=5 // pred_check
      %p915 = pneg %p914
    $region130: #{svanet_forward.1} parent=5 // pred_check_branch
      %917 = sbr.rel (%p915) target = $region132
    $region131: #{svanet_forward.1} parent=5 // pred_region
      // Predicated region
      $region133: #{svanet_forward.1} parent=131 // pred_check
        %p918 = pneg %p93
      $region134: #{svanet_forward.1} parent=131 // pred_check_branch
        %920 = sbr.rel (%p918) target = $region136
      $region135: #{svanet_forward.1} parent=131 // pred_region
        %p921 = scmp.lt.s32.totalorder %s73, 1
        %s922 = scalar_select %p921, %s73, 1
        %s923 = smul.addr %s922, 2
        %s924 = smul.addr %s923, 8
        %s925 = scalar_lea.vmem %s1, %s924
      $region136: #{svanet_forward.1} parent=131 // pred_fallthru
        _
      // Predicated region
      $region137: #{svanet_forward.1} parent=131 // pred_check
        %p926 = pneg %p119
      $region138: #{svanet_forward.1} parent=131 // pred_check_branch
        %928 = sbr.rel (%p926) target = $region140
      $region139: #{svanet_forward.1} parent=131 // pred_region
        %p929 = scmp.lt.s32.totalorder %s73, 1
        %s930 = scalar_select %p929, %s73, 1
        %s931 = smul.addr %s930, 8
        %s932 = scalar_lea.vmem %s3, %s931
      $region140: #{svanet_forward.1} parent=131 // pred_fallthru
        _
      // Predicated region
      $region141: #{svanet_forward.1} parent=131 // pred_check
        %p933 = pneg %p145
      $region142: #{svanet_forward.1} parent=131 // pred_check_branch
        %935 = sbr.rel (%p933) target = $region144
      $region143: #{svanet_forward.1} parent=131 // pred_region
        %p936 = scmp.lt.s32.totalorder %s73, 1
        %s937 = scalar_select %p936, %s73, 1
        %s938 = scalar_lea.vmem %s5, %s937
      $region144: #{svanet_forward.1} parent=131 // pred_fallthru
        _
      // Predicated region
      $region145: #{svanet_forward.1} parent=131 // pred_check
        %p939 = pneg %p171
      $region146: #{svanet_forward.1} parent=131 // pred_check_branch
        %941 = sbr.rel (%p939) target = $region148
      $region147: #{svanet_forward.1} parent=131 // pred_region
        %p942 = scmp.lt.s32.totalorder %s73, 1
        %s943 = scalar_select %p942, %s73, 1
        %s944 = scalar_lea.vmem %s7, %s943
      $region148: #{svanet_forward.1} parent=131 // pred_fallthru
        _
    $region132: #{svanet_forward.1} parent=5 // pred_fallthru
      _
    %p945 = scmp.le.s32.totalorder 1, %s73
    %p946 = scmp.lt.s32.totalorder %s73, 3
    %p947 = pnand %p945, %p946
    %p948 = pneg %p947
    // Predicated region
    $region149: #{svanet_forward.1} parent=5 // pred_check
      _
    $region150: #{svanet_forward.1} parent=5 // pred_check_branch
      %950 = sbr.rel (%p947) target = $region152
    $region151: #{svanet_forward.1} parent=5 // pred_region
      %s951 = ssub.s32 %s73, 1
      %p952 = scmp.lt.s32.totalorder %s78, 1
      %s953 = scalar_select %p952, %s78, 1
      %s954 = smul.addr %s953, 2
      %s955 = smul.addr %s954, 8
      %s956 = scalar_lea.vmem %s1, %s955
      %p957 = pneg %p99
      %p958 = pneg %p96
      %p959 = scmp.lt.s32.totalorder %s78, 1
      %s960 = scalar_select %p959, %s78, 1
      %s961 = smul.addr %s960, 8
      %s962 = scalar_lea.vmem %s3, %s961
      %p963 = pneg %p125
      %p964 = pneg %p122
      %p965 = scmp.lt.s32.totalorder %s78, 1
      %s966 = scalar_select %p965, %s78, 1
      %s967 = scalar_lea.vmem %s5, %s966
      %p968 = pneg %p151
      %p969 = pneg %p148
      %p970 = scmp.lt.s32.totalorder %s78, 1
      %s971 = scalar_select %p970, %s78, 1
      %s972 = scalar_lea.vmem %s7, %s971
      %p973 = pneg %p177
      %p974 = pneg %p174
      %p975 = pneg %p198
      %p976 = pneg %p195
      %p977 = pneg %p219
      %p978 = pneg %p216
      %p979 = pneg %p240
      %p980 = pneg %p237
      %p981 = pneg %p261
      %p982 = pneg %p258
      %p983 = pneg %p282
      %p984 = pneg %p279
      %p985 = pneg %p303
      %p986 = pneg %p300
      %p987 = pneg %p324
      %p988 = pneg %p321
      %p989 = pneg %p345
      %p990 = pneg %p342
      %p991 = pneg %p366
      %p992 = pneg %p363
      %p993 = pneg %p387
      %p994 = pneg %p384
      %p995 = pneg %p408
      %p996 = pneg %p405
      %p997 = pneg %p429
      %p998 = pneg %p426
      %p999 = pneg %p450
      %p1000 = pneg %p447
      %p1001 = pneg %p471
      %p1002 = pneg %p468
      %p1003 = pneg %p492
      %p1004 = pneg %p489
      %p1005 = pneg %p513
      %p1006 = pneg %p510
      %p1007 = pneg %p534
      %p1008 = pneg %p531
      %p1009 = pneg %p555
      %p1010 = pneg %p552
      %p1011 = pneg %p576
      %p1012 = pneg %p573
      %p1013 = pneg %p597
      %p1014 = pneg %p594
      %p1015 = pneg %p618
      %p1016 = pneg %p615
      %p1017 = pneg %p639
      %p1018 = pneg %p636
      %p1019 = pneg %p660
      %p1020 = pneg %p657
      %p1021 = pneg %p681
      %p1022 = pneg %p678
      %p1023 = pneg %p702
      %p1024 = pneg %p699
      %p1025 = pneg %p723
      %p1026 = pneg %p720
      %p1027 = pneg %p744
      %p1028 = pneg %p741
      %p1029 = pneg %p765
      %p1030 = pneg %p762
      %p1031 = pneg %p786
      %p1032 = pneg %p783
      %p1033 = pneg %p812
      %p1034 = pneg %p809
      %p1035 = scmp.lt.s32.totalorder %s78, 1
      %s1036 = scalar_select %p1035, %s78, 1
      %s1037 = smul.addr %s1036, 8
      %s1038 = scalar_lea.vmem %s67, %s1037
      %p1039 = scmp.lt.s32.totalorder %s78, 1
      %s1040 = scalar_select %p1039, %s78, 1
      %s1041 = smul.addr %s1040, 2
      %s1042 = smul.addr %s1041, 8
      %s1043 = scalar_lea.vmem %s1, %s1042
      %p1044 = scmp.lt.s32.totalorder %s78, 1
      %s1045 = scalar_select %p1044, %s78, 1
      %s1046 = smul.addr %s1045, 8
      %s1047 = scalar_lea.vmem %s3, %s1046
      %p1048 = scmp.lt.s32.totalorder %s78, 1
      %s1049 = scalar_select %p1048, %s78, 1
      %s1050 = scalar_lea.vmem %s5, %s1049
      %p1051 = scmp.lt.s32.totalorder %s78, 1
      %s1052 = scalar_select %p1051, %s78, 1
      %s1053 = scalar_lea.vmem %s7, %s1052
      %p1054 = scmp.lt.s32.totalorder %s78, 1
      %s1055 = scalar_select %p1054, %s78, 1
      %s1056 = smul.addr %s1055, 8
      %s1057 = scalar_lea.vmem %s67, %s1056
      %v1059 = vld [vmem:[%s1043] sm:$0xff]
      %v1060 = vld [vmem:[%s1043 + $0x8] sm:$0xff]
      %v1061 = vld [vmem:[%s13] sm:$0x1]
      %v1062 = vld [vmem:[%s15] sm:$0x1]
      %v1063 = vld [vmem:[%s17] sm:$0xf]
      %v1064 = vld [vmem:[%s17 + $0x4] sm:$0xf]
      %v1065 = vld [vmem:[%s17 + $0x8] sm:$0xf]
      %v1066 = vld [vmem:[%s17 + $0xc] sm:$0xf]
      %v1067 = vld [vmem:[%s17 + $0x10] sm:$0xf]
      %v1068 = vld [vmem:[%s17 + $0x14] sm:$0xf]
      %v1069 = vld [vmem:[%s19] sm:$0x1]
      %v1070 = vld [vmem:[%s21] sm:$0x1]
      %v1071 = vld [vmem:[%s23] sm:$0x1]
      %v1072 = vld [vmem:[%s25] sm:$0xf]
      %v1073 = vld [vmem:[%s25 + $0x4] sm:$0xf]
      %v1074 = vld [vmem:[%s25 + $0x8] sm:$0xf]
      %v1075 = vld [vmem:[%s25 + $0xc] sm:$0xf]
      %v1076 = vld [vmem:[%s27] sm:$0x1]
      %vm1077 = vcmask 392192
      %v1078 = vsel %vm1077, %v1059, 0.0
      %1079 = vadd.xlane.f32.xlu0 %v1078
      %v1080 = vpop.xlane.xlu0 %1079
      %v1081 = vsel %vm1077, %v1060, 0.0
      %1082 = vadd.xlane.f32.xlu0 %v1081
      %v1083 = vpop.xlane.xlu0 %1082
      %v1084 = vrcp.pop 48.0
      %v1085 = vmul.f32 %v1080, %v1084
      %v1086 = vmul.f32 %v1083, %v1084
      %v1087 = vsub.f32 %v1059, %v1085
      %v1088 = vsub.f32 %v1060, %v1086
      %v1089 = vmul.f32 %v1087, %v1087
      %v1090 = vmul.f32 %v1088, %v1088
      %v1091 = vsel %vm1077, %v1089, 0.0
      %1092 = vadd.xlane.f32.xlu0 %v1091
      %v1093 = vpop.xlane.xlu0 %1092
      %v1094 = vsel %vm1077, %v1090, 0.0
      %1095 = vadd.xlane.f32.xlu0 %v1094
      %v1096 = vpop.xlane.xlu0 %1095
      %v1097 = vmul.f32 %v1093, %v1084
      %v1098 = vmul.f32 %v1096, %v1084
      %v1099 = vadd.f32 %v1097, 1e-05
      %v1100 = vadd.f32 %v1098, 1e-05
      %v1101 = vrsqrt.pop %v1099
      %v1102 = vrsqrt.pop %v1100
      %v1103 = vmul.f32 %v1087, %v1101
      %v1104 = vmul.f32 %v1088, %v1102
      %v1106 = vlaneseq
      %v1107 = vshrl.u32 %v1106, 7
      %v1108 = vsub.s32 0, %v1107
      %v1109 = vrot.slane %v1061, %v1108
      %v1111 = vmul.f32 %v1103, %v1109
      %v1112 = vmul.f32 %v1104, %v1109
      %v1114 = vlaneseq
      %v1115 = vshrl.u32 %v1114, 7
      %v1116 = vsub.s32 0, %v1115
      %v1117 = vrot.slane %v1062, %v1116
      %v1119 = vadd.f32 %v1111, %v1117
      %v1120 = vadd.f32 %v1112, %v1117
      %v1121 = vpack.c.bf16 %v1120, %v1119
      %v1123 = vlaneseq
      %v1124 = vshrl.u32 %v1123, 7
      %v1125 = vsub.s32 0, %v1124
      %v1126 = vrot.slane %v1069, %v1125
      %v1134 = vunpack.c.l.b16 %v1063
      %v1135 = vunpack.c.l.b16 %v1064
      %v1136 = vunpack.c.l.b16 %v1065
      %v1137 = vunpack.c.l.b16 %v1066
      %v1138 = vunpack.c.l.b16 %v1067
      %v1139 = vunpack.c.l.b16 %v1068
      %v1140 = vpack.c.b16 %v1135, %v1134
      %v1141 = vpack.c.b16 %v1137, %v1136
      %v1142 = vpack.c.b16 %v1139, %v1138
      %v1147 = vsel %vm1077, %v1121, 0
      %1149 = vmatprep.subr.bf16.mxu0 0
      %1150 = vmatpush1.bf16.msra.mxu0 %v1140
      %1151 = vmatprep.subr.bf16.mxu0 0
      %1152 = vmatpush1.bf16.msra.mxu0 %v1141
      %1153 = vmatprep.subr.bf16.mxu0 0
      %1154 = vmatpush1.bf16.msra.mxu0 %v1142
      %1155 = vmatprep.subr.bf16.mxu0 0
      %1156 = vmatpush1.bf16.msra.mxu0 0
      %1157 = vmatprep.subr.bf16.mxu0 0
      %1158 = vmatpush1.bf16.msra.mxu0 0
      %1159 = vmatprep.subr.bf16.mxu0 0
      %1160 = vmatpush1.bf16.msra.mxu0 0
      %1161 = vmatprep.subr.bf16.mxu0 0
      %1162 = vmatpush1.bf16.msra.mxu0 0
      %1163 = vmatprep.subr.bf16.mxu0 0
      %1164 = vmatpush1.bf16.msra.mxu0 0
      %1165 = vmatprep.subr.bf16.mxu0 0
      %1166 = vmatpush1.bf16.msra.mxu0 0
      %1167 = vmatprep.subr.bf16.mxu0 0
      %1168 = vmatpush1.bf16.msra.mxu0 0
      %1169 = vmatprep.subr.bf16.mxu0 0
      %1170 = vmatpush1.bf16.msra.mxu0 0
      %1171 = vmatprep.subr.bf16.mxu0 0
      %1172 = vmatpush1.bf16.msra.mxu0 0
      %1173 = vmatprep.subr.bf16.mxu0 0
      %1174 = vmatpush1.bf16.msra.mxu0 0
      %1175 = vmatprep.subr.bf16.mxu0 0
      %1176 = vmatpush1.bf16.msra.mxu0 0
      %1177 = vmatprep.subr.bf16.mxu0 0
      %1178 = vmatpush1.bf16.msra.mxu0 0
      %1179 = vmatprep.subr.bf16.mxu0 0
      %1180 = vmatpush1.bf16.msra.mxu0 0
      %1181 = vmatprep.mubr.bf16.mxu0 0
      %1182 = vmatmul.mubr.bf16.gmra.mrb[0].mxu0 %v1147
      %v1183 = vpop.f32.mrb[0].mxu0
      %v1184 = vadd.f32 %v1126, %v1183
      %v1185 = vpop.f32.mrb[0].mxu0
      %v1186 = vpop.f32.mrb[0].mxu0
      %v1187 = vadd.f32 %v1126, %v1186
      %v1188 = vpop.f32.mrb[0].mxu0
      %1189 = vdwg.mxu0
      %v1190 = vmax.f32 %v1184, 0.0
      %v1191 = vmax.f32 %v1187, 0.0
      %vm1192 = vcmask 261120
      %v1193 = vsel %vm1192, %v1190, 0.0
      %1194 = vadd.xlane.f32.xlu0 %v1193
      %v1195 = vpop.xlane.xlu0 %1194
      %v1196 = vsel %vm1192, %v1191, 0.0
      %1197 = vadd.xlane.f32.xlu0 %v1196
      %v1198 = vpop.xlane.xlu0 %1197
      %v1199 = vrcp.pop 32.0
      %v1200 = vmul.f32 %v1195, %v1199
      %v1201 = vmul.f32 %v1198, %v1199
      %v1202 = vsub.f32 %v1190, %v1200
      %v1203 = vsub.f32 %v1191, %v1201
      %v1204 = vmul.f32 %v1202, %v1202
      %v1205 = vmul.f32 %v1203, %v1203
      %v1206 = vsel %vm1192, %v1204, 0.0
      %1207 = vadd.xlane.f32.xlu0 %v1206
      %v1208 = vpop.xlane.xlu0 %1207
      %v1209 = vsel %vm1192, %v1205, 0.0
      %1210 = vadd.xlane.f32.xlu0 %v1209
      %v1211 = vpop.xlane.xlu0 %1210
      %v1212 = vmul.f32 %v1208, %v1199
      %v1213 = vmul.f32 %v1211, %v1199
      %v1214 = vadd.f32 %v1212, 1e-05
      %v1215 = vadd.f32 %v1213, 1e-05
      %v1216 = vrsqrt.pop %v1214
      %v1217 = vrsqrt.pop %v1215
      %v1218 = vmul.f32 %v1202, %v1216
      %v1219 = vmul.f32 %v1203, %v1217
      %v1221 = vlaneseq
      %v1222 = vshrl.u32 %v1221, 7
      %v1223 = vsub.s32 0, %v1222
      %v1224 = vrot.slane %v1070, %v1223
      %v1226 = vmul.f32 %v1218, %v1224
      %v1227 = vmul.f32 %v1219, %v1224
      %v1229 = vlaneseq
      %v1230 = vshrl.u32 %v1229, 7
      %v1231 = vsub.s32 0, %v1230
      %v1232 = vrot.slane %v1071, %v1231
      %v1234 = vadd.f32 %v1226, %v1232
      %v1235 = vadd.f32 %v1227, %v1232
      %v1236 = vpack.c.bf16 %v1235, %v1234
      %v1238 = vlaneseq
      %v1239 = vshrl.u32 %v1238, 7
      %v1240 = vsub.s32 0, %v1239
      %v1241 = vrot.slane %v1076, %v1240
      %v1247 = vunpack.c.l.b16 %v1072
      %v1248 = vunpack.c.l.b16 %v1073
      %v1249 = vunpack.c.l.b16 %v1074
      %v1250 = vunpack.c.l.b16 %v1075
      %v1251 = vpack.c.b16 %v1248, %v1247
      %v1252 = vpack.c.b16 %v1250, %v1249
      %v1256 = vsel %vm1192, %v1236, 0
      %1258 = vmatprep.subr.bf16.mxu0 0
      %1259 = vmatpush1.bf16.msra.mxu0 %v1251
      %1260 = vmatprep.subr.bf16.mxu0 0
      %1261 = vmatpush1.bf16.msra.mxu0 %v1252
      %1262 = vmatprep.subr.bf16.mxu0 0
      %1263 = vmatpush1.bf16.msra.mxu0 0
      %1264 = vmatprep.subr.bf16.mxu0 0
      %1265 = vmatpush1.bf16.msra.mxu0 0
      %1266 = vmatprep.subr.bf16.mxu0 0
      %1267 = vmatpush1.bf16.msra.mxu0 0
      %1268 = vmatprep.subr.bf16.mxu0 0
      %1269 = vmatpush1.bf16.msra.mxu0 0
      %1270 = vmatprep.subr.bf16.mxu0 0
      %1271 = vmatpush1.bf16.msra.mxu0 0
      %1272 = vmatprep.subr.bf16.mxu0 0
      %1273 = vmatpush1.bf16.msra.mxu0 0
      %1274 = vmatprep.subr.bf16.mxu0 0
      %1275 = vmatpush1.bf16.msra.mxu0 0
      %1276 = vmatprep.subr.bf16.mxu0 0
      %1277 = vmatpush1.bf16.msra.mxu0 0
      %1278 = vmatprep.subr.bf16.mxu0 0
      %1279 = vmatpush1.bf16.msra.mxu0 0
      %1280 = vmatprep.subr.bf16.mxu0 0
      %1281 = vmatpush1.bf16.msra.mxu0 0
      %1282 = vmatprep.subr.bf16.mxu0 0
      %1283 = vmatpush1.bf16.msra.mxu0 0
      %1284 = vmatprep.subr.bf16.mxu0 0
      %1285 = vmatpush1.bf16.msra.mxu0 0
      %1286 = vmatprep.subr.bf16.mxu0 0
      %1287 = vmatpush1.bf16.msra.mxu0 0
      %1288 = vmatprep.subr.bf16.mxu0 0
      %1289 = vmatpush1.bf16.msra.mxu0 0
      %1290 = vmatprep.mubr.bf16.mxu0 0
      %1291 = vmatmul.mubr.bf16.gmra.mrb[0].mxu0 %v1256
      %v1292 = vpop.f32.mrb[0].mxu0
      %v1293 = vadd.f32 %v1241, %v1292
      %v1294 = vpop.f32.mrb[0].mxu0
      %v1295 = vpop.f32.mrb[0].mxu0
      %v1296 = vadd.f32 %v1241, %v1295
      %v1297 = vpop.f32.mrb[0].mxu0
      %1298 = vdwg.mxu0
      %v1299 = vld [vmem:[%s1047] sm:$0xff]
      %v1300 = vld [vmem:[%s29] sm:$0x1]
      %v1301 = vld [vmem:[%s31] sm:$0x1]
      %v1302 = vld [vmem:[%s33] sm:$0xf]
      %v1303 = vld [vmem:[%s33 + $0x4] sm:$0xf]
      %v1304 = vld [vmem:[%s33 + $0x8] sm:$0xf]
      %v1305 = vld [vmem:[%s33 + $0xc] sm:$0xf]
      %v1306 = vld [vmem:[%s33 + $0x10] sm:$0xf]
      %v1307 = vld [vmem:[%s35] sm:$0x1]
      %v1308 = vld [vmem:[%s37] sm:$0x1]
      %v1309 = vld [vmem:[%s39] sm:$0x1]
      %v1310 = vld [vmem:[%s41] sm:$0xf]
      %v1311 = vld [vmem:[%s41 + $0x4] sm:$0xf]
      %v1312 = vld [vmem:[%s41 + $0x8] sm:$0xf]
      %v1313 = vld [vmem:[%s41 + $0xc] sm:$0xf]
      %v1314 = vld [vmem:[%s43] sm:$0x1]
      %vm1315 = vcmask 326656
      %v1316 = vsel %vm1315, %v1299, 0.0
      %1317 = vadd.xlane.f32.xlu0 %v1316
      %v1318 = vpop.xlane.xlu0 %1317
      %v1319 = vrcp.pop 40.0
      %v1320 = vmul.f32 %v1318, %v1319
      %v1321 = vsub.f32 %v1299, %v1320
      %v1322 = vmul.f32 %v1321, %v1321
      %v1323 = vsel %vm1315, %v1322, 0.0
      %1324 = vadd.xlane.f32.xlu0 %v1323
      %v1325 = vpop.xlane.xlu0 %1324
      %v1326 = vmul.f32 %v1325, %v1319
      %v1327 = vadd.f32 %v1326, 1e-05
      %v1328 = vrsqrt.pop %v1327
      %v1329 = vmul.f32 %v1321, %v1328
      %v1331 = vlaneseq
      %v1332 = vshrl.u32 %v1331, 7
      %v1333 = vsub.s32 0, %v1332
      %v1334 = vrot.slane %v1300, %v1333
      %v1336 = vmul.f32 %v1329, %v1334
      %v1338 = vlaneseq
      %v1339 = vshrl.u32 %v1338, 7
      %v1340 = vsub.s32 0, %v1339
      %v1341 = vrot.slane %v1301, %v1340
      %v1343 = vadd.f32 %v1336, %v1341
      %v1344 = vpack.c.bf16 %v1343, %v1343
      %v1346 = vlaneseq
      %v1347 = vshrl.u32 %v1346, 7
      %v1348 = vsub.s32 0, %v1347
      %v1349 = vrot.slane %v1307, %v1348
      %v1356 = vunpack.c.l.b16 %v1302
      %v1357 = vunpack.c.l.b16 %v1303
      %v1358 = vunpack.c.l.b16 %v1304
      %v1359 = vunpack.c.l.b16 %v1305
      %v1360 = vunpack.c.l.b16 %v1306
      %v1361 = vpack.c.b16 %v1357, %v1356
      %v1362 = vpack.c.b16 %v1359, %v1358
      %v1363 = vpack.c.b16 %v1360, %v1360
      %v1367 = vsel %vm1315, %v1344, 0
      %vm1369 = vcmask 1043456
      %v1371 = vsel %vm1369, %v1363, 0
      %1373 = vmatprep.subr.bf16.mxu0 0
      %1374 = vmatpush1.bf16.msra.mxu0 %v1361
      %1375 = vmatprep.subr.bf16.mxu0 0
      %1376 = vmatpush1.bf16.msra.mxu0 %v1362
      %1377 = vmatprep.subr.bf16.mxu0 0
      %1378 = vmatpush1.bf16.msra.mxu0 %v1371
      %1379 = vmatprep.subr.bf16.mxu0 0
      %1380 = vmatpush1.bf16.msra.mxu0 0
      %1381 = vmatprep.subr.bf16.mxu0 0
      %1382 = vmatpush1.bf16.msra.mxu0 0
      %1383 = vmatprep.subr.bf16.mxu0 0
      %1384 = vmatpush1.bf16.msra.mxu0 0
      %1385 = vmatprep.subr.bf16.mxu0 0
      %1386 = vmatpush1.bf16.msra.mxu0 0
      %1387 = vmatprep.subr.bf16.mxu0 0
      %1388 = vmatpush1.bf16.msra.mxu0 0
      %1389 = vmatprep.subr.bf16.mxu0 0
      %1390 = vmatpush1.bf16.msra.mxu0 0
      %1391 = vmatprep.subr.bf16.mxu0 0
      %1392 = vmatpush1.bf16.msra.mxu0 0
      %1393 = vmatprep.subr.bf16.mxu0 0
      %1394 = vmatpush1.bf16.msra.mxu0 0
      %1395 = vmatprep.subr.bf16.mxu0 0
      %1396 = vmatpush1.bf16.msra.mxu0 0
      %1397 = vmatprep.subr.bf16.mxu0 0
      %1398 = vmatpush1.bf16.msra.mxu0 0
      %1399 = vmatprep.subr.bf16.mxu0 0
      %1400 = vmatpush1.bf16.msra.mxu0 0
      %1401 = vmatprep.subr.bf16.mxu0 0
      %1402 = vmatpush1.bf16.msra.mxu0 0
      %1403 = vmatprep.subr.bf16.mxu0 0
      %1404 = vmatpush1.bf16.msra.mxu0 0
      %1405 = vmatprep.mubr.bf16.mxu0 0
      %1406 = vmatmul.mubr.bf16.gmra.mrb[0].mxu0 %v1367
      %v1407 = vpop.f32.mrb[0].mxu0
      %v1408 = vadd.f32 %v1349, %v1407
      %v1409 = vpop.f32.mrb[0].mxu0
      %v1410 = vpop.f32.mrb[0].mxu0
      %v1411 = vpop.f32.mrb[0].mxu0
      %1412 = vdwg.mxu0
      %v1413 = vmax.f32 %v1408, 0.0
      %v1414 = vsel %vm1192, %v1413, 0.0
      %1415 = vadd.xlane.f32.xlu0 %v1414
      %v1416 = vpop.xlane.xlu0 %1415
      %v1417 = vmul.f32 %v1416, %v1199
      %v1418 = vsub.f32 %v1413, %v1417
      %v1419 = vmul.f32 %v1418, %v1418
      %v1420 = vsel %vm1192, %v1419, 0.0
      %1421 = vadd.xlane.f32.xlu0 %v1420
      %v1422 = vpop.xlane.xlu0 %1421
      %v1423 = vmul.f32 %v1422, %v1199
      %v1424 = vadd.f32 %v1423, 1e-05
      %v1425 = vrsqrt.pop %v1424
      %v1426 = vmul.f32 %v1418, %v1425
      %v1428 = vlaneseq
      %v1429 = vshrl.u32 %v1428, 7
      %v1430 = vsub.s32 0, %v1429
      %v1431 = vrot.slane %v1308, %v1430
      %v1433 = vmul.f32 %v1426, %v1431
      %v1435 = vlaneseq
      %v1436 = vshrl.u32 %v1435, 7
      %v1437 = vsub.s32 0, %v1436
      %v1438 = vrot.slane %v1309, %v1437
      %v1440 = vadd.f32 %v1433, %v1438
      %v1441 = vpack.c.bf16 %v1440, %v1440
      %v1443 = vlaneseq
      %v1444 = vshrl.u32 %v1443, 7
      %v1445 = vsub.s32 0, %v1444
      %v1446 = vrot.slane %v1314, %v1445
      %v1452 = vunpack.c.l.b16 %v1310
      %v1453 = vunpack.c.l.b16 %v1311
      %v1454 = vunpack.c.l.b16 %v1312
      %v1455 = vunpack.c.l.b16 %v1313
      %v1456 = vpack.c.b16 %v1453, %v1452
      %v1457 = vpack.c.b16 %v1455, %v1454
      %v1461 = vsel %vm1192, %v1441, 0
      %1463 = vmatprep.subr.bf16.mxu0 0
      %1464 = vmatpush1.bf16.msra.mxu0 %v1456
      %1465 = vmatprep.subr.bf16.mxu0 0
      %1466 = vmatpush1.bf16.msra.mxu0 %v1457
      %1467 = vmatprep.subr.bf16.mxu0 0
      %1468 = vmatpush1.bf16.msra.mxu0 0
      %1469 = vmatprep.subr.bf16.mxu0 0
      %1470 = vmatpush1.bf16.msra.mxu0 0
      %1471 = vmatprep.subr.bf16.mxu0 0
      %1472 = vmatpush1.bf16.msra.mxu0 0
      %1473 = vmatprep.subr.bf16.mxu0 0
      %1474 = vmatpush1.bf16.msra.mxu0 0
      %1475 = vmatprep.subr.bf16.mxu0 0
      %1476 = vmatpush1.bf16.msra.mxu0 0
      %1477 = vmatprep.subr.bf16.mxu0 0
      %1478 = vmatpush1.bf16.msra.mxu0 0
      %1479 = vmatprep.subr.bf16.mxu0 0
      %1480 = vmatpush1.bf16.msra.mxu0 0
      %1481 = vmatprep.subr.bf16.mxu0 0
      %1482 = vmatpush1.bf16.msra.mxu0 0
      %1483 = vmatprep.subr.bf16.mxu0 0
      %1484 = vmatpush1.bf16.msra.mxu0 0
      %1485 = vmatprep.subr.bf16.mxu0 0
      %1486 = vmatpush1.bf16.msra.mxu0 0
      %1487 = vmatprep.subr.bf16.mxu0 0
      %1488 = vmatpush1.bf16.msra.mxu0 0
      %1489 = vmatprep.subr.bf16.mxu0 0
      %1490 = vmatpush1.bf16.msra.mxu0 0
      %1491 = vmatprep.subr.bf16.mxu0 0
      %1492 = vmatpush1.bf16.msra.mxu0 0
      %1493 = vmatprep.subr.bf16.mxu0 0
      %1494 = vmatpush1.bf16.msra.mxu0 0
      %1495 = vmatprep.mubr.bf16.mxu0 0
      %1496 = vmatmul.mubr.bf16.gmra.mrb[0].mxu0 %v1461
      %v1497 = vpop.f32.mrb[0].mxu0
      %v1498 = vadd.f32 %v1446, %v1497
      %v1499 = vpop.f32.mrb[0].mxu0
      %v1500 = vpop.f32.mrb[0].mxu0
      %v1501 = vpop.f32.mrb[0].mxu0
      %1502 = vdwg.mxu0
      %v1503 = vld [vmem:[%s9] sm:$0xff]
      %v1504 = vld [vmem:[%s9 + $0x8] sm:$0xff]
      %v1505 = vadd.f32 %v1293, %v1503
      %v1506 = vadd.f32 %v1296, %v1504
      %v1507 = vld [vmem:[%s11] sm:$0xff]
      %v1508 = vadd.f32 %v1498, %v1507
      %v1509 = vpack.c.bf16 %v1506, %v1505
      %v1510 = vpack.c.bf16 %v1508, %v1508
      %1511 = vxpose.xlu0.b32.start [1/16] %v1505, 128
      %1512 = vxpose.xlu0.b32.cont [2/16] %v1506, 128
      %1513 = vxpose.xlu0.b32.cont [3/16] %v1508, 128
      %1514 = vxpose.xlu0.b32.cont [4/16] 0.0, 128
      %1515 = vxpose.xlu0.b32.cont [5/16] 0.0, 128
      %1516 = vxpose.xlu0.b32.cont [6/16] 0.0, 128
      %1517 = vxpose.xlu0.b32.cont [7/16] 0.0, 128
      %1518 = vxpose.xlu0.b32.cont [8/16] 0.0, 128
      %1519 = vxpose.xlu0.b32.cont [9/16] 0.0, 128
      %1520 = vxpose.xlu0.b32.cont [10/16] 0.0, 128
      %1521 = vxpose.xlu0.b32.cont [11/16] 0.0, 128
      %1522 = vxpose.xlu0.b32.cont [12/16] 0.0, 128
      %1523 = vxpose.xlu0.b32.cont [13/16] 0.0, 128
      %1524 = vxpose.xlu0.b32.cont [14/16] 0.0, 128
      %1525 = vxpose.xlu0.b32.cont [15/16] 0.0, 128
      %1526 = vxpose.xlu0.b32.end [16/16] 0.0, 128
      %v1527 = vpop.trf.xlu0
      %v1528 = vpop.trf.xlu0
      %v1529 = vpop.trf.xlu0
      %v1530 = vpop.trf.xlu0
      %v1531 = vpop.trf.xlu0
      %v1532 = vpop.trf.xlu0
      %v1533 = vpop.trf.xlu0
      %v1534 = vpop.trf.xlu0
      %v1535 = vpop.trf.xlu0
      %v1536 = vpop.trf.xlu0
      %v1537 = vpop.trf.xlu0
      %v1538 = vpop.trf.xlu0
      %v1539 = vpop.trf.xlu0
      %v1540 = vpop.trf.xlu0
      %v1541 = vpop.trf.xlu0
      %v1542 = vpop.trf.xlu0
      %v1543 = vpack.c.bf16 %v1528, %v1527
      %v1544 = vpack.c.bf16 %v1530, %v1529
      %v1545 = vld [vmem:[%s1050] sm:$0x1]
      %v1546 = vsub.f32 1.0, %v1545
      %v1547 = vmul.f32 %v1546, -1e+09
      %v1548 = vld [vmem:[%s1053] sm:$0x1]
      %v1549 = vsub.f32 1.0, %v1548
      %v1550 = vmul.f32 %v1549, -1e+09
      %v1552 = vlaneseq
      %v1553 = vshrl.u32 %v1552, 7
      %v1554 = vsub.s32 0, %v1553
      %v1555 = vrot.slane %v1550, %v1554
      %1556 = vrot.lane.b32.xlu0 %v1555, 16
      %v1557 = vpop.permute.xlu0 %1556
      %vm1559 = vcmask 130048
      %v1560 = vsel %vm1559, %v1547, %v1557
      %v1561 = vlaneseq
      %v1562 = vshrl.u32 %v1561, 7
      %v1563 = vsub.s32 0, %v1562
      %v1564 = vrot.slane %v1560, %v1563
      %v1565 = vld [vmem:[%s49] sm:$0xf]
      %v1566 = vld [vmem:[%s49 + $0x4] sm:$0xf]
      %v1567 = vld [vmem:[%s49 + $0x8] sm:$0xf]
      %v1568 = vld [vmem:[%s49 + $0xc] sm:$0xf]
      %v1569 = vld [vmem:[%s49 + $0x10] sm:$0xf]
      %v1570 = vld [vmem:[%s49 + $0x14] sm:$0xf]
      %v1571 = vld [vmem:[%s49 + $0x18] sm:$0xf]
      %v1572 = vld [vmem:[%s49 + $0x1c] sm:$0xf]
      %v1581 = vunpack.c.l.b16 %v1565
      %v1582 = vunpack.c.l.b16 %v1566
      %v1583 = vunpack.c.l.b16 %v1567
      %v1584 = vunpack.c.l.b16 %v1568
      %v1585 = vunpack.c.l.b16 %v1569
      %v1586 = vunpack.c.l.b16 %v1570
      %v1587 = vunpack.c.l.b16 %v1571
      %v1588 = vunpack.c.l.b16 %v1572
      %v1589 = vpack.c.b16 %v1582, %v1581
      %v1590 = vpack.c.b16 %v1584, %v1583
      %v1591 = vpack.c.b16 %v1586, %v1585
      %v1592 = vpack.c.b16 %v1588, %v1587
      %v1594 = vsel %vm1192, %v1589, 0
      %v1597 = vsel %vm1192, %v1590, 0
      %v1600 = vsel %vm1192, %v1591, 0
      %v1603 = vsel %vm1192, %v1592, 0
      %1605 = vmatprep.subr.bf16.mxu0 0
      %1606 = vmatpush1.bf16.msra.mxu0 %v1543
      %1607 = vmatprep.subr.bf16.mxu0 0
      %1608 = vmatpush1.bf16.msra.mxu0 %v1544
      %1609 = vmatprep.subr.bf16.mxu0 0
      %1610 = vmatpush1.bf16.msra.mxu0 0
      %1611 = vmatprep.subr.bf16.mxu0 0
      %1612 = vmatpush1.bf16.msra.mxu0 0
      %1613 = vmatprep.subr.bf16.mxu0 0
      %1614 = vmatpush1.bf16.msra.mxu0 0
      %1615 = vmatprep.subr.bf16.mxu0 0
      %1616 = vmatpush1.bf16.msra.mxu0 0
      %1617 = vmatprep.subr.bf16.mxu0 0
      %1618 = vmatpush1.bf16.msra.mxu0 0
      %1619 = vmatprep.subr.bf16.mxu0 0
      %1620 = vmatpush1.bf16.msra.mxu0 0
      %1621 = vmatprep.subr.bf16.mxu0 0
      %1622 = vmatpush1.bf16.msra.mxu0 0
      %1623 = vmatprep.subr.bf16.mxu0 0
      %1624 = vmatpush1.bf16.msra.mxu0 0
      %1625 = vmatprep.subr.bf16.mxu0 0
      %1626 = vmatpush1.bf16.msra.mxu0 0
      %1627 = vmatprep.subr.bf16.mxu0 0
      %1628 = vmatpush1.bf16.msra.mxu0 0
      %1629 = vmatprep.subr.bf16.mxu0 0
      %1630 = vmatpush1.bf16.msra.mxu0 0
      %1631 = vmatprep.subr.bf16.mxu0 0
      %1632 = vmatpush1.bf16.msra.mxu0 0
      %1633 = vmatprep.subr.bf16.mxu0 0
      %1634 = vmatpush1.bf16.msra.mxu0 0
      %1635 = vmatprep.subr.bf16.mxu0 0
      %1636 = vmatpush1.bf16.msra.mxu0 0
      %1637 = vmatprep.mubr.bf16.mxu0 0
      %1638 = vmatmul.mubr.bf16.gmra.mrb[0].mxu0 %v1594
      %v1639 = vpop.f32.mrb[0].mxu0
      %v1640 = vadd.f32 0.0, %v1639
      %v1641 = vpop.f32.mrb[0].mxu0
      %v1642 = vpop.f32.mrb[0].mxu0
      %v1643 = vadd.f32 0.0, %v1642
      %v1644 = vpop.f32.mrb[0].mxu0
      %1645 = vmatprep.mubr.bf16.mxu0 0
      %1646 = vmatmul.mubr.bf16.gmra.mrb[0].mxu0 %v1597
      %v1647 = vpop.f32.mrb[0].mxu0
      %v1648 = vadd.f32 0.0, %v1647
      %v1649 = vpop.f32.mrb[0].mxu0
      %v1650 = vpop.f32.mrb[0].mxu0
      %v1651 = vadd.f32 0.0, %v1650
      %v1652 = vpop.f32.mrb[0].mxu0
      %1653 = vmatprep.mubr.bf16.mxu0 0
      %1654 = vmatmul.mubr.bf16.gmra.mrb[0].mxu0 %v1600
      %v1655 = vpop.f32.mrb[0].mxu0
      %v1656 = vadd.f32 0.0, %v1655
      %v1657 = vpop.f32.mrb[0].mxu0
      %v1658 = vpop.f32.mrb[0].mxu0
      %v1659 = vadd.f32 0.0, %v1658
      %v1660 = vpop.f32.mrb[0].mxu0
      %1661 = vmatprep.mubr.bf16.mxu0 0
      %1662 = vmatmul.mubr.bf16.gmra.mrb[0].mxu0 %v1603
      %v1663 = vpop.f32.mrb[0].mxu0
      %v1664 = vadd.f32 0.0, %v1663
      %v1665 = vpop.f32.mrb[0].mxu0
      %v1666 = vpop.f32.mrb[0].mxu0
      %v1667 = vadd.f32 0.0, %v1666
      %v1668 = vpop.f32.mrb[0].mxu0
      %1669 = vdwg.mxu0
      %v1670 = vpack.c.bf16 %v1643, %v1640
      %v1671 = vpack.c.bf16 %v1651, %v1648
      %v1672 = vpack.c.bf16 %v1659, %v1656
      %v1673 = vpack.c.bf16 %v1667, %v1664
      %v1674 = vld [vmem:[%s45] sm:$0xf]
      %v1675 = vpack.c.bf16 %v1674, %v1674
      %v1676 = vld [vmem:[%s47] sm:$0xf]
      %v1677 = vld [vmem:[%s47 + $0x4] sm:$0xf]
      %v1678 = vld [vmem:[%s47 + $0x8] sm:$0xf]
      %v1679 = vld [vmem:[%s47 + $0xc] sm:$0xf]
      %v1684 = vunpack.c.l.b16 %v1676
      %v1685 = vunpack.c.l.b16 %v1677
      %v1686 = vunpack.c.l.b16 %v1678
      %v1687 = vunpack.c.l.b16 %v1679
      %v1688 = vpack.c.b16 %v1685, %v1684
      %v1689 = vpack.c.b16 %v1687, %v1686
      %v1693 = vsel %vm1192, %v1675, 0
      %1695 = vmatprep.subr.bf16.mxu0 0
      %1696 = vmatpush1.bf16.msra.mxu0 %v1688
      %1697 = vmatprep.subr.bf16.mxu0 0
      %1698 = vmatpush1.bf16.msra.mxu0 %v1689
      %1699 = vmatprep.subr.bf16.mxu0 0
      %1700 = vmatpush1.bf16.msra.mxu0 0
      %1701 = vmatprep.subr.bf16.mxu0 0
      %1702 = vmatpush1.bf16.msra.mxu0 0
      %1703 = vmatprep.subr.bf16.mxu0 0
      %1704 = vmatpush1.bf16.msra.mxu0 0
      %1705 = vmatprep.subr.bf16.mxu0 0
      %1706 = vmatpush1.bf16.msra.mxu0 0
      %1707 = vmatprep.subr.bf16.mxu0 0
      %1708 = vmatpush1.bf16.msra.mxu0 0
      %1709 = vmatprep.subr.bf16.mxu0 0
      %1710 = vmatpush1.bf16.msra.mxu0 0
      %1711 = vmatprep.subr.bf16.mxu0 0
      %1712 = vmatpush1.bf16.msra.mxu0 0
      %1713 = vmatprep.subr.bf16.mxu0 0
      %1714 = vmatpush1.bf16.msra.mxu0 0
      %1715 = vmatprep.subr.bf16.mxu0 0
      %1716 = vmatpush1.bf16.msra.mxu0 0
      %1717 = vmatprep.subr.bf16.mxu0 0
      %1718 = vmatpush1.bf16.msra.mxu0 0
      %1719 = vmatprep.subr.bf16.mxu0 0
      %1720 = vmatpush1.bf16.msra.mxu0 0
      %1721 = vmatprep.subr.bf16.mxu0 0
      %1722 = vmatpush1.bf16.msra.mxu0 0
      %1723 = vmatprep.subr.bf16.mxu0 0
      %1724 = vmatpush1.bf16.msra.mxu0 0
      %1725 = vmatprep.subr.bf16.mxu0 0
      %1726 = vmatpush1.bf16.msra.mxu0 0
      %1727 = vmatprep.mubr.bf16.mxu0 0
      %1728 = vmatmul.mubr.bf16.gmra.mrb[0].mxu0 %v1693
      %v1729 = vpop.f32.mrb[0].mxu0
      %v1730 = vadd.f32 0.0, %v1729
      %v1731 = vpop.f32.mrb[0].mxu0
      %v1732 = vpop.f32.mrb[0].mxu0
      %v1733 = vpop.f32.mrb[0].mxu0
      %1734 = vdwg.mxu0
      %v1735 = vpack.c.bf16 %v1730, %v1730
      %v1737 = vsel %vm1192, %v1735, 0
      %1739 = vmatprep.subr.bf16.mxu0 0
      %1740 = vmatpush1.bf16.msra.mxu0 %v1670
      %1741 = vmatprep.subr.bf16.mxu0 0
      %1742 = vmatpush1.bf16.msra.mxu0 %v1671
      %1743 = vmatprep.subr.bf16.mxu0 0
      %1744 = vmatpush1.bf16.msra.mxu0 0
      %1745 = vmatprep.subr.bf16.mxu0 0
      %1746 = vmatpush1.bf16.msra.mxu0 0
      %1747 = vmatprep.subr.bf16.mxu0 0
      %1748 = vmatpush1.bf16.msra.mxu0 0
      %1749 = vmatprep.subr.bf16.mxu0 0
      %1750 = vmatpush1.bf16.msra.mxu0 0
      %1751 = vmatprep.subr.bf16.mxu0 0
      %1752 = vmatpush1.bf16.msra.mxu0 0
      %1753 = vmatprep.subr.bf16.mxu0 0
      %1754 = vmatpush1.bf16.msra.mxu0 0
      %1755 = vmatprep.subr.bf16.mxu0 0
      %1756 = vmatpush1.bf16.msra.mxu0 0
      %1757 = vmatprep.subr.bf16.mxu0 0
      %1758 = vmatpush1.bf16.msra.mxu0 0
      %1759 = vmatprep.subr.bf16.mxu0 0
      %1760 = vmatpush1.bf16.msra.mxu0 0
      %1761 = vmatprep.subr.bf16.mxu0 0
      %1762 = vmatpush1.bf16.msra.mxu0 0
      %1763 = vmatprep.subr.bf16.mxu0 0
      %1764 = vmatpush1.bf16.msra.mxu0 0
      %1765 = vmatprep.subr.bf16.mxu0 0
      %1766 = vmatpush1.bf16.msra.mxu0 0
      %1767 = vmatprep.subr.bf16.mxu0 0
      %1768 = vmatpush1.bf16.msra.mxu0 0
      %1769 = vmatprep.subr.bf16.mxu0 0
      %1770 = vmatpush1.bf16.msra.mxu0 0
      %1771 = vmatprep.mubr.bf16.mxu0 0
      %1772 = vmatmul.mubr.bf16.gmra.mrb[0].mxu0 %v1737
      %v1773 = vpop.f32.mrb[0].mxu0
      %v1774 = vadd.f32 %v1564, %v1773
      %v1775 = vpop.f32.mrb[0].mxu0
      %v1776 = vpop.f32.mrb[0].mxu0
      %v1777 = vpop.f32.mrb[0].mxu0
      %1778 = vdwg.mxu0
      %vm1779 = vcmask 191488
      %v1780 = vsel %vm1779, %v1774, -inf
      %1781 = vmax.xlane.f32.xlu0 %v1780
      %v1782 = vpop.xlane.xlu0 %1781
      %v1783 = vsub.f32 %v1774, %v1782
      %v1784 = vmul.f32 %v1783, 1.442695
      %v1785 = vpow.pop %v1784
      %v1786 = vsel %vm1779, %v1785, 0.0
      %1787 = vadd.xlane.f32.xlu0 %v1786
      %v1788 = vpop.xlane.xlu0 %1787
      %v1789 = vrcp.pop %v1788
      %v1790 = vmul.f32 %v1785, %v1789
      %v1791 = vld [vmem:[%s51] sm:$0xf]
      %v1792 = vld [vmem:[%s51 + $0x4] sm:$0xf]
      %v1793 = vld [vmem:[%s51 + $0x8] sm:$0xf]
      %v1794 = vld [vmem:[%s51 + $0xc] sm:$0xf]
      %v1799 = vunpack.c.l.b16 %v1791
      %v1800 = vunpack.c.l.b16 %v1792
      %v1801 = vunpack.c.l.b16 %v1793
      %v1802 = vunpack.c.l.b16 %v1794
      %v1803 = vpack.c.b16 %v1800, %v1799
      %v1804 = vpack.c.b16 %v1802, %v1801
      %v1808 = vsel %vm1192, %v1509, 0
      %v1811 = vsel %vm1192, %v1510, 0
      %1813 = vmatprep.subr.bf16.mxu0 0
      %1814 = vmatpush1.bf16.msra.mxu0 %v1803
      %1815 = vmatprep.subr.bf16.mxu0 0
      %1816 = vmatpush1.bf16.msra.mxu0 %v1804
      %1817 = vmatprep.subr.bf16.mxu0 0
      %1818 = vmatpush1.bf16.msra.mxu0 0
      %1819 = vmatprep.subr.bf16.mxu0 0
      %1820 = vmatpush1.bf16.msra.mxu0 0
      %1821 = vmatprep.subr.bf16.mxu0 0
      %1822 = vmatpush1.bf16.msra.mxu0 0
      %1823 = vmatprep.subr.bf16.mxu0 0
      %1824 = vmatpush1.bf16.msra.mxu0 0
      %1825 = vmatprep.subr.bf16.mxu0 0
      %1826 = vmatpush1.bf16.msra.mxu0 0
      %1827 = vmatprep.subr.bf16.mxu0 0
      %1828 = vmatpush1.bf16.msra.mxu0 0
      %1829 = vmatprep.subr.bf16.mxu0 0
      %1830 = vmatpush1.bf16.msra.mxu0 0
      %1831 = vmatprep.subr.bf16.mxu0 0
      %1832 = vmatpush1.bf16.msra.mxu0 0
      %1833 = vmatprep.subr.bf16.mxu0 0
      %1834 = vmatpush1.bf16.msra.mxu0 0
      %1835 = vmatprep.subr.bf16.mxu0 0
      %1836 = vmatpush1.bf16.msra.mxu0 0
      %1837 = vmatprep.subr.bf16.mxu0 0
      %1838 = vmatpush1.bf16.msra.mxu0 0
      %1839 = vmatprep.subr.bf16.mxu0 0
      %1840 = vmatpush1.bf16.msra.mxu0 0
      %1841 = vmatprep.subr.bf16.mxu0 0
      %1842 = vmatpush1.bf16.msra.mxu0 0
      %1843 = vmatprep.subr.bf16.mxu0 0
      %1844 = vmatpush1.bf16.msra.mxu0 0
      %1845 = vmatprep.mubr.bf16.mxu0 0
      %1846 = vmatmul.mubr.bf16.gmra.mrb[0].mxu0 %v1808
      %v1847 = vpop.f32.mrb[0].mxu0
      %v1848 = vadd.f32 0.0, %v1847
      %v1849 = vpop.f32.mrb[0].mxu0
      %v1850 = vpop.f32.mrb[0].mxu0
      %v1851 = vadd.f32 0.0, %v1850
      %v1852 = vpop.f32.mrb[0].mxu0
      %1853 = vmatprep.mubr.bf16.mxu0 0
      %1854 = vmatmul.mubr.bf16.gmra.mrb[0].mxu0 %v1811
      %v1855 = vpop.f32.mrb[0].mxu0
      %v1856 = vadd.f32 0.0, %v1855
      %v1857 = vpop.f32.mrb[0].mxu0
      %v1858 = vpop.f32.mrb[0].mxu0
      %v1859 = vpop.f32.mrb[0].mxu0
      %1860 = vdwg.mxu0
      %v1861 = vpack.c.bf16 %v1790, %v1790
      %v1862 = vpack.c.bf16 %v1851, %v1848
      %v1863 = vpack.c.bf16 %v1856, %v1856
      %vm1864 = vcmask 195584
      %v1866 = vsel %vm1864, %v1861, 0
      %v1869 = vsel %vm1369, %v1863, 0
      %1871 = vmatprep.subr.bf16.mxu0 0
      %1872 = vmatpush1.bf16.msra.mxu0 %v1862
      %1873 = vmatprep.subr.bf16.mxu0 0
      %1874 = vmatpush1.bf16.msra.mxu0 %v1869
      %1875 = vmatprep.subr.bf16.mxu0 0
      %1876 = vmatpush1.bf16.msra.mxu0 0
      %1877 = vmatprep.subr.bf16.mxu0 0
      %1878 = vmatpush1.bf16.msra.mxu0 0
      %1879 = vmatprep.subr.bf16.mxu0 0
      %1880 = vmatpush1.bf16.msra.mxu0 0
      %1881 = vmatprep.subr.bf16.mxu0 0
      %1882 = vmatpush1.bf16.msra.mxu0 0
      %1883 = vmatprep.subr.bf16.mxu0 0
      %1884 = vmatpush1.bf16.msra.mxu0 0
      %1885 = vmatprep.subr.bf16.mxu0 0
      %1886 = vmatpush1.bf16.msra.mxu0 0
      %1887 = vmatprep.subr.bf16.mxu0 0
      %1888 = vmatpush1.bf16.msra.mxu0 0
      %1889 = vmatprep.subr.bf16.mxu0 0
      %1890 = vmatpush1.bf16.msra.mxu0 0
      %1891 = vmatprep.subr.bf16.mxu0 0
      %1892 = vmatpush1.bf16.msra.mxu0 0
      %1893 = vmatprep.subr.bf16.mxu0 0
      %1894 = vmatpush1.bf16.msra.mxu0 0
      %1895 = vmatprep.subr.bf16.mxu0 0
      %1896 = vmatpush1.bf16.msra.mxu0 0
      %1897 = vmatprep.subr.bf16.mxu0 0
      %1898 = vmatpush1.bf16.msra.mxu0 0
      %1899 = vmatprep.subr.bf16.mxu0 0
      %1900 = vmatpush1.bf16.msra.mxu0 0
      %1901 = vmatprep.subr.bf16.mxu0 0
      %1902 = vmatpush1.bf16.msra.mxu0 0
      %1903 = vmatprep.mubr.bf16.mxu0 0
      %1904 = vmatmul.mubr.bf16.gmra.mrb[0].mxu0 %v1866
      %v1905 = vpop.f32.mrb[0].mxu0
      %v1906 = vadd.f32 0.0, %v1905
      %v1907 = vpop.f32.mrb[0].mxu0
      %v1908 = vpop.f32.mrb[0].mxu0
      %v1909 = vpop.f32.mrb[0].mxu0
      %1910 = vdwg.mxu0
      %v1911 = vpack.c.bf16 %v1906, %v1906
      %v1912 = vld [vmem:[%s53] sm:$0xf]
      %v1913 = vld [vmem:[%s53 + $0x4] sm:$0xf]
      %v1914 = vld [vmem:[%s53 + $0x8] sm:$0xf]
      %v1915 = vld [vmem:[%s53 + $0xc] sm:$0xf]
      %v1920 = vunpack.c.l.b16 %v1912
      %v1921 = vunpack.c.l.b16 %v1913
      %v1922 = vunpack.c.l.b16 %v1914
      %v1923 = vunpack.c.l.b16 %v1915
      %v1924 = vpack.c.b16 %v1921, %v1920
      %v1925 = vpack.c.b16 %v1923, %v1922
      %v1929 = vsel %vm1192, %v1911, 0
      %1931 = vmatprep.subr.bf16.mxu0 0
      %1932 = vmatpush1.bf16.msra.mxu0 %v1924
      %1933 = vmatprep.subr.bf16.mxu0 0
      %1934 = vmatpush1.bf16.msra.mxu0 %v1925
      %1935 = vmatprep.subr.bf16.mxu0 0
      %1936 = vmatpush1.bf16.msra.mxu0 0
      %1937 = vmatprep.subr.bf16.mxu0 0
      %1938 = vmatpush1.bf16.msra.mxu0 0
      %1939 = vmatprep.subr.bf16.mxu0 0
      %1940 = vmatpush1.bf16.msra.mxu0 0
      %1941 = vmatprep.subr.bf16.mxu0 0
      %1942 = vmatpush1.bf16.msra.mxu0 0
      %1943 = vmatprep.subr.bf16.mxu0 0
      %1944 = vmatpush1.bf16.msra.mxu0 0
      %1945 = vmatprep.subr.bf16.mxu0 0
      %1946 = vmatpush1.bf16.msra.mxu0 0
      %1947 = vmatprep.subr.bf16.mxu0 0
      %1948 = vmatpush1.bf16.msra.mxu0 0
      %1949 = vmatprep.subr.bf16.mxu0 0
      %1950 = vmatpush1.bf16.msra.mxu0 0
      %1951 = vmatprep.subr.bf16.mxu0 0
      %1952 = vmatpush1.bf16.msra.mxu0 0
      %1953 = vmatprep.subr.bf16.mxu0 0
      %1954 = vmatpush1.bf16.msra.mxu0 0
      %1955 = vmatprep.subr.bf16.mxu0 0
      %1956 = vmatpush1.bf16.msra.mxu0 0
      %1957 = vmatprep.subr.bf16.mxu0 0
      %1958 = vmatpush1.bf16.msra.mxu0 0
      %1959 = vmatprep.subr.bf16.mxu0 0
      %1960 = vmatpush1.bf16.msra.mxu0 0
      %1961 = vmatprep.subr.bf16.mxu0 0
      %1962 = vmatpush1.bf16.msra.mxu0 0
      %1963 = vmatprep.mubr.bf16.mxu0 0
      %1964 = vmatmul.mubr.bf16.gmra.mrb[0].mxu0 %v1929
      %v1965 = vpop.f32.mrb[0].mxu0
      %v1966 = vadd.f32 0.0, %v1965
      %v1967 = vpop.f32.mrb[0].mxu0
      %v1968 = vpop.f32.mrb[0].mxu0
      %v1969 = vpop.f32.mrb[0].mxu0
      %1970 = vdwg.mxu0
      %v1971 = vadd.f32 %v1674, %v1966
      %s1972 = scalar_lea.vmem %s47, 16
      %v1973 = vld [vmem:[%s1972] sm:$0xf]
      %v1974 = vld [vmem:[%s1972 + $0x4] sm:$0xf]
      %v1975 = vld [vmem:[%s1972 + $0x8] sm:$0xf]
      %v1976 = vld [vmem:[%s1972 + $0xc] sm:$0xf]
      %v1981 = vunpack.c.l.b16 %v1973
      %v1982 = vunpack.c.l.b16 %v1974
      %v1983 = vunpack.c.l.b16 %v1975
      %v1984 = vunpack.c.l.b16 %v1976
      %v1985 = vpack.c.b16 %v1982, %v1981
      %v1986 = vpack.c.b16 %v1984, %v1983
      %1989 = vmatprep.subr.bf16.mxu0 0
      %1990 = vmatpush1.bf16.msra.mxu0 %v1985
      %1991 = vmatprep.subr.bf16.mxu0 0
      %1992 = vmatpush1.bf16.msra.mxu0 %v1986
      %1993 = vmatprep.subr.bf16.mxu0 0
      %1994 = vmatpush1.bf16.msra.mxu0 0
      %1995 = vmatprep.subr.bf16.mxu0 0
      %1996 = vmatpush1.bf16.msra.mxu0 0
      %1997 = vmatprep.subr.bf16.mxu0 0
      %1998 = vmatpush1.bf16.msra.mxu0 0
      %1999 = vmatprep.subr.bf16.mxu0 0
      %2000 = vmatpush1.bf16.msra.mxu0 0
      %2001 = vmatprep.subr.bf16.mxu0 0
      %2002 = vmatpush1.bf16.msra.mxu0 0
      %2003 = vmatprep.subr.bf16.mxu0 0
      %2004 = vmatpush1.bf16.msra.mxu0 0
      %2005 = vmatprep.subr.bf16.mxu0 0
      %2006 = vmatpush1.bf16.msra.mxu0 0
      %2007 = vmatprep.subr.bf16.mxu0 0
      %2008 = vmatpush1.bf16.msra.mxu0 0
      %2009 = vmatprep.subr.bf16.mxu0 0
      %2010 = vmatpush1.bf16.msra.mxu0 0
      %2011 = vmatprep.subr.bf16.mxu0 0
      %2012 = vmatpush1.bf16.msra.mxu0 0
      %2013 = vmatprep.subr.bf16.mxu0 0
      %2014 = vmatpush1.bf16.msra.mxu0 0
      %2015 = vmatprep.subr.bf16.mxu0 0
      %2016 = vmatpush1.bf16.msra.mxu0 0
      %2017 = vmatprep.subr.bf16.mxu0 0
      %2018 = vmatpush1.bf16.msra.mxu0 0
      %2019 = vmatprep.subr.bf16.mxu0 0
      %2020 = vmatpush1.bf16.msra.mxu0 0
      %2021 = vmatprep.mubr.bf16.mxu0 0
      %2022 = vmatmul.mubr.bf16.gmra.mrb[0].mxu0 %v1693
      %v2023 = vpop.f32.mrb[0].mxu0
      %v2024 = vadd.f32 0.0, %v2023
      %v2025 = vpop.f32.mrb[0].mxu0
      %v2026 = vpop.f32.mrb[0].mxu0
      %v2027 = vpop.f32.mrb[0].mxu0
      %2028 = vdwg.mxu0
      %v2029 = vpack.c.bf16 %v2024, %v2024
      %v2031 = vsel %vm1192, %v2029, 0
      %2033 = vmatprep.subr.bf16.mxu0 0
      %2034 = vmatpush1.bf16.msra.mxu0 %v1672
      %2035 = vmatprep.subr.bf16.mxu0 0
      %2036 = vmatpush1.bf16.msra.mxu0 %v1673
      %2037 = vmatprep.subr.bf16.mxu0 0
      %2038 = vmatpush1.bf16.msra.mxu0 0
      %2039 = vmatprep.subr.bf16.mxu0 0
      %2040 = vmatpush1.bf16.msra.mxu0 0
      %2041 = vmatprep.subr.bf16.mxu0 0
      %2042 = vmatpush1.bf16.msra.mxu0 0
      %2043 = vmatprep.subr.bf16.mxu0 0
      %2044 = vmatpush1.bf16.msra.mxu0 0
      %2045 = vmatprep.subr.bf16.mxu0 0
      %2046 = vmatpush1.bf16.msra.mxu0 0
      %2047 = vmatprep.subr.bf16.mxu0 0
      %2048 = vmatpush1.bf16.msra.mxu0 0
      %2049 = vmatprep.subr.bf16.mxu0 0
      %2050 = vmatpush1.bf16.msra.mxu0 0
      %2051 = vmatprep.subr.bf16.mxu0 0
      %2052 = vmatpush1.bf16.msra.mxu0 0
      %2053 = vmatprep.subr.bf16.mxu0 0
      %2054 = vmatpush1.bf16.msra.mxu0 0
      %2055 = vmatprep.subr.bf16.mxu0 0
      %2056 = vmatpush1.bf16.msra.mxu0 0
      %2057 = vmatprep.subr.bf16.mxu0 0
      %2058 = vmatpush1.bf16.msra.mxu0 0
      %2059 = vmatprep.subr.bf16.mxu0 0
      %2060 = vmatpush1.bf16.msra.mxu0 0
      %2061 = vmatprep.subr.bf16.mxu0 0
      %2062 = vmatpush1.bf16.msra.mxu0 0
      %2063 = vmatprep.subr.bf16.mxu0 0
      %2064 = vmatpush1.bf16.msra.mxu0 0
      %2065 = vmatprep.mubr.bf16.mxu0 0
      %2066 = vmatmul.mubr.bf16.gmra.mrb[0].mxu0 %v2031
      %v2067 = vpop.f32.mrb[0].mxu0
      %v2068 = vadd.f32 %v1564, %v2067
      %v2069 = vpop.f32.mrb[0].mxu0
      %v2070 = vpop.f32.mrb[0].mxu0
      %v2071 = vpop.f32.mrb[0].mxu0
      %2072 = vdwg.mxu0
      %v2073 = vsel %vm1779, %v2068, -inf
      %2074 = vmax.xlane.f32.xlu0 %v2073
      %v2075 = vpop.xlane.xlu0 %2074
      %v2076 = vsub.f32 %v2068, %v2075
      %v2077 = vmul.f32 %v2076, 1.442695
      %v2078 = vpow.pop %v2077
      %v2079 = vsel %vm1779, %v2078, 0.0
      %2080 = vadd.xlane.f32.xlu0 %v2079
      %v2081 = vpop.xlane.xlu0 %2080
      %v2082 = vrcp.pop %v2081
      %v2083 = vmul.f32 %v2078, %v2082
      %s2084 = scalar_lea.vmem %s51, 16
      %v2085 = vld [vmem:[%s2084] sm:$0xf]
      %v2086 = vld [vmem:[%s2084 + $0x4] sm:$0xf]
      %v2087 = vld [vmem:[%s2084 + $0x8] sm:$0xf]
      %v2088 = vld [vmem:[%s2084 + $0xc] sm:$0xf]
      %v2093 = vunpack.c.l.b16 %v2085
      %v2094 = vunpack.c.l.b16 %v2086
      %v2095 = vunpack.c.l.b16 %v2087
      %v2096 = vunpack.c.l.b16 %v2088
      %v2097 = vpack.c.b16 %v2094, %v2093
      %v2098 = vpack.c.b16 %v2096, %v2095
      %2101 = vmatprep.subr.bf16.mxu0 0
      %2102 = vmatpush1.bf16.msra.mxu0 %v2097
      %2103 = vmatprep.subr.bf16.mxu0 0
      %2104 = vmatpush1.bf16.msra.mxu0 %v2098
      %2105 = vmatprep.subr.bf16.mxu0 0
      %2106 = vmatpush1.bf16.msra.mxu0 0
      %2107 = vmatprep.subr.bf16.mxu0 0
      %2108 = vmatpush1.bf16.msra.mxu0 0
      %2109 = vmatprep.subr.bf16.mxu0 0
      %2110 = vmatpush1.bf16.msra.mxu0 0
      %2111 = vmatprep.subr.bf16.mxu0 0
      %2112 = vmatpush1.bf16.msra.mxu0 0
      %2113 = vmatprep.subr.bf16.mxu0 0
      %2114 = vmatpush1.bf16.msra.mxu0 0
      %2115 = vmatprep.subr.bf16.mxu0 0
      %2116 = vmatpush1.bf16.msra.mxu0 0
      %2117 = vmatprep.subr.bf16.mxu0 0
      %2118 = vmatpush1.bf16.msra.mxu0 0
      %2119 = vmatprep.subr.bf16.mxu0 0
      %2120 = vmatpush1.bf16.msra.mxu0 0
      %2121 = vmatprep.subr.bf16.mxu0 0
      %2122 = vmatpush1.bf16.msra.mxu0 0
      %2123 = vmatprep.subr.bf16.mxu0 0
      %2124 = vmatpush1.bf16.msra.mxu0 0
      %2125 = vmatprep.subr.bf16.mxu0 0
      %2126 = vmatpush1.bf16.msra.mxu0 0
      %2127 = vmatprep.subr.bf16.mxu0 0
      %2128 = vmatpush1.bf16.msra.mxu0 0
      %2129 = vmatprep.subr.bf16.mxu0 0
      %2130 = vmatpush1.bf16.msra.mxu0 0
      %2131 = vmatprep.subr.bf16.mxu0 0
      %2132 = vmatpush1.bf16.msra.mxu0 0
      %2133 = vmatprep.mubr.bf16.mxu0 0
      %2134 = vmatmul.mubr.bf16.gmra.mrb[0].mxu0 %v1808
      %v2135 = vpop.f32.mrb[0].mxu0
      %v2136 = vadd.f32 0.0, %v2135
      %v2137 = vpop.f32.mrb[0].mxu0
      %v2138 = vpop.f32.mrb[0].mxu0
      %v2139 = vadd.f32 0.0, %v2138
      %v2140 = vpop.f32.mrb[0].mxu0
      %2141 = vmatprep.mubr.bf16.mxu0 0
      %2142 = vmatmul.mubr.bf16.gmra.mrb[0].mxu0 %v1811
      %v2143 = vpop.f32.mrb[0].mxu0
      %v2144 = vadd.f32 0.0, %v2143
      %v2145 = vpop.f32.mrb[0].mxu0
      %v2146 = vpop.f32.mrb[0].mxu0
      %v2147 = vpop.f32.mrb[0].mxu0
      %2148 = vdwg.mxu0
      %v2149 = vpack.c.bf16 %v2083, %v2083
      %v2150 = vpack.c.bf16 %v2139, %v2136
      %v2151 = vpack.c.bf16 %v2144, %v2144
      %v2153 = vsel %vm1864, %v2149, 0
      %v2156 = vsel %vm1369, %v2151, 0
      %2158 = vmatprep.subr.bf16.mxu0 0
      %2159 = vmatpush1.bf16.msra.mxu0 %v2150
      %2160 = vmatprep.subr.bf16.mxu0 0
      %2161 = vmatpush1.bf16.msra.mxu0 %v2156
      %2162 = vmatprep.subr.bf16.mxu0 0
      %2163 = vmatpush1.bf16.msra.mxu0 0
      %2164 = vmatprep.subr.bf16.mxu0 0
      %2165 = vmatpush1.bf16.msra.mxu0 0
      %2166 = vmatprep.subr.bf16.mxu0 0
      %2167 = vmatpush1.bf16.msra.mxu0 0
      %2168 = vmatprep.subr.bf16.mxu0 0
      %2169 = vmatpush1.bf16.msra.mxu0 0
      %2170 = vmatprep.subr.bf16.mxu0 0
      %2171 = vmatpush1.bf16.msra.mxu0 0
      %2172 = vmatprep.subr.bf16.mxu0 0
      %2173 = vmatpush1.bf16.msra.mxu0 0
      %2174 = vmatprep.subr.bf16.mxu0 0
      %2175 = vmatpush1.bf16.msra.mxu0 0
      %2176 = vmatprep.subr.bf16.mxu0 0
      %2177 = vmatpush1.bf16.msra.mxu0 0
      %2178 = vmatprep.subr.bf16.mxu0 0
      %2179 = vmatpush1.bf16.msra.mxu0 0
      %2180 = vmatprep.subr.bf16.mxu0 0
      %2181 = vmatpush1.bf16.msra.mxu0 0
      %2182 = vmatprep.subr.bf16.mxu0 0
      %2183 = vmatpush1.bf16.msra.mxu0 0
      %2184 = vmatprep.subr.bf16.mxu0 0
      %2185 = vmatpush1.bf16.msra.mxu0 0
      %2186 = vmatprep.subr.bf16.mxu0 0
      %2187 = vmatpush1.bf16.msra.mxu0 0
      %2188 = vmatprep.subr.bf16.mxu0 0
      %2189 = vmatpush1.bf16.msra.mxu0 0
      %2190 = vmatprep.mubr.bf16.mxu0 0
      %2191 = vmatmul.mubr.bf16.gmra.mrb[0].mxu0 %v2153
      %v2192 = vpop.f32.mrb[0].mxu0
      %v2193 = vadd.f32 0.0, %v2192
      %v2194 = vpop.f32.mrb[0].mxu0
      %v2195 = vpop.f32.mrb[0].mxu0
      %v2196 = vpop.f32.mrb[0].mxu0
      %2197 = vdwg.mxu0
      %v2198 = vpack.c.bf16 %v2193, %v2193
      %s2199 = scalar_lea.vmem %s53, 16
      %v2200 = vld [vmem:[%s2199] sm:$0xf]
      %v2201 = vld [vmem:[%s2199 + $0x4] sm:$0xf]
      %v2202 = vld [vmem:[%s2199 + $0x8] sm:$0xf]
      %v2203 = vld [vmem:[%s2199 + $0xc] sm:$0xf]
      %v2208 = vunpack.c.l.b16 %v2200
      %v2209 = vunpack.c.l.b16 %v2201
      %v2210 = vunpack.c.l.b16 %v2202
      %v2211 = vunpack.c.l.b16 %v2203
      %v2212 = vpack.c.b16 %v2209, %v2208
      %v2213 = vpack.c.b16 %v2211, %v2210
      %v2217 = vsel %vm1192, %v2198, 0
      %2219 = vmatprep.subr.bf16.mxu0 0
      %2220 = vmatpush1.bf16.msra.mxu0 %v2212
      %2221 = vmatprep.subr.bf16.mxu0 0
      %2222 = vmatpush1.bf16.msra.mxu0 %v2213
      %2223 = vmatprep.subr.bf16.mxu0 0
      %2224 = vmatpush1.bf16.msra.mxu0 0
      %2225 = vmatprep.subr.bf16.mxu0 0
      %2226 = vmatpush1.bf16.msra.mxu0 0
      %2227 = vmatprep.subr.bf16.mxu0 0
      %2228 = vmatpush1.bf16.msra.mxu0 0
      %2229 = vmatprep.subr.bf16.mxu0 0
      %2230 = vmatpush1.bf16.msra.mxu0 0
      %2231 = vmatprep.subr.bf16.mxu0 0
      %2232 = vmatpush1.bf16.msra.mxu0 0
      %2233 = vmatprep.subr.bf16.mxu0 0
      %2234 = vmatpush1.bf16.msra.mxu0 0
      %2235 = vmatprep.subr.bf16.mxu0 0
      %2236 = vmatpush1.bf16.msra.mxu0 0
      %2237 = vmatprep.subr.bf16.mxu0 0
      %2238 = vmatpush1.bf16.msra.mxu0 0
      %2239 = vmatprep.subr.bf16.mxu0 0
      %2240 = vmatpush1.bf16.msra.mxu0 0
      %2241 = vmatprep.subr.bf16.mxu0 0
      %2242 = vmatpush1.bf16.msra.mxu0 0
      %2243 = vmatprep.subr.bf16.mxu0 0
      %2244 = vmatpush1.bf16.msra.mxu0 0
      %2245 = vmatprep.subr.bf16.mxu0 0
      %2246 = vmatpush1.bf16.msra.mxu0 0
      %2247 = vmatprep.subr.bf16.mxu0 0
      %2248 = vmatpush1.bf16.msra.mxu0 0
      %2249 = vmatprep.subr.bf16.mxu0 0
      %2250 = vmatpush1.bf16.msra.mxu0 0
      %2251 = vmatprep.mubr.bf16.mxu0 0
      %2252 = vmatmul.mubr.bf16.gmra.mrb[0].mxu0 %v2217
      %v2253 = vpop.f32.mrb[0].mxu0
      %v2254 = vadd.f32 0.0, %v2253
      %v2255 = vpop.f32.mrb[0].mxu0
      %v2256 = vpop.f32.mrb[0].mxu0
      %v2257 = vpop.f32.mrb[0].mxu0
      %2258 = vdwg.mxu0
      %v2259 = vadd.f32 %v1674, %v2254
      %v2261 = vrot.slane %v2259, 4
      %v2263 = vsel %vm1369, %v1971, %v2261
      %v2264 = vpack.c.bf16 %v2263, %v2263
      %v2265 = vld [vmem:[%s55] sm:$0xf]
      %v2266 = vld [vmem:[%s55 + $0x4] sm:$0xf]
      %v2267 = vld [vmem:[%s55 + $0x8] sm:$0xf]
      %v2268 = vld [vmem:[%s55 + $0xc] sm:$0xf]
      %v2269 = vld [vmem:[%s57] sm:$0x1]
      %v2271 = vlaneseq
      %v2272 = vshrl.u32 %v2271, 7
      %v2273 = vsub.s32 0, %v2272
      %v2274 = vrot.slane %v2269, %v2273
      %v2280 = vunpack.c.l.b16 %v2265
      %v2281 = vunpack.c.l.b16 %v2266
      %v2282 = vunpack.c.l.b16 %v2267
      %v2283 = vunpack.c.l.b16 %v2268
      %v2284 = vpack.c.b16 %v2281, %v2280
      %v2285 = vpack.c.b16 %v2283, %v2282
      %v2289 = vsel %vm1192, %v2264, 0
      %2291 = vmatprep.subr.bf16.mxu0 0
      %2292 = vmatpush1.bf16.msra.mxu0 %v2284
      %2293 = vmatprep.subr.bf16.mxu0 0
      %2294 = vmatpush1.bf16.msra.mxu0 %v2285
      %2295 = vmatprep.subr.bf16.mxu0 0
      %2296 = vmatpush1.bf16.msra.mxu0 0
      %2297 = vmatprep.subr.bf16.mxu0 0
      %2298 = vmatpush1.bf16.msra.mxu0 0
      %2299 = vmatprep.subr.bf16.mxu0 0
      %2300 = vmatpush1.bf16.msra.mxu0 0
      %2301 = vmatprep.subr.bf16.mxu0 0
      %2302 = vmatpush1.bf16.msra.mxu0 0
      %2303 = vmatprep.subr.bf16.mxu0 0
      %2304 = vmatpush1.bf16.msra.mxu0 0
      %2305 = vmatprep.subr.bf16.mxu0 0
      %2306 = vmatpush1.bf16.msra.mxu0 0
      %2307 = vmatprep.subr.bf16.mxu0 0
      %2308 = vmatpush1.bf16.msra.mxu0 0
      %2309 = vmatprep.subr.bf16.mxu0 0
      %2310 = vmatpush1.bf16.msra.mxu0 0
      %2311 = vmatprep.subr.bf16.mxu0 0
      %2312 = vmatpush1.bf16.msra.mxu0 0
      %2313 = vmatprep.subr.bf16.mxu0 0
      %2314 = vmatpush1.bf16.msra.mxu0 0
      %2315 = vmatprep.subr.bf16.mxu0 0
      %2316 = vmatpush1.bf16.msra.mxu0 0
      %2317 = vmatprep.subr.bf16.mxu0 0
      %2318 = vmatpush1.bf16.msra.mxu0 0
      %2319 = vmatprep.subr.bf16.mxu0 0
      %2320 = vmatpush1.bf16.msra.mxu0 0
      %2321 = vmatprep.subr.bf16.mxu0 0
      %2322 = vmatpush1.bf16.msra.mxu0 0
      %2323 = vmatprep.mubr.bf16.mxu0 0
      %2324 = vmatmul.mubr.bf16.gmra.mrb[0].mxu0 %v2289
      %v2325 = vpop.f32.mrb[0].mxu0
      %v2326 = vadd.f32 %v2274, %v2325
      %v2327 = vpop.f32.mrb[0].mxu0
      %v2328 = vpop.f32.mrb[0].mxu0
      %v2329 = vpop.f32.mrb[0].mxu0
      %2330 = vdwg.mxu0
      %v2331 = vmax.f32 %v2326, 0.0
      %v2332 = vpack.c.bf16 %v2331, %v2331
      %v2333 = vld [vmem:[%s59] sm:$0xf]
      %v2334 = vld [vmem:[%s59 + $0x4] sm:$0xf]
      %v2335 = vld [vmem:[%s59 + $0x8] sm:$0xf]
      %v2336 = vld [vmem:[%s59 + $0xc] sm:$0xf]
      %v2337 = vld [vmem:[%s61] sm:$0x1]
      %v2339 = vlaneseq
      %v2340 = vshrl.u32 %v2339, 7
      %v2341 = vsub.s32 0, %v2340
      %v2342 = vrot.slane %v2337, %v2341
      %v2348 = vunpack.c.l.b16 %v2333
      %v2349 = vunpack.c.l.b16 %v2334
      %v2350 = vunpack.c.l.b16 %v2335
      %v2351 = vunpack.c.l.b16 %v2336
      %v2352 = vpack.c.b16 %v2349, %v2348
      %v2353 = vpack.c.b16 %v2351, %v2350
      %v2357 = vsel %vm1192, %v2332, 0
      %2359 = vmatprep.subr.bf16.mxu0 0
      %2360 = vmatpush1.bf16.msra.mxu0 %v2352
      %2361 = vmatprep.subr.bf16.mxu0 0
      %2362 = vmatpush1.bf16.msra.mxu0 %v2353
      %2363 = vmatprep.subr.bf16.mxu0 0
      %2364 = vmatpush1.bf16.msra.mxu0 0
      %2365 = vmatprep.subr.bf16.mxu0 0
      %2366 = vmatpush1.bf16.msra.mxu0 0
      %2367 = vmatprep.subr.bf16.mxu0 0
      %2368 = vmatpush1.bf16.msra.mxu0 0
      %2369 = vmatprep.subr.bf16.mxu0 0
      %2370 = vmatpush1.bf16.msra.mxu0 0
      %2371 = vmatprep.subr.bf16.mxu0 0
      %2372 = vmatpush1.bf16.msra.mxu0 0
      %2373 = vmatprep.subr.bf16.mxu0 0
      %2374 = vmatpush1.bf16.msra.mxu0 0
      %2375 = vmatprep.subr.bf16.mxu0 0
      %2376 = vmatpush1.bf16.msra.mxu0 0
      %2377 = vmatprep.subr.bf16.mxu0 0
      %2378 = vmatpush1.bf16.msra.mxu0 0
      %2379 = vmatprep.subr.bf16.mxu0 0
      %2380 = vmatpush1.bf16.msra.mxu0 0
      %2381 = vmatprep.subr.bf16.mxu0 0
      %2382 = vmatpush1.bf16.msra.mxu0 0
      %2383 = vmatprep.subr.bf16.mxu0 0
      %2384 = vmatpush1.bf16.msra.mxu0 0
      %2385 = vmatprep.subr.bf16.mxu0 0
      %2386 = vmatpush1.bf16.msra.mxu0 0
      %2387 = vmatprep.subr.bf16.mxu0 0
      %2388 = vmatpush1.bf16.msra.mxu0 0
      %2389 = vmatprep.subr.bf16.mxu0 0
      %2390 = vmatpush1.bf16.msra.mxu0 0
      %2391 = vmatprep.mubr.bf16.mxu0 0
      %2392 = vmatmul.mubr.bf16.gmra.mrb[0].mxu0 %v2357
      %v2393 = vpop.f32.mrb[0].mxu0
      %v2394 = vadd.f32 %v2342, %v2393
      %v2395 = vpop.f32.mrb[0].mxu0
      %v2396 = vpop.f32.mrb[0].mxu0
      %v2397 = vpop.f32.mrb[0].mxu0
      %2398 = vdwg.mxu0
      %v2399 = vmax.f32 %v2394, 0.0
      %2401 = vrot.lane.b32.xlu0 %v2399, 32
      %v2402 = vpop.permute.xlu0 %2401
      %v2404 = vsel %vm1192, %v2263, %v2402
      %v2405 = vpack.c.bf16 %v2404, %v2404
      %v2406 = vld [vmem:[%s63] sm:$0xf]
      %v2407 = vld [vmem:[%s63 + $0x4] sm:$0xf]
      %v2408 = vld [vmem:[%s63 + $0x8] sm:$0xf]
      %v2409 = vld [vmem:[%s63 + $0xc] sm:$0xf]
      %v2410 = vld [vmem:[%s63 + $0x10] sm:$0xf]
      %v2411 = vld [vmem:[%s63 + $0x14] sm:$0xf]
      %v2412 = vld [vmem:[%s63 + $0x18] sm:$0xf]
      %v2413 = vld [vmem:[%s63 + $0x1c] sm:$0xf]
      %v2414 = vld [vmem:[%s65] sm:$0x1]
      %v2416 = vlaneseq
      %v2417 = vshrl.u32 %v2416, 7
      %v2418 = vsub.s32 0, %v2417
      %v2419 = vrot.slane %v2414, %v2418
      %v2429 = vunpack.c.l.b16 %v2406
      %v2430 = vunpack.c.l.b16 %v2407
      %v2431 = vunpack.c.l.b16 %v2408
      %v2432 = vunpack.c.l.b16 %v2409
      %v2433 = vunpack.c.l.b16 %v2410
      %v2434 = vunpack.c.l.b16 %v2411
      %v2435 = vunpack.c.l.b16 %v2412
      %v2436 = vunpack.c.l.b16 %v2413
      %v2437 = vpack.c.b16 %v2430, %v2429
      %v2438 = vpack.c.b16 %v2432, %v2431
      %v2439 = vpack.c.b16 %v2434, %v2433
      %v2440 = vpack.c.b16 %v2436, %v2435
      %vm2445 = vcmask 523264
      %v2447 = vsel %vm2445, %v2405, 0
      %2449 = vmatprep.subr.bf16.mxu0 0
      %2450 = vmatpush1.bf16.msra.mxu0 %v2437
      %2451 = vmatprep.subr.bf16.mxu0 0
      %2452 = vmatpush1.bf16.msra.mxu0 %v2438
      %2453 = vmatprep.subr.bf16.mxu0 0
      %2454 = vmatpush1.bf16.msra.mxu0 %v2439
      %2455 = vmatprep.subr.bf16.mxu0 0
      %2456 = vmatpush1.bf16.msra.mxu0 %v2440
      %2457 = vmatprep.subr.bf16.mxu0 0
      %2458 = vmatpush1.bf16.msra.mxu0 0
      %2459 = vmatprep.subr.bf16.mxu0 0
      %2460 = vmatpush1.bf16.msra.mxu0 0
      %2461 = vmatprep.subr.bf16.mxu0 0
      %2462 = vmatpush1.bf16.msra.mxu0 0
      %2463 = vmatprep.subr.bf16.mxu0 0
      %2464 = vmatpush1.bf16.msra.mxu0 0
      %2465 = vmatprep.subr.bf16.mxu0 0
      %2466 = vmatpush1.bf16.msra.mxu0 0
      %2467 = vmatprep.subr.bf16.mxu0 0
      %2468 = vmatpush1.bf16.msra.mxu0 0
      %2469 = vmatprep.subr.bf16.mxu0 0
      %2470 = vmatpush1.bf16.msra.mxu0 0
      %2471 = vmatprep.subr.bf16.mxu0 0
      %2472 = vmatpush1.bf16.msra.mxu0 0
      %2473 = vmatprep.subr.bf16.mxu0 0
      %2474 = vmatpush1.bf16.msra.mxu0 0
      %2475 = vmatprep.subr.bf16.mxu0 0
      %2476 = vmatpush1.bf16.msra.mxu0 0
      %2477 = vmatprep.subr.bf16.mxu0 0
      %2478 = vmatpush1.bf16.msra.mxu0 0
      %2479 = vmatprep.subr.bf16.mxu0 0
      %2480 = vmatpush1.bf16.msra.mxu0 0
      %2481 = vmatprep.mubr.bf16.mxu0 0
      %2482 = vmatmul.mubr.bf16.gmra.mrb[0].mxu0 %v2447
      %v2483 = vpop.f32.mrb[0].mxu0
      %v2484 = vadd.f32 %v2419, %v2483
      %v2485 = vpop.f32.mrb[0].mxu0
      %v2486 = vpop.f32.mrb[0].mxu0
      %v2487 = vpop.f32.mrb[0].mxu0
      %2488 = vdwg.mxu0
      %v2489 = vlaneseq
      %v2490 = vand.u32 %v2489, 127
      %vm2491 = vcmp.ge.s32.totalorder %v2490, 2
      %vm2492 = vcmp.lt.s32.totalorder %v2490, 6
      %vm2493 = vmand %vm2491, %vm2492
      %v2494 = vxor.u32 %v2484, 2147483648
      %v2495 = vmul.f32 %v2494, 1.442695
      %v2496 = vpow.pop %v2495
      %v2497 = vadd.f32 %v2496, 1.0
      %v2498 = vrcp.pop %v2497
      %v2499 = vmul.f32 1.0, %v2498
      %v2500 = vsel %vm2493, %v2499, %v2484
      %2501 = vst [vmem:[%s1057] sm:$0xff] %v2500
      %p2502 = scmp.lt.s32.totalorder %s78, 1
      %s2503 = scalar_select %p2502, %s78, 1
      %s2504 = smul.addr %s2503, 8
      %s2505 = scalar_lea.vmem %s67, %s2504
      // Predicated region
      $region153: #{svanet_forward.1} parent=151 // pred_check
        %p2506 = pneg %p809
      $region154: #{svanet_forward.1} parent=151 // pred_check_branch
        %2508 = sbr.rel (%p2506) target = $region156
      $region155: #{svanet_forward.1} parent=151 // pred_region
        _
      $region156: #{svanet_forward.1} parent=151 // pred_fallthru
        _
    $region152: #{svanet_forward.1} parent=5 // pred_fallthru
      _
    %p2509 = scmp.le.s32.totalorder 2, %s73
    // Predicated region
    $region157: #{svanet_forward.1} parent=5 // pred_check
      %p2510 = pneg %p2509
    $region158: #{svanet_forward.1} parent=5 // pred_check_branch
      %2512 = sbr.rel (%p2510) target = $region160
    $region159: #{svanet_forward.1} parent=5 // pred_region
      %s2513 = ssub.s32 %s73, 2
      // Predicated region
      $region161: #{svanet_forward.1} parent=159 // pred_check
        %p2514 = pneg %p815
      $region162: #{svanet_forward.1} parent=159 // pred_check_branch
        %2516 = sbr.rel (%p2514) target = $region164
      $region163: #{svanet_forward.1} parent=159 // pred_region
        %p2517 = scmp.lt.s32.totalorder %s79, 1
        %s2518 = scalar_select %p2517, %s79, 1
        %s2519 = smul.addr %s2518, 8
        %s2520 = scalar_lea.vmem %s67, %s2519
      $region164: #{svanet_forward.1} parent=159 // pred_fallthru
        _
    $region160: #{svanet_forward.1} parent=5 // pred_fallthru
      _
  $region6: #{svanet_forward.1} parent=0 // loop_footer
    %s77 = sadd.s32 1, %s73
  $region7: #{svanet_forward.1} parent=0 // loop_footer_branch
    %72 = sbr.rel target = $region3
  $region8: #{svanet_forward.1} parent=0 // loop_exit
    _

</llo_original>
